<compile_context>
chip_gen: v7x
topology: tpu7x:2x2x1
jax: 0.10.0
libtpu: 0.0.40
codegen_flags: <defaults>
</compile_context>

<pallas_src>
import functools

import jax
import jax.numpy as jnp
from jax.experimental import pallas as pl
from jax.experimental.pallas import tpu as pltpu

KH = KW = 3        # conv kernel size
LANE = 128         # TPU lane width


def _round_up(n, m):
    return ((n + m - 1) // m) * m


def _pick_tb(batch, cap=32):
    """Largest TB <= cap dividing batch, keeping >= 2 grid steps when possible."""
    best = 1
    for tb in range(1, min(batch, cap) + 1):
        if batch % tb == 0 and (batch // tb >= 2 or batch == 1):
            best = tb
    return best


# ---------------------------------------------------------------------------
# Fused kernel: one grid step = TB images, all activations VMEM/vreg resident.
# ---------------------------------------------------------------------------
def _fused_cnn_kernel(x_ref, w1_ref, b1_ref, w2_ref, b2_ref, pool_ref,
                      fc1w_ref, fc1b_ref, fc2w_ref, fc2b_ref,
                      o_ref, im1_ref, im2_ref, *, H, W, TB, use_bf16):
    HW = H * W
    N = TB * HW                       # rows of the flattened activation slab

    def mm(a, b):
        if use_bf16:                  # bf16 operands, f32 accumulate (MXU-native)
            a = a.astype(jnp.bfloat16)
            b = b.astype(jnp.bfloat16)
        return jnp.dot(a, b, preferred_element_type=jnp.float32)

    def conv3x3(src, w_ref, b_ref, im_ref):
        # im2col: 9 shifted row-windows -> (N, 9*Cin) VMEM scratch via XLU
        # sublane rolls, then ONE MXU matmul with K = 9*Cin.
        # shifted_t[s] = src[(s + i*W + j) mod N]: valid output positions read
        # their true 3x3 neighbourhood (stays inside the same image); border
        # rows read wrapped (finite) garbage that is never used by later valid
        # outputs and is zeroed by the pool mask.
        cin = src.shape[-1]
        for i in range(KH):
            for j in range(KW):
                t = i * KW + j
                d = i * W + j
                shifted = src if d == 0 else pltpu.roll(src, shift=N - d, axis=0)
                im_ref[:, pl.ds(t * cin, cin)] = shifted
        return jnp.maximum(mm(im_ref[...], w_ref[...]) + b_ref[...], 0.0)

    x = x_ref[0]                                             # (N, 3)
    h1 = conv3x3(x, w1_ref, b1_ref, im1_ref)                 # (N, 16)
    y2 = conv3x3(h1, w2_ref, b2_ref, im2_ref)                # (N, 32)

    # AdaptiveAvgPool2d((1,1)): masked mean over the valid (H-4)x(W-4) conv2
    # positions of each image (VPU multiply + XLU sublane reduce, no matmul).
    c2 = y2.shape[-1]
    pooled = jnp.sum(y2.reshape(TB, HW, c2) * pool_ref[...], axis=1)     # (TB, 32)

    # fc1 + ReLU, fc2 (weights pre-transposed to (in, out); fc2 lane-padded).
    h3 = jnp.maximum(mm(pooled, fc1w_ref[...]) + fc1b_ref[...], 0.0)     # (TB, 128)
    logits = mm(h3, fc2w_ref[...]) + fc2b_ref[...]                       # (TB, NCp)
    o_ref[0] = logits.astype(o_ref.dtype)


# ---------------------------------------------------------------------------
# One-time weight packing (PyTorch layout -> kernel layout).
# ---------------------------------------------------------------------------
def pack_params(params):
    def conv_pack(w_oihw):   # (Cout,Cin,3,3) -> (9*Cin, Cout), row = tap*Cin + c
        cout, cin, kh, kw = w_oihw.shape
        return jnp.transpose(w_oihw, (2, 3, 1, 0)).reshape(kh * kw * cin, cout)

    nc = params["fc2_w"].shape[0]
    ncp = _round_up(nc, LANE)                       # lane-dense output slab
    f1 = params["fc2_w"].shape[1]
    fc2_w = jnp.zeros((f1, ncp), jnp.float32).at[:, :nc].set(params["fc2_w"].T)
    fc2_b = jnp.zeros((1, ncp), jnp.float32).at[:, :nc].set(params["fc2_b"][None, :])
    return {
        "conv1_w": conv_pack(params["conv1_w"]),    # (27, 16)
        "conv1_b": params["conv1_b"].reshape(1, -1),
        "conv2_w": conv_pack(params["conv2_w"]),    # (144, 32)
        "conv2_b": params["conv2_b"].reshape(1, -1),
        "fc1_w": params["fc1_w"].T,                 # (32, 128)
        "fc1_b": params["fc1_b"].reshape(1, -1),
        "fc2_w": fc2_w,                             # (128, NCp), zero-padded
        "fc2_b": fc2_b,                             # (1, NCp), zero-padded
    }


# ---------------------------------------------------------------------------
# Wrapper: layout plumbing + pallas_call.
# ---------------------------------------------------------------------------
@functools.partial(jax.jit, static_argnames=("num_classes", "use_bf16_matmul"))
def simple_cnn_forward(packed, x_nchw, *, num_classes, use_bf16_matmul=False):
    """SimpleCNN forward. x: (B, 3, H, W) float32 -> (B, num_classes) float32."""
    B, Cin, H, W = x_nchw.shape
    assert H >= 5 and W >= 5, "two VALID 3x3 convs need H, W >= 5"
    HW = H * W
    TB = _pick_tb(B)
    G = B // TB
    C1 = packed["conv1_b"].shape[1]
    C2 = packed["conv2_b"].shape[1]
    F1 = packed["fc1_w"].shape[1]
    NCp = packed["fc2_w"].shape[1]

    # QuantStub is identity.  NCHW -> NHWC, flatten TB images per grid step
    # into one (TB*HW, Cin) slab.  No zero padding needed (roll wrap trick).
    x = jnp.transpose(x_nchw, (0, 2, 3, 1)).reshape(G, TB * HW, Cin)

    # Masked-mean pooling weights over the valid (H-4)x(W-4) conv2 region.
    hh = jnp.arange(HW, dtype=jnp.int32) // W
    ww = jnp.arange(HW, dtype=jnp.int32) % W
    valid = (hh < H - 4) & (ww < W - 4)
    pool = jnp.where(valid, 1.0 / float((H - 4) * (W - 4)), 0.0).astype(jnp.float32)
    pool = jnp.broadcast_to(pool[None, :, None], (1, HW, C2))

    kernel = functools.partial(_fused_cnn_kernel, H=H, W=W, TB=TB,
                               use_bf16=use_bf16_matmul)

    def const_spec(shape):            # full-array block, constant index map
        zero = (0,) * len(shape)
        return pl.BlockSpec(shape, lambda g, _z=zero: _z)

    out = pl.pallas_call(
        kernel,
        out_shape=jax.ShapeDtypeStruct((G, TB, NCp), jnp.float32),
        grid_spec=pltpu.PrefetchScalarGridSpec(
            num_scalar_prefetch=0,
            grid=(G,),
            in_specs=[
                pl.BlockSpec((1, TB * HW, Cin), lambda g: (g, 0, 0)),  # x slab
                const_spec((KH * KW * Cin, C1)),    # conv1 im2col weight
                const_spec((1, C1)),                # conv1 bias
                const_spec((KH * KW * C1, C2)),     # conv2 im2col weight
                const_spec((1, C2)),                # conv2 bias
                const_spec((1, HW, C2)),            # pool mask / scale
                const_spec((C2, F1)),               # fc1 weight (in, out)
                const_spec((1, F1)),                # fc1 bias
                const_spec((F1, NCp)),              # fc2 weight (in, out), lane-padded
                const_spec((1, NCp)),               # fc2 bias, lane-padded
            ],
            out_specs=pl.BlockSpec((1, TB, NCp), lambda g: (g, 0, 0)),
            scratch_shapes=[
                pltpu.VMEM((TB * HW, KH * KW * Cin), jnp.float32),   # conv1 im2col
                pltpu.VMEM((TB * HW, KH * KW * C1), jnp.float32),    # conv2 im2col
            ],
        ),
        compiler_params=pltpu.CompilerParams(
            dimension_semantics=("parallel",),      # v7x: grid steps across both TCs
            vmem_limit_bytes=32 * 1024 * 1024,
        ),
    )(x, packed["conv1_w"], packed["conv1_b"],
      packed["conv2_w"], packed["conv2_b"], pool,
      packed["fc1_w"], packed["fc1_b"], packed["fc2_w"], packed["fc2_b"])
    # DeQuantStub is identity; drop the lane padding.
    return out.reshape(B, NCp)[:, :num_classes]


# ---------------------------------------------------------------------------
# Parameter init (PyTorch layout) + pure-JAX reference for correctness.
# ---------------------------------------------------------------------------
def init_params(key, num_classes):
    ks = jax.random.split(key, 8)

    def u(k, shape, fan_in):
        bound = 1.0 / jnp.sqrt(fan_in)
        return jax.random.uniform(k, shape, jnp.float32, -bound, bound)

    return {
        "conv1_w": u(ks[0], (16, 3, 3, 3), 3 * 9),
        "conv1_b": u(ks[1], (16,), 3 * 9),
        "conv2_w": u(ks[2], (32, 16, 3, 3), 16 * 9),
        "conv2_b": u(ks[3], (32,), 16 * 9),
        "fc1_w":   u(ks[4], (128, 32), 32),          # PyTorch (out, in)
        "fc1_b":   u(ks[5], (128,), 32),
        "fc2_w":   u(ks[6], (num_classes, 128), 128),
        "fc2_b":   u(ks[7], (num_classes,), 128),
    }


def simple_cnn_reference(params, x_nchw):
    x = jnp.transpose(x_nchw, (0, 2, 3, 1))

    def conv(x, w, b):
        y = jax.lax.conv_general_dilated(
            x, jnp.transpose(w, (2, 3, 1, 0)), (1, 1), "VALID",
            dimension_numbers=("NHWC", "HWIO", "NHWC"))
        return jax.nn.relu(y + b)

    x = conv(x, params["conv1_w"], params["conv1_b"])
    x = conv(x, params["conv2_w"], params["conv2_b"])
    x = jnp.mean(x, axis=(1, 2))
    x = jax.nn.relu(x @ params["fc1_w"].T + params["fc1_b"])
    return x @ params["fc2_w"].T + params["fc2_b"]


if __name__ == "__main__":
    num_classes = 10
    key = jax.random.PRNGKey(0)
    k_param, k_x = jax.random.split(key)
    params = init_params(k_param, num_classes)
    packed = pack_params(params)                       # one-time weight packing
    x = jax.random.normal(k_x, (2, 3, 16, 16), jnp.float32)   # NCHW like PyTorch

    out = jax.block_until_ready(
        simple_cnn_forward(packed, x, num_classes=num_classes))
    assert out.shape == (2, num_classes), out.shape

    ref = jax.block_until_ready(simple_cnn_reference(params, x))
    assert jnp.allclose(out, ref, atol=1e-4, rtol=1e-4), (out, ref)

    print("KERNEL_OK")
</pallas_src>

<mosaic_0001>
module attributes {stable_mosaic.version = 11 : i64} {
  func.func @_fused_cnn_kernel(%arg0: i32, %arg1: memref<1x256x3xf32, #tpu.memory_space<vmem>>, %arg2: memref<27x16xf32, #tpu.memory_space<vmem>>, %arg3: memref<1x16xf32, #tpu.memory_space<vmem>>, %arg4: memref<144x32xf32, #tpu.memory_space<vmem>>, %arg5: memref<1x32xf32, #tpu.memory_space<vmem>>, %arg6: memref<1x256x32xf32, #tpu.memory_space<vmem>>, %arg7: memref<32x128xf32, #tpu.memory_space<vmem>>, %arg8: memref<1x128xf32, #tpu.memory_space<vmem>>, %arg9: memref<128x128xf32, #tpu.memory_space<vmem>>, %arg10: memref<1x128xf32, #tpu.memory_space<vmem>>, %arg11: memref<1x1x128xf32, #tpu.memory_space<vmem>>, %arg12: memref<256x27xf32, #tpu.memory_space<vmem>>, %arg13: memref<256x144xf32, #tpu.memory_space<vmem>>) attributes {dimension_semantics = [#tpu.dimension_semantics<parallel>], iteration_bounds = array<i64: 2>, scalar_prefetch = 0 : i64, scratch_operands = 2 : i64, tpu.core_type = #tpu.core_type<tc>, window_params = [{transform_indices = @transform_0, window_bounds = array<i64: 1, 256, 3>}, {pipeline_mode = #tpu.pipeline_mode<synchronous>, transform_indices = @transform_1, window_bounds = array<i64: 27, 16>}, {pipeline_mode = #tpu.pipeline_mode<synchronous>, transform_indices = @transform_2, window_bounds = array<i64: 1, 16>}, {pipeline_mode = #tpu.pipeline_mode<synchronous>, transform_indices = @transform_3, window_bounds = array<i64: 144, 32>}, {pipeline_mode = #tpu.pipeline_mode<synchronous>, transform_indices = @transform_4, window_bounds = array<i64: 1, 32>}, {pipeline_mode = #tpu.pipeline_mode<synchronous>, transform_indices = @transform_5, window_bounds = array<i64: 1, 256, 32>}, {pipeline_mode = #tpu.pipeline_mode<synchronous>, transform_indices = @transform_6, window_bounds = array<i64: 32, 128>}, {pipeline_mode = #tpu.pipeline_mode<synchronous>, transform_indices = @transform_7, window_bounds = array<i64: 1, 128>}, {pipeline_mode = #tpu.pipeline_mode<synchronous>, transform_indices = @transform_8, window_bounds = array<i64: 128, 128>}, {pipeline_mode = #tpu.pipeline_mode<synchronous>, transform_indices = @transform_9, window_bounds = array<i64: 1, 128>}, {transform_indices = @transform_10, window_bounds = array<i64: 1, 1, 128>}]} {
    %c0 = arith.constant 0 : index
    %c0_0 = arith.constant 0 : index
    %c0_1 = arith.constant 0 : index
    %0 = vector.load %arg1[%c0, %c0_0, %c0_1] : memref<1x256x3xf32, #tpu.memory_space<vmem>>, vector<1x256x3xf32>
    %1 = vector.shape_cast %0 : vector<1x256x3xf32> to vector<256x3xf32>
    %c0_2 = arith.constant 0 : index
    %c0_3 = arith.constant 0 : index
    %2 = vector.load %arg12[%c0_2, %c0_3] : memref<256x27xf32, #tpu.memory_space<vmem>>, vector<256x3xf32>
    tpu.vector_store %arg12[%c0_2, %c0_3], %1 {strides = array<i32>} : memref<256x27xf32, #tpu.memory_space<vmem>>, vector<256x3xf32>,
    %c255_i32 = arith.constant 255 : i32
    %3 = tpu.dynamic_rotate %1 by %c255_i32 dim 0 : vector<256x3xf32>, i32 -> vector<256x3xf32>
    %c0_4 = arith.constant 0 : index
    %c3 = arith.constant 3 : index
    %4 = vector.load %arg12[%c0_4, %c3] : memref<256x27xf32, #tpu.memory_space<vmem>>, vector<256x3xf32>
    tpu.vector_store %arg12[%c0_4, %c3], %3 {strides = array<i32>} : memref<256x27xf32, #tpu.memory_space<vmem>>, vector<256x3xf32>,
    %c254_i32 = arith.constant 254 : i32
    %5 = tpu.dynamic_rotate %1 by %c254_i32 dim 0 : vector<256x3xf32>, i32 -> vector<256x3xf32>
    %c0_5 = arith.constant 0 : index
    %c6 = arith.constant 6 : index
    %6 = vector.load %arg12[%c0_5, %c6] : memref<256x27xf32, #tpu.memory_space<vmem>>, vector<256x3xf32>
    tpu.vector_store %arg12[%c0_5, %c6], %5 {strides = array<i32>} : memref<256x27xf32, #tpu.memory_space<vmem>>, vector<256x3xf32>,
    %c240_i32 = arith.constant 240 : i32
    %7 = tpu.dynamic_rotate %1 by %c240_i32 dim 0 : vector<256x3xf32>, i32 -> vector<256x3xf32>
    %c0_6 = arith.constant 0 : index
    %c9 = arith.constant 9 : index
    %8 = vector.load %arg12[%c0_6, %c9] : memref<256x27xf32, #tpu.memory_space<vmem>>, vector<256x3xf32>
    tpu.vector_store %arg12[%c0_6, %c9], %7 {strides = array<i32>} : memref<256x27xf32, #tpu.memory_space<vmem>>, vector<256x3xf32>,
    %c239_i32 = arith.constant 239 : i32
    %9 = tpu.dynamic_rotate %1 by %c239_i32 dim 0 : vector<256x3xf32>, i32 -> vector<256x3xf32>
    %c0_7 = arith.constant 0 : index
    %c12 = arith.constant 12 : index
    %10 = vector.load %arg12[%c0_7, %c12] : memref<256x27xf32, #tpu.memory_space<vmem>>, vector<256x3xf32>
    tpu.vector_store %arg12[%c0_7, %c12], %9 {strides = array<i32>} : memref<256x27xf32, #tpu.memory_space<vmem>>, vector<256x3xf32>,
    %c238_i32 = arith.constant 238 : i32
    %11 = tpu.dynamic_rotate %1 by %c238_i32 dim 0 : vector<256x3xf32>, i32 -> vector<256x3xf32>
    %c0_8 = arith.constant 0 : index
    %c15 = arith.constant 15 : index
    %12 = vector.load %arg12[%c0_8, %c15] : memref<256x27xf32, #tpu.memory_space<vmem>>, vector<256x3xf32>
    tpu.vector_store %arg12[%c0_8, %c15], %11 {strides = array<i32>} : memref<256x27xf32, #tpu.memory_space<vmem>>, vector<256x3xf32>,
    %c224_i32 = arith.constant 224 : i32
    %13 = tpu.dynamic_rotate %1 by %c224_i32 dim 0 : vector<256x3xf32>, i32 -> vector<256x3xf32>
    %c0_9 = arith.constant 0 : index
    %c18 = arith.constant 18 : index
    %14 = vector.load %arg12[%c0_9, %c18] : memref<256x27xf32, #tpu.memory_space<vmem>>, vector<256x3xf32>
    tpu.vector_store %arg12[%c0_9, %c18], %13 {strides = array<i32>} : memref<256x27xf32, #tpu.memory_space<vmem>>, vector<256x3xf32>,
    %c223_i32 = arith.constant 223 : i32
    %15 = tpu.dynamic_rotate %1 by %c223_i32 dim 0 : vector<256x3xf32>, i32 -> vector<256x3xf32>
    %c0_10 = arith.constant 0 : index
    %c21 = arith.constant 21 : index
    %16 = vector.load %arg12[%c0_10, %c21] : memref<256x27xf32, #tpu.memory_space<vmem>>, vector<256x3xf32>
    tpu.vector_store %arg12[%c0_10, %c21], %15 {strides = array<i32>} : memref<256x27xf32, #tpu.memory_space<vmem>>, vector<256x3xf32>,
    %c222_i32 = arith.constant 222 : i32
    %17 = tpu.dynamic_rotate %1 by %c222_i32 dim 0 : vector<256x3xf32>, i32 -> vector<256x3xf32>
    %c0_11 = arith.constant 0 : index
    %c24 = arith.constant 24 : index
    %18 = vector.load %arg12[%c0_11, %c24] : memref<256x27xf32, #tpu.memory_space<vmem>>, vector<256x3xf32>
    tpu.vector_store %arg12[%c0_11, %c24], %17 {strides = array<i32>} : memref<256x27xf32, #tpu.memory_space<vmem>>, vector<256x3xf32>,
    %c0_12 = arith.constant 0 : index
    %c0_13 = arith.constant 0 : index
    %19 = vector.load %arg12[%c0_12, %c0_13] : memref<256x27xf32, #tpu.memory_space<vmem>>, vector<256x27xf32>
    %c0_14 = arith.constant 0 : index
    %c0_15 = arith.constant 0 : index
    %20 = vector.load %arg2[%c0_14, %c0_15] : memref<27x16xf32, #tpu.memory_space<vmem>>, vector<27x16xf32>
    %cst = arith.constant dense<0.000000e+00> : vector<256x16xf32>
    %21 = tpu.matmul %19, %20, %cst {dimension_numbers = #tpu.dot_dimension_numbers<[1], [0], [0], [1], [0, 0, 1, 1], [], []>} : vector<256x27xf32>, vector<27x16xf32>, vector<256x16xf32> -> vector<256x16xf32>
    %c0_16 = arith.constant 0 : index
    %c0_17 = arith.constant 0 : index
    %22 = vector.load %arg3[%c0_16, %c0_17] : memref<1x16xf32, #tpu.memory_space<vmem>>, vector<1x16xf32>
    %23 = vector.broadcast %22 : vector<1x16xf32> to vector<256x16xf32>
    %24 = arith.addf %21, %23 : vector<256x16xf32>
    %cst_18 = arith.constant 0.000000e+00 : f32
    %25 = vector.broadcast %cst_18 : f32 to vector<256x16xf32>
    %26 = arith.maximumf %24, %25 : vector<256x16xf32>
    %c0_19 = arith.constant 0 : index
    %c0_20 = arith.constant 0 : index
    %27 = vector.load %arg13[%c0_19, %c0_20] : memref<256x144xf32, #tpu.memory_space<vmem>>, vector<256x16xf32>
    tpu.vector_store %arg13[%c0_19, %c0_20], %26 {strides = array<i32>} : memref<256x144xf32, #tpu.memory_space<vmem>>, vector<256x16xf32>,
    %c255_i32_21 = arith.constant 255 : i32
    %28 = tpu.dynamic_rotate %26 by %c255_i32_21 dim 0 : vector<256x16xf32>, i32 -> vector<256x16xf32>
    %c0_22 = arith.constant 0 : index
    %c16 = arith.constant 16 : index
    %29 = vector.load %arg13[%c0_22, %c16] : memref<256x144xf32, #tpu.memory_space<vmem>>, vector<256x16xf32>
    tpu.vector_store %arg13[%c0_22, %c16], %28 {strides = array<i32>} : memref<256x144xf32, #tpu.memory_space<vmem>>, vector<256x16xf32>,
    %c254_i32_23 = arith.constant 254 : i32
    %30 = tpu.dynamic_rotate %26 by %c254_i32_23 dim 0 : vector<256x16xf32>, i32 -> vector<256x16xf32>
    %c0_24 = arith.constant 0 : index
    %c32 = arith.constant 32 : index
    %31 = vector.load %arg13[%c0_24, %c32] : memref<256x144xf32, #tpu.memory_space<vmem>>, vector<256x16xf32>
    tpu.vector_store %arg13[%c0_24, %c32], %30 {strides = array<i32>} : memref<256x144xf32, #tpu.memory_space<vmem>>, vector<256x16xf32>,
    %c240_i32_25 = arith.constant 240 : i32
    %32 = tpu.dynamic_rotate %26 by %c240_i32_25 dim 0 : vector<256x16xf32>, i32 -> vector<256x16xf32>
    %c0_26 = arith.constant 0 : index
    %c48 = arith.constant 48 : index
    %33 = vector.load %arg13[%c0_26, %c48] : memref<256x144xf32, #tpu.memory_space<vmem>>, vector<256x16xf32>
    tpu.vector_store %arg13[%c0_26, %c48], %32 {strides = array<i32>} : memref<256x144xf32, #tpu.memory_space<vmem>>, vector<256x16xf32>,
    %c239_i32_27 = arith.constant 239 : i32
    %34 = tpu.dynamic_rotate %26 by %c239_i32_27 dim 0 : vector<256x16xf32>, i32 -> vector<256x16xf32>
    %c0_28 = arith.constant 0 : index
    %c64 = arith.constant 64 : index
    %35 = vector.load %arg13[%c0_28, %c64] : memref<256x144xf32, #tpu.memory_space<vmem>>, vector<256x16xf32>
    tpu.vector_store %arg13[%c0_28, %c64], %34 {strides = array<i32>} : memref<256x144xf32, #tpu.memory_space<vmem>>, vector<256x16xf32>,
    %c238_i32_29 = arith.constant 238 : i32
    %36 = tpu.dynamic_rotate %26 by %c238_i32_29 dim 0 : vector<256x16xf32>, i32 -> vector<256x16xf32>
    %c0_30 = arith.constant 0 : index
    %c80 = arith.constant 80 : index
    %37 = vector.load %arg13[%c0_30, %c80] : memref<256x144xf32, #tpu.memory_space<vmem>>, vector<256x16xf32>
    tpu.vector_store %arg13[%c0_30, %c80], %36 {strides = array<i32>} : memref<256x144xf32, #tpu.memory_space<vmem>>, vector<256x16xf32>,
    %c224_i32_31 = arith.constant 224 : i32
    %38 = tpu.dynamic_rotate %26 by %c224_i32_31 dim 0 : vector<256x16xf32>, i32 -> vector<256x16xf32>
    %c0_32 = arith.constant 0 : index
    %c96 = arith.constant 96 : index
    %39 = vector.load %arg13[%c0_32, %c96] : memref<256x144xf32, #tpu.memory_space<vmem>>, vector<256x16xf32>
    tpu.vector_store %arg13[%c0_32, %c96], %38 {strides = array<i32>} : memref<256x144xf32, #tpu.memory_space<vmem>>, vector<256x16xf32>,
    %c223_i32_33 = arith.constant 223 : i32
    %40 = tpu.dynamic_rotate %26 by %c223_i32_33 dim 0 : vector<256x16xf32>, i32 -> vector<256x16xf32>
    %c0_34 = arith.constant 0 : index
    %c112 = arith.constant 112 : index
    %41 = vector.load %arg13[%c0_34, %c112] : memref<256x144xf32, #tpu.memory_space<vmem>>, vector<256x16xf32>
    tpu.vector_store %arg13[%c0_34, %c112], %40 {strides = array<i32>} : memref<256x144xf32, #tpu.memory_space<vmem>>, vector<256x16xf32>,
    %c222_i32_35 = arith.constant 222 : i32
    %42 = tpu.dynamic_rotate %26 by %c222_i32_35 dim 0 : vector<256x16xf32>, i32 -> vector<256x16xf32>
    %c0_36 = arith.constant 0 : index
    %c128 = arith.constant 128 : index
    %43 = vector.load %arg13[%c0_36, %c128] : memref<256x144xf32, #tpu.memory_space<vmem>>, vector<256x16xf32>
    tpu.vector_store %arg13[%c0_36, %c128], %42 {strides = array<i32>} : memref<256x144xf32, #tpu.memory_space<vmem>>, vector<256x16xf32>,
    %c0_37 = arith.constant 0 : index
    %c0_38 = arith.constant 0 : index
    %44 = vector.load %arg13[%c0_37, %c0_38] : memref<256x144xf32, #tpu.memory_space<vmem>>, vector<256x144xf32>
    %c0_39 = arith.constant 0 : index
    %c0_40 = arith.constant 0 : index
    %45 = vector.load %arg4[%c0_39, %c0_40] : memref<144x32xf32, #tpu.memory_space<vmem>>, vector<144x32xf32>
    %cst_41 = arith.constant dense<0.000000e+00> : vector<256x32xf32>
    %46 = tpu.matmul %44, %45, %cst_41 {dimension_numbers = #tpu.dot_dimension_numbers<[1], [0], [0], [1], [0, 0, 1, 1], [], []>} : vector<256x144xf32>, vector<144x32xf32>, vector<256x32xf32> -> vector<256x32xf32>
    %c0_42 = arith.constant 0 : index
    %c0_43 = arith.constant 0 : index
    %47 = vector.load %arg5[%c0_42, %c0_43] : memref<1x32xf32, #tpu.memory_space<vmem>>, vector<1x32xf32>
    %48 = vector.broadcast %47 : vector<1x32xf32> to vector<256x32xf32>
    %49 = arith.addf %46, %48 : vector<256x32xf32>
    %cst_44 = arith.constant 0.000000e+00 : f32
    %50 = vector.broadcast %cst_44 : f32 to vector<256x32xf32>
    %51 = arith.maximumf %49, %50 : vector<256x32xf32>
    %52 = vector.shape_cast %51 : vector<256x32xf32> to vector<1x256x32xf32>
    %c0_45 = arith.constant 0 : index
    %c0_46 = arith.constant 0 : index
    %c0_47 = arith.constant 0 : index
    %53 = vector.load %arg6[%c0_45, %c0_46, %c0_47] : memref<1x256x32xf32, #tpu.memory_space<vmem>>, vector<1x256x32xf32>
    %54 = arith.mulf %52, %53 : vector<1x256x32xf32>
    %cst_48 = arith.constant dense<0.000000e+00> : vector<1x32xf32>
    %55 = vector.multi_reduction <add>, %54, %cst_48 [1] : vector<1x256x32xf32> to vector<1x32xf32>
    %c0_49 = arith.constant 0 : index
    %c0_50 = arith.constant 0 : index
    %56 = vector.load %arg7[%c0_49, %c0_50] : memref<32x128xf32, #tpu.memory_space<vmem>>, vector<32x128xf32>
    %cst_51 = arith.constant dense<0.000000e+00> : vector<1x128xf32>
    %57 = tpu.matmul %55, %56, %cst_51 {dimension_numbers = #tpu.dot_dimension_numbers<[1], [0], [0], [1], [0, 0, 1, 1], [], []>} : vector<1x32xf32>, vector<32x128xf32>, vector<1x128xf32> -> vector<1x128xf32>
    %c0_52 = arith.constant 0 : index
    %c0_53 = arith.constant 0 : index
    %58 = vector.load %arg8[%c0_52, %c0_53] : memref<1x128xf32, #tpu.memory_space<vmem>>, vector<1x128xf32>
    %59 = arith.addf %57, %58 : vector<1x128xf32>
    %cst_54 = arith.constant 0.000000e+00 : f32
    %60 = vector.broadcast %cst_54 : f32 to vector<1x128xf32>
    %61 = arith.maximumf %59, %60 : vector<1x128xf32>
    %c0_55 = arith.constant 0 : index
    %c0_56 = arith.constant 0 : index
    %62 = vector.load %arg9[%c0_55, %c0_56] : memref<128x128xf32, #tpu.memory_space<vmem>>, vector<128x128xf32>
    %cst_57 = arith.constant dense<0.000000e+00> : vector<1x128xf32>
    %63 = tpu.matmul %61, %62, %cst_57 {dimension_numbers = #tpu.dot_dimension_numbers<[1], [0], [0], [1], [0, 0, 1, 1], [], []>} : vector<1x128xf32>, vector<128x128xf32>, vector<1x128xf32> -> vector<1x128xf32>
    %c0_58 = arith.constant 0 : index
    %c0_59 = arith.constant 0 : index
    %64 = vector.load %arg10[%c0_58, %c0_59] : memref<1x128xf32, #tpu.memory_space<vmem>>, vector<1x128xf32>
    %65 = arith.addf %63, %64 : vector<1x128xf32>
    %c0_60 = arith.constant 0 : index
    %c0_61 = arith.constant 0 : index
    %c0_62 = arith.constant 0 : index
    %66 = vector.load %arg11[%c0_60, %c0_61, %c0_62] : memref<1x1x128xf32, #tpu.memory_space<vmem>>, vector<1x1x128xf32>
    %67 = vector.shape_cast %66 : vector<1x1x128xf32> to vector<1x128xf32>
    %68 = vector.shape_cast %65 : vector<1x128xf32> to vector<1x1x128xf32>
    tpu.vector_store %arg11[%c0_60, %c0_61, %c0_62], %68 {strides = array<i32>} : memref<1x1x128xf32, #tpu.memory_space<vmem>>, vector<1x1x128xf32>,
    return
  }
  func.func @transform_0(%arg0: i32) -> (i32, i32, i32) {
    %c0_i32 = arith.constant 0 : i32
    %c0_i32_0 = arith.constant 0 : i32
    %c0_i32_1 = arith.constant 0 : i32
    return %arg0, %c0_i32, %c0_i32_0 : i32, i32, i32
  }
  func.func @transform_1(%arg0: i32) -> (i32, i32) {
    %c0_i32 = arith.constant 0 : i32
    %c0_i32_0 = arith.constant 0 : i32
    %c0_i32_1 = arith.constant 0 : i32
    return %c0_i32, %c0_i32_0 : i32, i32
  }
  func.func @transform_2(%arg0: i32) -> (i32, i32) {
    %c0_i32 = arith.constant 0 : i32
    %c0_i32_0 = arith.constant 0 : i32
    %c0_i32_1 = arith.constant 0 : i32
    return %c0_i32, %c0_i32_0 : i32, i32
  }
  func.func @transform_3(%arg0: i32) -> (i32, i32) {
    %c0_i32 = arith.constant 0 : i32
    %c0_i32_0 = arith.constant 0 : i32
    %c0_i32_1 = arith.constant 0 : i32
    return %c0_i32, %c0_i32_0 : i32, i32
  }
  func.func @transform_4(%arg0: i32) -> (i32, i32) {
    %c0_i32 = arith.constant 0 : i32
    %c0_i32_0 = arith.constant 0 : i32
    %c0_i32_1 = arith.constant 0 : i32
    return %c0_i32, %c0_i32_0 : i32, i32
  }
  func.func @transform_5(%arg0: i32) -> (i32, i32, i32) {
    %c0_i32 = arith.constant 0 : i32
    %c0_i32_0 = arith.constant 0 : i32
    %c0_i32_1 = arith.constant 0 : i32
    %c0_i32_2 = arith.constant 0 : i32
    return %c0_i32, %c0_i32_0, %c0_i32_1 : i32, i32, i32
  }
  func.func @transform_6(%arg0: i32) -> (i32, i32) {
    %c0_i32 = arith.constant 0 : i32
    %c0_i32_0 = arith.constant 0 : i32
    %c0_i32_1 = arith.constant 0 : i32
    return %c0_i32, %c0_i32_0 : i32, i32
  }
  func.func @transform_7(%arg0: i32) -> (i32, i32) {
    %c0_i32 = arith.constant 0 : i32
    %c0_i32_0 = arith.constant 0 : i32
    %c0_i32_1 = arith.constant 0 : i32
    return %c0_i32, %c0_i32_0 : i32, i32
  }
  func.func @transform_8(%arg0: i32) -> (i32, i32) {
    %c0_i32 = arith.constant 0 : i32
    %c0_i32_0 = arith.constant 0 : i32
    %c0_i32_1 = arith.constant 0 : i32
    return %c0_i32, %c0_i32_0 : i32, i32
  }
  func.func @transform_9(%arg0: i32) -> (i32, i32) {
    %c0_i32 = arith.constant 0 : i32
    %c0_i32_0 = arith.constant 0 : i32
    %c0_i32_1 = arith.constant 0 : i32
    return %c0_i32, %c0_i32_0 : i32, i32
  }
  func.func @transform_10(%arg0: i32) -> (i32, i32, i32) {
    %c0_i32 = arith.constant 0 : i32
    %c0_i32_0 = arith.constant 0 : i32
    %c0_i32_1 = arith.constant 0 : i32
    return %arg0, %c0_i32, %c0_i32_0 : i32, i32, i32
  }
}

</mosaic_0001>

<llo_original>
// kernel: simple_cnn_forward.1
$region0: #{simple_cnn_forward.1}
  #allocation0 [shape = 'u32[]', space=smem, size = 0x4, offset = 0x4, fixed_abs, tag = 'smem constant byte address 0x4 - core index']
  #allocation1 [shape = 'u32[144,128]{1,0:T(1,128)}', space=vmem, size = 0x12000, scoped, tag = 'internal scratch']
  #allocation2 [shape = 'f32[256,27]{1,0:T(8,128)}', space=vmem, size = 0x20000, scoped, tag = 'scratch operand']
  #allocation3 [shape = 'f32[256,144]{1,0:T(8,128)}', space=vmem, size = 0x40000, scoped, tag = 'scratch operand']
  %s0 = inlined_call_operand.vmem [shape: f32[2,256,3], index: 0, kind: input, shape index: {}]
  %s1 = inlined_call_operand.vmem [shape: f32[27,16], index: 1, kind: input, shape index: {}]
  %s2 = inlined_call_operand.vmem [shape: f32[1,16], index: 2, kind: input, shape index: {}]
  %s3 = inlined_call_operand.vmem [shape: f32[144,32], index: 3, kind: input, shape index: {}]
  %s4 = inlined_call_operand.vmem [shape: f32[1,32], index: 4, kind: input, shape index: {}]
  %s5 = inlined_call_operand.vmem [shape: f32[1,256,32], index: 5, kind: input, shape index: {}]
  %s6 = inlined_call_operand.vmem [shape: f32[32,128], index: 6, kind: input, shape index: {}]
  %s7 = inlined_call_operand.vmem [shape: f32[1,128], index: 7, kind: input, shape index: {}]
  %s8 = inlined_call_operand.vmem [shape: f32[128,128], index: 8, kind: input, shape index: {}]
  %s9 = inlined_call_operand.vmem [shape: f32[1,128], index: 9, kind: input, shape index: {}]
  %s10 = inlined_call_operand.hbm [shape: f32[2,1,128], index: 10, kind: output, shape index: {}]
  %s11 = sld [smem:[#allocation0]]
  $region73: #{simple_cnn_forward.1} parent=0
    _
  %s13 = ssub.s32 1, %s11
  %s14 = scalar_select 0, %s13, %s11
  $region1: #{simple_cnn_forward.1} parent=0
    #allocation4 [shape = 'u8[1024]{0}', space=vmem, size = 0x400, scoped, tag = 'output window, operand 0']
    #allocation5 [shape = 's32[2]{0}', space=sflag, size = 0x8, scoped, tag = 'scoped memory for simple_cnn_forward.1']
    %15 = vsyncpa [#allocation5], 0
    %s16 = scalar_lea.sflag [#allocation5], 1
    %17 = vsyncpa %s16, 0
    loop: start=0, step=1, limit=4
    $region2: #{simple_cnn_forward.1} parent=1 // loop_pre_header
      _
    $region3: #{simple_cnn_forward.1} parent=1 // loop_header
      %s19 = sphi 0, %s23
      %p20 = scmp.ge.s32.totalorder %s19, 4
      %s29 = sphi 0, %s31
      %s32 = sphi 0, %s29
      %s33 = sphi 0, %s32
      %s49 = sphi 0, %s33
      %s53 = sphi 0, %s53
      %s55 = sphi 0, %s53
      %s56 = sphi 0, %s55
      %s70 = sphi 0, %s56
      %s74 = sphi 0, %s74
      %s76 = sphi 0, %s74
      %s77 = sphi 0, %s76
      %s91 = sphi 0, %s77
      %s95 = sphi 0, %s95
      %s97 = sphi 0, %s95
      %s98 = sphi 0, %s97
      %s112 = sphi 0, %s98
      %s116 = sphi 0, %s116
      %s118 = sphi 0, %s116
      %s119 = sphi 0, %s118
      %s133 = sphi 0, %s119
      %s137 = sphi 0, %s137
      %s139 = sphi 0, %s137
      %s140 = sphi 0, %s139
      %s154 = sphi 0, %s140
      %s158 = sphi 0, %s158
      %s160 = sphi 0, %s158
      %s161 = sphi 0, %s160
      %s175 = sphi 0, %s161
      %s179 = sphi 0, %s179
      %s181 = sphi 0, %s179
      %s182 = sphi 0, %s181
      %s196 = sphi 0, %s182
      %s200 = sphi 0, %s200
      %s202 = sphi 0, %s200
      %s203 = sphi 0, %s202
      %s217 = sphi 0, %s203
      %s221 = sphi 0, %s221
      %s223 = sphi 0, %s221
      %s224 = sphi 0, %s223
      %s238 = sphi 0, %s224
      %s244 = sphi 0, %s246
      %s247 = sphi 0, %s244
      %s248 = sphi 0, %s247
      %s264 = sphi 0, %s248
    $region4: #{simple_cnn_forward.1} parent=1 // loop_header_branch
      %22 = sbr.rel (%p20) target = $region8
    $region5: #{simple_cnn_forward.1} parent=1 // loop_body
      %s24 = ssub.s32 %s19, 1
      %s25 = ssub.s32 %s19, 2
      %s26 = sadd.s32 %s19, 1
      %s27 = ssub.s32 %s19, %s26
      %p28 = scmp.eq.s32.totalorder %s27, 0
      %s30 = sadd.s32 %s29, 1
      %s31 = scalar_select %p28, %s29, %s30
      %p34 = pneg %p28
      %p35 = scmp.eq.s32.totalorder %s19, 1
      %p36 = por %p34, %p35
      %p37 = scmp.ne.s32.totalorder %s29, %s32
      %p38 = scmp.eq.s32.totalorder %s19, 0
      %p39 = por %p37, %p38
      %p40 = scmp.ne.s32.totalorder %s29, %s32
      %p41 = scmp.eq.s32.totalorder %s24, 1
      %p42 = por %p40, %p41
      %p43 = scmp.ne.s32.totalorder %s32, %s33
      %p44 = scmp.eq.s32.totalorder %s24, 0
      %p45 = por %p43, %p44
      %p46 = scmp.ne.s32.totalorder %s32, %s33
      %p47 = scmp.eq.s32.totalorder %s25, 1
      %p48 = por %p46, %p47
      %p50 = scmp.ne.s32.totalorder %s33, %s49
      %p51 = scmp.eq.s32.totalorder %s25, 0
      %p52 = por %p50, %p51
      %s54 = sadd.s32 %s53, 1
      %p57 = scmp.eq.s32.totalorder %s19, 1
      %p58 = scmp.ne.s32.totalorder %s53, %s55
      %p59 = scmp.eq.s32.totalorder %s19, 0
      %p60 = por %p58, %p59
      %p61 = scmp.ne.s32.totalorder %s53, %s55
      %p62 = scmp.eq.s32.totalorder %s24, 1
      %p63 = por %p61, %p62
      %p64 = scmp.ne.s32.totalorder %s55, %s56
      %p65 = scmp.eq.s32.totalorder %s24, 0
      %p66 = por %p64, %p65
      %p67 = scmp.ne.s32.totalorder %s55, %s56
      %p68 = scmp.eq.s32.totalorder %s25, 1
      %p69 = por %p67, %p68
      %p71 = scmp.ne.s32.totalorder %s56, %s70
      %p72 = scmp.eq.s32.totalorder %s25, 0
      %p73 = por %p71, %p72
      %s75 = sadd.s32 %s74, 1
      %p78 = scmp.eq.s32.totalorder %s19, 1
      %p79 = scmp.ne.s32.totalorder %s74, %s76
      %p80 = scmp.eq.s32.totalorder %s19, 0
      %p81 = por %p79, %p80
      %p82 = scmp.ne.s32.totalorder %s74, %s76
      %p83 = scmp.eq.s32.totalorder %s24, 1
      %p84 = por %p82, %p83
      %p85 = scmp.ne.s32.totalorder %s76, %s77
      %p86 = scmp.eq.s32.totalorder %s24, 0
      %p87 = por %p85, %p86
      %p88 = scmp.ne.s32.totalorder %s76, %s77
      %p89 = scmp.eq.s32.totalorder %s25, 1
      %p90 = por %p88, %p89
      %p92 = scmp.ne.s32.totalorder %s77, %s91
      %p93 = scmp.eq.s32.totalorder %s25, 0
      %p94 = por %p92, %p93
      %s96 = sadd.s32 %s95, 1
      %p99 = scmp.eq.s32.totalorder %s19, 1
      %p100 = scmp.ne.s32.totalorder %s95, %s97
      %p101 = scmp.eq.s32.totalorder %s19, 0
      %p102 = por %p100, %p101
      %p103 = scmp.ne.s32.totalorder %s95, %s97
      %p104 = scmp.eq.s32.totalorder %s24, 1
      %p105 = por %p103, %p104
      %p106 = scmp.ne.s32.totalorder %s97, %s98
      %p107 = scmp.eq.s32.totalorder %s24, 0
      %p108 = por %p106, %p107
      %p109 = scmp.ne.s32.totalorder %s97, %s98
      %p110 = scmp.eq.s32.totalorder %s25, 1
      %p111 = por %p109, %p110
      %p113 = scmp.ne.s32.totalorder %s98, %s112
      %p114 = scmp.eq.s32.totalorder %s25, 0
      %p115 = por %p113, %p114
      %s117 = sadd.s32 %s116, 1
      %p120 = scmp.eq.s32.totalorder %s19, 1
      %p121 = scmp.ne.s32.totalorder %s116, %s118
      %p122 = scmp.eq.s32.totalorder %s19, 0
      %p123 = por %p121, %p122
      %p124 = scmp.ne.s32.totalorder %s116, %s118
      %p125 = scmp.eq.s32.totalorder %s24, 1
      %p126 = por %p124, %p125
      %p127 = scmp.ne.s32.totalorder %s118, %s119
      %p128 = scmp.eq.s32.totalorder %s24, 0
      %p129 = por %p127, %p128
      %p130 = scmp.ne.s32.totalorder %s118, %s119
      %p131 = scmp.eq.s32.totalorder %s25, 1
      %p132 = por %p130, %p131
      %p134 = scmp.ne.s32.totalorder %s119, %s133
      %p135 = scmp.eq.s32.totalorder %s25, 0
      %p136 = por %p134, %p135
      %s138 = sadd.s32 %s137, 1
      %p141 = scmp.eq.s32.totalorder %s19, 1
      %p142 = scmp.ne.s32.totalorder %s137, %s139
      %p143 = scmp.eq.s32.totalorder %s19, 0
      %p144 = por %p142, %p143
      %p145 = scmp.ne.s32.totalorder %s137, %s139
      %p146 = scmp.eq.s32.totalorder %s24, 1
      %p147 = por %p145, %p146
      %p148 = scmp.ne.s32.totalorder %s139, %s140
      %p149 = scmp.eq.s32.totalorder %s24, 0
      %p150 = por %p148, %p149
      %p151 = scmp.ne.s32.totalorder %s139, %s140
      %p152 = scmp.eq.s32.totalorder %s25, 1
      %p153 = por %p151, %p152
      %p155 = scmp.ne.s32.totalorder %s140, %s154
      %p156 = scmp.eq.s32.totalorder %s25, 0
      %p157 = por %p155, %p156
      %s159 = sadd.s32 %s158, 1
      %p162 = scmp.eq.s32.totalorder %s19, 1
      %p163 = scmp.ne.s32.totalorder %s158, %s160
      %p164 = scmp.eq.s32.totalorder %s19, 0
      %p165 = por %p163, %p164
      %p166 = scmp.ne.s32.totalorder %s158, %s160
      %p167 = scmp.eq.s32.totalorder %s24, 1
      %p168 = por %p166, %p167
      %p169 = scmp.ne.s32.totalorder %s160, %s161
      %p170 = scmp.eq.s32.totalorder %s24, 0
      %p171 = por %p169, %p170
      %p172 = scmp.ne.s32.totalorder %s160, %s161
      %p173 = scmp.eq.s32.totalorder %s25, 1
      %p174 = por %p172, %p173
      %p176 = scmp.ne.s32.totalorder %s161, %s175
      %p177 = scmp.eq.s32.totalorder %s25, 0
      %p178 = por %p176, %p177
      %s180 = sadd.s32 %s179, 1
      %p183 = scmp.eq.s32.totalorder %s19, 1
      %p184 = scmp.ne.s32.totalorder %s179, %s181
      %p185 = scmp.eq.s32.totalorder %s19, 0
      %p186 = por %p184, %p185
      %p187 = scmp.ne.s32.totalorder %s179, %s181
      %p188 = scmp.eq.s32.totalorder %s24, 1
      %p189 = por %p187, %p188
      %p190 = scmp.ne.s32.totalorder %s181, %s182
      %p191 = scmp.eq.s32.totalorder %s24, 0
      %p192 = por %p190, %p191
      %p193 = scmp.ne.s32.totalorder %s181, %s182
      %p194 = scmp.eq.s32.totalorder %s25, 1
      %p195 = por %p193, %p194
      %p197 = scmp.ne.s32.totalorder %s182, %s196
      %p198 = scmp.eq.s32.totalorder %s25, 0
      %p199 = por %p197, %p198
      %s201 = sadd.s32 %s200, 1
      %p204 = scmp.eq.s32.totalorder %s19, 1
      %p205 = scmp.ne.s32.totalorder %s200, %s202
      %p206 = scmp.eq.s32.totalorder %s19, 0
      %p207 = por %p205, %p206
      %p208 = scmp.ne.s32.totalorder %s200, %s202
      %p209 = scmp.eq.s32.totalorder %s24, 1
      %p210 = por %p208, %p209
      %p211 = scmp.ne.s32.totalorder %s202, %s203
      %p212 = scmp.eq.s32.totalorder %s24, 0
      %p213 = por %p211, %p212
      %p214 = scmp.ne.s32.totalorder %s202, %s203
      %p215 = scmp.eq.s32.totalorder %s25, 1
      %p216 = por %p214, %p215
      %p218 = scmp.ne.s32.totalorder %s203, %s217
      %p219 = scmp.eq.s32.totalorder %s25, 0
      %p220 = por %p218, %p219
      %s222 = sadd.s32 %s221, 1
      %p225 = scmp.eq.s32.totalorder %s19, 1
      %p226 = scmp.ne.s32.totalorder %s221, %s223
      %p227 = scmp.eq.s32.totalorder %s19, 0
      %p228 = por %p226, %p227
      %p229 = scmp.ne.s32.totalorder %s221, %s223
      %p230 = scmp.eq.s32.totalorder %s24, 1
      %p231 = por %p229, %p230
      %p232 = scmp.ne.s32.totalorder %s223, %s224
      %p233 = scmp.eq.s32.totalorder %s24, 0
      %p234 = por %p232, %p233
      %p235 = scmp.ne.s32.totalorder %s223, %s224
      %p236 = scmp.eq.s32.totalorder %s25, 1
      %p237 = por %p235, %p236
      %p239 = scmp.ne.s32.totalorder %s224, %s238
      %p240 = scmp.eq.s32.totalorder %s25, 0
      %p241 = por %p239, %p240
      %s242 = ssub.s32 %s19, %s26
      %p243 = scmp.eq.s32.totalorder %s242, 0
      %s245 = sadd.s32 %s244, 1
      %s246 = scalar_select %p243, %s244, %s245
      %p249 = pneg %p243
      %p250 = scmp.eq.s32.totalorder %s19, 1
      %p251 = por %p249, %p250
      %p252 = scmp.ne.s32.totalorder %s244, %s247
      %p253 = scmp.eq.s32.totalorder %s19, 0
      %p254 = por %p252, %p253
      %p255 = scmp.ne.s32.totalorder %s244, %s247
      %p256 = scmp.eq.s32.totalorder %s24, 1
      %p257 = por %p255, %p256
      %p258 = scmp.ne.s32.totalorder %s247, %s248
      %p259 = scmp.eq.s32.totalorder %s24, 0
      %p260 = por %p258, %p259
      %p261 = scmp.ne.s32.totalorder %s247, %s248
      %p262 = scmp.eq.s32.totalorder %s25, 1
      %p263 = por %p261, %p262
      %p265 = scmp.ne.s32.totalorder %s248, %s264
      %p266 = scmp.eq.s32.totalorder %s25, 0
      %p267 = por %p265, %p266
      %p268 = scmp.le.s32.totalorder 1, %s19
      %p269 = scmp.lt.s32.totalorder %s19, 3
      %p270 = pnand %p268, %p269
      %p271 = pneg %p270
      // Predicated region
      $region9: #{simple_cnn_forward.1} parent=5 // pred_check
        _
      $region10: #{simple_cnn_forward.1} parent=5 // pred_check_branch
        %273 = sbr.rel (%p270) target = $region12
      $region11: #{simple_cnn_forward.1} parent=5 // pred_region
        %s274 = ssub.s32 %s19, 1
        // Predicated region
        $region13: #{simple_cnn_forward.1} parent=11 // pred_check
          %p275 = pneg %p66
        $region14: #{simple_cnn_forward.1} parent=11 // pred_check_branch
          %277 = sbr.rel (%p275) target = $region16
        $region15: #{simple_cnn_forward.1} parent=11 // pred_region
          _
        $region16: #{simple_cnn_forward.1} parent=11 // pred_fallthru
          _
        // Predicated region
        $region17: #{simple_cnn_forward.1} parent=11 // pred_check
          %p278 = pneg %p87
        $region18: #{simple_cnn_forward.1} parent=11 // pred_check_branch
          %280 = sbr.rel (%p278) target = $region20
        $region19: #{simple_cnn_forward.1} parent=11 // pred_region
          _
        $region20: #{simple_cnn_forward.1} parent=11 // pred_fallthru
          _
        // Predicated region
        $region21: #{simple_cnn_forward.1} parent=11 // pred_check
          %p281 = pneg %p108
        $region22: #{simple_cnn_forward.1} parent=11 // pred_check_branch
          %283 = sbr.rel (%p281) target = $region24
        $region23: #{simple_cnn_forward.1} parent=11 // pred_region
          _
        $region24: #{simple_cnn_forward.1} parent=11 // pred_fallthru
          _
        // Predicated region
        $region25: #{simple_cnn_forward.1} parent=11 // pred_check
          %p284 = pneg %p129
        $region26: #{simple_cnn_forward.1} parent=11 // pred_check_branch
          %286 = sbr.rel (%p284) target = $region28
        $region27: #{simple_cnn_forward.1} parent=11 // pred_region
          _
        $region28: #{simple_cnn_forward.1} parent=11 // pred_fallthru
          _
        // Predicated region
        $region29: #{simple_cnn_forward.1} parent=11 // pred_check
          %p287 = pneg %p150
        $region30: #{simple_cnn_forward.1} parent=11 // pred_check_branch
          %289 = sbr.rel (%p287) target = $region32
        $region31: #{simple_cnn_forward.1} parent=11 // pred_region
          _
        $region32: #{simple_cnn_forward.1} parent=11 // pred_fallthru
          _
        // Predicated region
        $region33: #{simple_cnn_forward.1} parent=11 // pred_check
          %p290 = pneg %p171
        $region34: #{simple_cnn_forward.1} parent=11 // pred_check_branch
          %292 = sbr.rel (%p290) target = $region36
        $region35: #{simple_cnn_forward.1} parent=11 // pred_region
          _
        $region36: #{simple_cnn_forward.1} parent=11 // pred_fallthru
          _
        // Predicated region
        $region37: #{simple_cnn_forward.1} parent=11 // pred_check
          %p293 = pneg %p192
        $region38: #{simple_cnn_forward.1} parent=11 // pred_check_branch
          %295 = sbr.rel (%p293) target = $region40
        $region39: #{simple_cnn_forward.1} parent=11 // pred_region
          _
        $region40: #{simple_cnn_forward.1} parent=11 // pred_fallthru
          _
        // Predicated region
        $region41: #{simple_cnn_forward.1} parent=11 // pred_check
          %p296 = pneg %p213
        $region42: #{simple_cnn_forward.1} parent=11 // pred_check_branch
          %298 = sbr.rel (%p296) target = $region44
        $region43: #{simple_cnn_forward.1} parent=11 // pred_region
          _
        $region44: #{simple_cnn_forward.1} parent=11 // pred_fallthru
          _
        // Predicated region
        $region45: #{simple_cnn_forward.1} parent=11 // pred_check
          %p299 = pneg %p234
        $region46: #{simple_cnn_forward.1} parent=11 // pred_check_branch
          %301 = sbr.rel (%p299) target = $region48
        $region47: #{simple_cnn_forward.1} parent=11 // pred_region
          _
        $region48: #{simple_cnn_forward.1} parent=11 // pred_fallthru
          _
      $region12: #{simple_cnn_forward.1} parent=5 // pred_fallthru
        _
      %p302 = scmp.lt.s32.totalorder %s19, 2
      // Predicated region
      $region49: #{simple_cnn_forward.1} parent=5 // pred_check
        %p303 = pneg %p302
      $region50: #{simple_cnn_forward.1} parent=5 // pred_check_branch
        %305 = sbr.rel (%p303) target = $region52
      $region51: #{simple_cnn_forward.1} parent=5 // pred_region
        // Predicated region
        $region53: #{simple_cnn_forward.1} parent=51 // pred_check
          %p306 = pneg %p39
        $region54: #{simple_cnn_forward.1} parent=51 // pred_check_branch
          %308 = sbr.rel (%p306) target = $region56
        $region55: #{simple_cnn_forward.1} parent=51 // pred_region
          %p309 = scmp.lt.s32.totalorder %s19, 1
          %s310 = scalar_select %p309, %s19, 1
          %s311 = smul.addr %s310, 32
          %s312 = smul.addr %s311, 8
          %s313 = scalar_lea.vmem %s0, %s312
        $region56: #{simple_cnn_forward.1} parent=51 // pred_fallthru
          _
      $region52: #{simple_cnn_forward.1} parent=5 // pred_fallthru
        _
      %p314 = scmp.le.s32.totalorder 1, %s19
      %p315 = scmp.lt.s32.totalorder %s19, 3
      %p316 = pnand %p314, %p315
      %p317 = pneg %p316
      // Predicated region
      $region57: #{simple_cnn_forward.1} parent=5 // pred_check
        _
      $region58: #{simple_cnn_forward.1} parent=5 // pred_check_branch
        %319 = sbr.rel (%p316) target = $region60
      $region59: #{simple_cnn_forward.1} parent=5 // pred_region
        %s320 = ssub.s32 %s19, 1
        %p321 = scmp.lt.s32.totalorder %s24, 1
        %s322 = scalar_select %p321, %s24, 1
        %s323 = smul.addr %s322, 32
        %s324 = smul.addr %s323, 8
        %s325 = scalar_lea.vmem %s0, %s324
        %p326 = pneg %p45
        %p327 = pneg %p42
        %p328 = pneg %p66
        %p329 = pneg %p63
        %p330 = pneg %p87
        %p331 = pneg %p84
        %p332 = pneg %p108
        %p333 = pneg %p105
        %p334 = pneg %p129
        %p335 = pneg %p126
        %p336 = pneg %p150
        %p337 = pneg %p147
        %p338 = pneg %p171
        %p339 = pneg %p168
        %p340 = pneg %p192
        %p341 = pneg %p189
        %p342 = pneg %p213
        %p343 = pneg %p210
        %p344 = pneg %p234
        %p345 = pneg %p231
        %p346 = pneg %p260
        %p347 = pneg %p257
        %s348 = sand.u32 %s247, 1
        %s349 = scalar_lea.sflag [#allocation5], %s348
        %s350 = sand.u32 %s247, 1
        %s351 = scalar_lea.vmem [#allocation4], %s350
        %p352 = scmp.lt.s32.totalorder %s24, 1
        %s353 = scalar_select %p352, %s24, 1
        %s354 = smul.addr %s353, 32
        %s355 = smul.addr %s354, 8
        %s356 = scalar_lea.vmem %s0, %s355
        %v357 = vld [vmem:[%s356] sm:$0xff]
        %v358 = vld [vmem:[%s356 + $0x8] sm:$0xff]
        %v359 = vld [vmem:[%s356 + $0x10] sm:$0xff]
        %v360 = vld [vmem:[%s356 + $0x18] sm:$0xff]
        %v361 = vld [vmem:[%s356 + $0x20] sm:$0xff]
        %v362 = vld [vmem:[%s356 + $0x28] sm:$0xff]
        %v363 = vld [vmem:[%s356 + $0x30] sm:$0xff]
        %v364 = vld [vmem:[%s356 + $0x38] sm:$0xff]
        %v365 = vld [vmem:[%s356 + $0x40] sm:$0xff]
        %v366 = vld [vmem:[%s356 + $0x48] sm:$0xff]
        %v367 = vld [vmem:[%s356 + $0x50] sm:$0xff]
        %v368 = vld [vmem:[%s356 + $0x58] sm:$0xff]
        %v369 = vld [vmem:[%s356 + $0x60] sm:$0xff]
        %v370 = vld [vmem:[%s356 + $0x68] sm:$0xff]
        %v371 = vld [vmem:[%s356 + $0x70] sm:$0xff]
        %v372 = vld [vmem:[%s356 + $0x78] sm:$0xff]
        %v373 = vld [vmem:[%s356 + $0x80] sm:$0xff]
        %v374 = vld [vmem:[%s356 + $0x88] sm:$0xff]
        %v375 = vld [vmem:[%s356 + $0x90] sm:$0xff]
        %v376 = vld [vmem:[%s356 + $0x98] sm:$0xff]
        %v377 = vld [vmem:[%s356 + $0xa0] sm:$0xff]
        %v378 = vld [vmem:[%s356 + $0xa8] sm:$0xff]
        %v379 = vld [vmem:[%s356 + $0xb0] sm:$0xff]
        %v380 = vld [vmem:[%s356 + $0xb8] sm:$0xff]
        %v381 = vld [vmem:[%s356 + $0xc0] sm:$0xff]
        %v382 = vld [vmem:[%s356 + $0xc8] sm:$0xff]
        %v383 = vld [vmem:[%s356 + $0xd0] sm:$0xff]
        %v384 = vld [vmem:[%s356 + $0xd8] sm:$0xff]
        %v385 = vld [vmem:[%s356 + $0xe0] sm:$0xff]
        %v386 = vld [vmem:[%s356 + $0xe8] sm:$0xff]
        %v387 = vld [vmem:[%s356 + $0xf0] sm:$0xff]
        %v388 = vld [vmem:[%s356 + $0xf8] sm:$0xff]
        %vm389 = vcmask 23552
        %390 = vst.msk [vmem:[#allocation2] sm:$0xff] %vm389, %v357
        %391 = vst.msk [vmem:[#allocation2 + $0x8] sm:$0xff] %vm389, %v358
        %392 = vst.msk [vmem:[#allocation2 + $0x10] sm:$0xff] %vm389, %v359
        %393 = vst.msk [vmem:[#allocation2 + $0x18] sm:$0xff] %vm389, %v360
        %394 = vst.msk [vmem:[#allocation2 + $0x20] sm:$0xff] %vm389, %v361
        %395 = vst.msk [vmem:[#allocation2 + $0x28] sm:$0xff] %vm389, %v362
        %396 = vst.msk [vmem:[#allocation2 + $0x30] sm:$0xff] %vm389, %v363
        %397 = vst.msk [vmem:[#allocation2 + $0x38] sm:$0xff] %vm389, %v364
        %398 = vst.msk [vmem:[#allocation2 + $0x40] sm:$0xff] %vm389, %v365
        %399 = vst.msk [vmem:[#allocation2 + $0x48] sm:$0xff] %vm389, %v366
        %400 = vst.msk [vmem:[#allocation2 + $0x50] sm:$0xff] %vm389, %v367
        %401 = vst.msk [vmem:[#allocation2 + $0x58] sm:$0xff] %vm389, %v368
        %402 = vst.msk [vmem:[#allocation2 + $0x60] sm:$0xff] %vm389, %v369
        %403 = vst.msk [vmem:[#allocation2 + $0x68] sm:$0xff] %vm389, %v370
        %404 = vst.msk [vmem:[#allocation2 + $0x70] sm:$0xff] %vm389, %v371
        %405 = vst.msk [vmem:[#allocation2 + $0x78] sm:$0xff] %vm389, %v372
        %406 = vst.msk [vmem:[#allocation2 + $0x80] sm:$0xff] %vm389, %v373
        %407 = vst.msk [vmem:[#allocation2 + $0x88] sm:$0xff] %vm389, %v374
        %408 = vst.msk [vmem:[#allocation2 + $0x90] sm:$0xff] %vm389, %v375
        %409 = vst.msk [vmem:[#allocation2 + $0x98] sm:$0xff] %vm389, %v376
        %410 = vst.msk [vmem:[#allocation2 + $0xa0] sm:$0xff] %vm389, %v377
        %411 = vst.msk [vmem:[#allocation2 + $0xa8] sm:$0xff] %vm389, %v378
        %412 = vst.msk [vmem:[#allocation2 + $0xb0] sm:$0xff] %vm389, %v379
        %413 = vst.msk [vmem:[#allocation2 + $0xb8] sm:$0xff] %vm389, %v380
        %414 = vst.msk [vmem:[#allocation2 + $0xc0] sm:$0xff] %vm389, %v381
        %415 = vst.msk [vmem:[#allocation2 + $0xc8] sm:$0xff] %vm389, %v382
        %416 = vst.msk [vmem:[#allocation2 + $0xd0] sm:$0xff] %vm389, %v383
        %417 = vst.msk [vmem:[#allocation2 + $0xd8] sm:$0xff] %vm389, %v384
        %418 = vst.msk [vmem:[#allocation2 + $0xe0] sm:$0xff] %vm389, %v385
        %419 = vst.msk [vmem:[#allocation2 + $0xe8] sm:$0xff] %vm389, %v386
        %420 = vst.msk [vmem:[#allocation2 + $0xf0] sm:$0xff] %vm389, %v387
        %421 = vst.msk [vmem:[#allocation2 + $0xf8] sm:$0xff] %vm389, %v388
        %v422 = vrot.slane %v357, 1
        %v423 = vrot.slane %v358, 1
        %v424 = vrot.slane %v359, 1
        %v425 = vrot.slane %v360, 1
        %v426 = vrot.slane %v361, 1
        %v427 = vrot.slane %v362, 1
        %v428 = vrot.slane %v363, 1
        %v429 = vrot.slane %v364, 1
        %v430 = vrot.slane %v365, 1
        %v431 = vrot.slane %v366, 1
        %v432 = vrot.slane %v367, 1
        %v433 = vrot.slane %v368, 1
        %v434 = vrot.slane %v369, 1
        %v435 = vrot.slane %v370, 1
        %v436 = vrot.slane %v371, 1
        %v437 = vrot.slane %v372, 1
        %v438 = vrot.slane %v373, 1
        %v439 = vrot.slane %v374, 1
        %v440 = vrot.slane %v375, 1
        %v441 = vrot.slane %v376, 1
        %v442 = vrot.slane %v377, 1
        %v443 = vrot.slane %v378, 1
        %v444 = vrot.slane %v379, 1
        %v445 = vrot.slane %v380, 1
        %v446 = vrot.slane %v381, 1
        %v447 = vrot.slane %v382, 1
        %v448 = vrot.slane %v383, 1
        %v449 = vrot.slane %v384, 1
        %v450 = vrot.slane %v385, 1
        %v451 = vrot.slane %v386, 1
        %v452 = vrot.slane %v387, 1
        %v453 = vrot.slane %v388, 1
        %v454 = vlaneseq
        %v455 = vshrl.u32 %v454, 7
        %vm456 = vcmp.lt.s32.totalorder %v455, 7
        %v457 = vsel %vm456, %v452, %v453
        %v458 = vsel %vm456, %v451, %v452
        %v459 = vsel %vm456, %v450, %v451
        %v460 = vsel %vm456, %v449, %v450
        %v461 = vsel %vm456, %v448, %v449
        %v462 = vsel %vm456, %v447, %v448
        %v463 = vsel %vm456, %v446, %v447
        %v464 = vsel %vm456, %v445, %v446
        %v465 = vsel %vm456, %v444, %v445
        %v466 = vsel %vm456, %v443, %v444
        %v467 = vsel %vm456, %v442, %v443
        %v468 = vsel %vm456, %v441, %v442
        %v469 = vsel %vm456, %v440, %v441
        %v470 = vsel %vm456, %v439, %v440
        %v471 = vsel %vm456, %v438, %v439
        %v472 = vsel %vm456, %v437, %v438
        %v473 = vsel %vm456, %v436, %v437
        %v474 = vsel %vm456, %v435, %v436
        %v475 = vsel %vm456, %v434, %v435
        %v476 = vsel %vm456, %v433, %v434
        %v477 = vsel %vm456, %v432, %v433
        %v478 = vsel %vm456, %v431, %v432
        %v479 = vsel %vm456, %v430, %v431
        %v480 = vsel %vm456, %v429, %v430
        %v481 = vsel %vm456, %v428, %v429
        %v482 = vsel %vm456, %v427, %v428
        %v483 = vsel %vm456, %v426, %v427
        %v484 = vsel %vm456, %v425, %v426
        %v485 = vsel %vm456, %v424, %v425
        %v486 = vsel %vm456, %v423, %v424
        %v487 = vsel %vm456, %v422, %v423
        %v488 = vsel %vm456, %v453, %v422
        %521 = vrot.lane.b32.xlu0 %v487, 3
        %v522 = vpop.permute.xlu0 %521
        %523 = vrot.lane.b32.xlu0 %v486, 3
        %v524 = vpop.permute.xlu0 %523
        %525 = vrot.lane.b32.xlu0 %v485, 3
        %v526 = vpop.permute.xlu0 %525
        %527 = vrot.lane.b32.xlu0 %v484, 3
        %v528 = vpop.permute.xlu0 %527
        %529 = vrot.lane.b32.xlu0 %v483, 3
        %v530 = vpop.permute.xlu0 %529
        %531 = vrot.lane.b32.xlu0 %v482, 3
        %v532 = vpop.permute.xlu0 %531
        %533 = vrot.lane.b32.xlu0 %v481, 3
        %v534 = vpop.permute.xlu0 %533
        %535 = vrot.lane.b32.xlu0 %v480, 3
        %v536 = vpop.permute.xlu0 %535
        %537 = vrot.lane.b32.xlu0 %v479, 3
        %v538 = vpop.permute.xlu0 %537
        %539 = vrot.lane.b32.xlu0 %v478, 3
        %v540 = vpop.permute.xlu0 %539
        %541 = vrot.lane.b32.xlu0 %v477, 3
        %v542 = vpop.permute.xlu0 %541
        %543 = vrot.lane.b32.xlu0 %v476, 3
        %v544 = vpop.permute.xlu0 %543
        %545 = vrot.lane.b32.xlu0 %v475, 3
        %v546 = vpop.permute.xlu0 %545
        %547 = vrot.lane.b32.xlu0 %v474, 3
        %v548 = vpop.permute.xlu0 %547
        %549 = vrot.lane.b32.xlu0 %v473, 3
        %v550 = vpop.permute.xlu0 %549
        %551 = vrot.lane.b32.xlu0 %v472, 3
        %v552 = vpop.permute.xlu0 %551
        %553 = vrot.lane.b32.xlu0 %v471, 3
        %v554 = vpop.permute.xlu0 %553
        %555 = vrot.lane.b32.xlu0 %v470, 3
        %v556 = vpop.permute.xlu0 %555
        %557 = vrot.lane.b32.xlu0 %v469, 3
        %v558 = vpop.permute.xlu0 %557
        %559 = vrot.lane.b32.xlu0 %v468, 3
        %v560 = vpop.permute.xlu0 %559
        %561 = vrot.lane.b32.xlu0 %v467, 3
        %v562 = vpop.permute.xlu0 %561
        %563 = vrot.lane.b32.xlu0 %v466, 3
        %v564 = vpop.permute.xlu0 %563
        %565 = vrot.lane.b32.xlu0 %v465, 3
        %v566 = vpop.permute.xlu0 %565
        %567 = vrot.lane.b32.xlu0 %v464, 3
        %v568 = vpop.permute.xlu0 %567
        %569 = vrot.lane.b32.xlu0 %v463, 3
        %v570 = vpop.permute.xlu0 %569
        %571 = vrot.lane.b32.xlu0 %v462, 3
        %v572 = vpop.permute.xlu0 %571
        %573 = vrot.lane.b32.xlu0 %v461, 3
        %v574 = vpop.permute.xlu0 %573
        %575 = vrot.lane.b32.xlu0 %v460, 3
        %v576 = vpop.permute.xlu0 %575
        %577 = vrot.lane.b32.xlu0 %v459, 3
        %v578 = vpop.permute.xlu0 %577
        %579 = vrot.lane.b32.xlu0 %v458, 3
        %v580 = vpop.permute.xlu0 %579
        %581 = vrot.lane.b32.xlu0 %v457, 3
        %v582 = vpop.permute.xlu0 %581
        %583 = vrot.lane.b32.xlu0 %v488, 3
        %v584 = vpop.permute.xlu0 %583
        %vm617 = vcmask 48152
        %618 = vst.msk [vmem:[#allocation2] sm:$0xff] %vm617, %v522
        %619 = vst.msk [vmem:[#allocation2 + $0x8] sm:$0xff] %vm617, %v524
        %620 = vst.msk [vmem:[#allocation2 + $0x10] sm:$0xff] %vm617, %v526
        %621 = vst.msk [vmem:[#allocation2 + $0x18] sm:$0xff] %vm617, %v528
        %622 = vst.msk [vmem:[#allocation2 + $0x20] sm:$0xff] %vm617, %v530
        %623 = vst.msk [vmem:[#allocation2 + $0x28] sm:$0xff] %vm617, %v532
        %624 = vst.msk [vmem:[#allocation2 + $0x30] sm:$0xff] %vm617, %v534
        %625 = vst.msk [vmem:[#allocation2 + $0x38] sm:$0xff] %vm617, %v536
        %626 = vst.msk [vmem:[#allocation2 + $0x40] sm:$0xff] %vm617, %v538
        %627 = vst.msk [vmem:[#allocation2 + $0x48] sm:$0xff] %vm617, %v540
        %628 = vst.msk [vmem:[#allocation2 + $0x50] sm:$0xff] %vm617, %v542
        %629 = vst.msk [vmem:[#allocation2 + $0x58] sm:$0xff] %vm617, %v544
        %630 = vst.msk [vmem:[#allocation2 + $0x60] sm:$0xff] %vm617, %v546
        %631 = vst.msk [vmem:[#allocation2 + $0x68] sm:$0xff] %vm617, %v548
        %632 = vst.msk [vmem:[#allocation2 + $0x70] sm:$0xff] %vm617, %v550
        %633 = vst.msk [vmem:[#allocation2 + $0x78] sm:$0xff] %vm617, %v552
        %634 = vst.msk [vmem:[#allocation2 + $0x80] sm:$0xff] %vm617, %v554
        %635 = vst.msk [vmem:[#allocation2 + $0x88] sm:$0xff] %vm617, %v556
        %636 = vst.msk [vmem:[#allocation2 + $0x90] sm:$0xff] %vm617, %v558
        %637 = vst.msk [vmem:[#allocation2 + $0x98] sm:$0xff] %vm617, %v560
        %638 = vst.msk [vmem:[#allocation2 + $0xa0] sm:$0xff] %vm617, %v562
        %639 = vst.msk [vmem:[#allocation2 + $0xa8] sm:$0xff] %vm617, %v564
        %640 = vst.msk [vmem:[#allocation2 + $0xb0] sm:$0xff] %vm617, %v566
        %641 = vst.msk [vmem:[#allocation2 + $0xb8] sm:$0xff] %vm617, %v568
        %642 = vst.msk [vmem:[#allocation2 + $0xc0] sm:$0xff] %vm617, %v570
        %643 = vst.msk [vmem:[#allocation2 + $0xc8] sm:$0xff] %vm617, %v572
        %644 = vst.msk [vmem:[#allocation2 + $0xd0] sm:$0xff] %vm617, %v574
        %645 = vst.msk [vmem:[#allocation2 + $0xd8] sm:$0xff] %vm617, %v576
        %646 = vst.msk [vmem:[#allocation2 + $0xe0] sm:$0xff] %vm617, %v578
        %647 = vst.msk [vmem:[#allocation2 + $0xe8] sm:$0xff] %vm617, %v580
        %648 = vst.msk [vmem:[#allocation2 + $0xf0] sm:$0xff] %vm617, %v582
        %649 = vst.msk [vmem:[#allocation2 + $0xf8] sm:$0xff] %vm617, %v584
        %v650 = vrot.slane %v357, 2
        %v651 = vrot.slane %v358, 2
        %v652 = vrot.slane %v359, 2
        %v653 = vrot.slane %v360, 2
        %v654 = vrot.slane %v361, 2
        %v655 = vrot.slane %v362, 2
        %v656 = vrot.slane %v363, 2
        %v657 = vrot.slane %v364, 2
        %v658 = vrot.slane %v365, 2
        %v659 = vrot.slane %v366, 2
        %v660 = vrot.slane %v367, 2
        %v661 = vrot.slane %v368, 2
        %v662 = vrot.slane %v369, 2
        %v663 = vrot.slane %v370, 2
        %v664 = vrot.slane %v371, 2
        %v665 = vrot.slane %v372, 2
        %v666 = vrot.slane %v373, 2
        %v667 = vrot.slane %v374, 2
        %v668 = vrot.slane %v375, 2
        %v669 = vrot.slane %v376, 2
        %v670 = vrot.slane %v377, 2
        %v671 = vrot.slane %v378, 2
        %v672 = vrot.slane %v379, 2
        %v673 = vrot.slane %v380, 2
        %v674 = vrot.slane %v381, 2
        %v675 = vrot.slane %v382, 2
        %v676 = vrot.slane %v383, 2
        %v677 = vrot.slane %v384, 2
        %v678 = vrot.slane %v385, 2
        %v679 = vrot.slane %v386, 2
        %v680 = vrot.slane %v387, 2
        %v681 = vrot.slane %v388, 2
        %vm682 = vcmp.lt.s32.totalorder %v455, 6
        %v683 = vsel %vm682, %v680, %v681
        %v684 = vsel %vm682, %v679, %v680
        %v685 = vsel %vm682, %v678, %v679
        %v686 = vsel %vm682, %v677, %v678
        %v687 = vsel %vm682, %v676, %v677
        %v688 = vsel %vm682, %v675, %v676
        %v689 = vsel %vm682, %v674, %v675
        %v690 = vsel %vm682, %v673, %v674
        %v691 = vsel %vm682, %v672, %v673
        %v692 = vsel %vm682, %v671, %v672
        %v693 = vsel %vm682, %v670, %v671
        %v694 = vsel %vm682, %v669, %v670
        %v695 = vsel %vm682, %v668, %v669
        %v696 = vsel %vm682, %v667, %v668
        %v697 = vsel %vm682, %v666, %v667
        %v698 = vsel %vm682, %v665, %v666
        %v699 = vsel %vm682, %v664, %v665
        %v700 = vsel %vm682, %v663, %v664
        %v701 = vsel %vm682, %v662, %v663
        %v702 = vsel %vm682, %v661, %v662
        %v703 = vsel %vm682, %v660, %v661
        %v704 = vsel %vm682, %v659, %v660
        %v705 = vsel %vm682, %v658, %v659
        %v706 = vsel %vm682, %v657, %v658
        %v707 = vsel %vm682, %v656, %v657
        %v708 = vsel %vm682, %v655, %v656
        %v709 = vsel %vm682, %v654, %v655
        %v710 = vsel %vm682, %v653, %v654
        %v711 = vsel %vm682, %v652, %v653
        %v712 = vsel %vm682, %v651, %v652
        %v713 = vsel %vm682, %v650, %v651
        %v714 = vsel %vm682, %v681, %v650
        %747 = vrot.lane.b32.xlu0 %v713, 6
        %v748 = vpop.permute.xlu0 %747
        %749 = vrot.lane.b32.xlu0 %v712, 6
        %v750 = vpop.permute.xlu0 %749
        %751 = vrot.lane.b32.xlu0 %v711, 6
        %v752 = vpop.permute.xlu0 %751
        %753 = vrot.lane.b32.xlu0 %v710, 6
        %v754 = vpop.permute.xlu0 %753
        %755 = vrot.lane.b32.xlu0 %v709, 6
        %v756 = vpop.permute.xlu0 %755
        %757 = vrot.lane.b32.xlu0 %v708, 6
        %v758 = vpop.permute.xlu0 %757
        %759 = vrot.lane.b32.xlu0 %v707, 6
        %v760 = vpop.permute.xlu0 %759
        %761 = vrot.lane.b32.xlu0 %v706, 6
        %v762 = vpop.permute.xlu0 %761
        %763 = vrot.lane.b32.xlu0 %v705, 6
        %v764 = vpop.permute.xlu0 %763
        %765 = vrot.lane.b32.xlu0 %v704, 6
        %v766 = vpop.permute.xlu0 %765
        %767 = vrot.lane.b32.xlu0 %v703, 6
        %v768 = vpop.permute.xlu0 %767
        %769 = vrot.lane.b32.xlu0 %v702, 6
        %v770 = vpop.permute.xlu0 %769
        %771 = vrot.lane.b32.xlu0 %v701, 6
        %v772 = vpop.permute.xlu0 %771
        %773 = vrot.lane.b32.xlu0 %v700, 6
        %v774 = vpop.permute.xlu0 %773
        %775 = vrot.lane.b32.xlu0 %v699, 6
        %v776 = vpop.permute.xlu0 %775
        %777 = vrot.lane.b32.xlu0 %v698, 6
        %v778 = vpop.permute.xlu0 %777
        %779 = vrot.lane.b32.xlu0 %v697, 6
        %v780 = vpop.permute.xlu0 %779
        %781 = vrot.lane.b32.xlu0 %v696, 6
        %v782 = vpop.permute.xlu0 %781
        %783 = vrot.lane.b32.xlu0 %v695, 6
        %v784 = vpop.permute.xlu0 %783
        %785 = vrot.lane.b32.xlu0 %v694, 6
        %v786 = vpop.permute.xlu0 %785
        %787 = vrot.lane.b32.xlu0 %v693, 6
        %v788 = vpop.permute.xlu0 %787
        %789 = vrot.lane.b32.xlu0 %v692, 6
        %v790 = vpop.permute.xlu0 %789
        %791 = vrot.lane.b32.xlu0 %v691, 6
        %v792 = vpop.permute.xlu0 %791
        %793 = vrot.lane.b32.xlu0 %v690, 6
        %v794 = vpop.permute.xlu0 %793
        %795 = vrot.lane.b32.xlu0 %v689, 6
        %v796 = vpop.permute.xlu0 %795
        %797 = vrot.lane.b32.xlu0 %v688, 6
        %v798 = vpop.permute.xlu0 %797
        %799 = vrot.lane.b32.xlu0 %v687, 6
        %v800 = vpop.permute.xlu0 %799
        %801 = vrot.lane.b32.xlu0 %v686, 6
        %v802 = vpop.permute.xlu0 %801
        %803 = vrot.lane.b32.xlu0 %v685, 6
        %v804 = vpop.permute.xlu0 %803
        %805 = vrot.lane.b32.xlu0 %v684, 6
        %v806 = vpop.permute.xlu0 %805
        %807 = vrot.lane.b32.xlu0 %v683, 6
        %v808 = vpop.permute.xlu0 %807
        %809 = vrot.lane.b32.xlu0 %v714, 6
        %v810 = vpop.permute.xlu0 %809
        %vm843 = vcmask 72752
        %844 = vst.msk [vmem:[#allocation2] sm:$0xff] %vm843, %v748
        %845 = vst.msk [vmem:[#allocation2 + $0x8] sm:$0xff] %vm843, %v750
        %846 = vst.msk [vmem:[#allocation2 + $0x10] sm:$0xff] %vm843, %v752
        %847 = vst.msk [vmem:[#allocation2 + $0x18] sm:$0xff] %vm843, %v754
        %848 = vst.msk [vmem:[#allocation2 + $0x20] sm:$0xff] %vm843, %v756
        %849 = vst.msk [vmem:[#allocation2 + $0x28] sm:$0xff] %vm843, %v758
        %850 = vst.msk [vmem:[#allocation2 + $0x30] sm:$0xff] %vm843, %v760
        %851 = vst.msk [vmem:[#allocation2 + $0x38] sm:$0xff] %vm843, %v762
        %852 = vst.msk [vmem:[#allocation2 + $0x40] sm:$0xff] %vm843, %v764
        %853 = vst.msk [vmem:[#allocation2 + $0x48] sm:$0xff] %vm843, %v766
        %854 = vst.msk [vmem:[#allocation2 + $0x50] sm:$0xff] %vm843, %v768
        %855 = vst.msk [vmem:[#allocation2 + $0x58] sm:$0xff] %vm843, %v770
        %856 = vst.msk [vmem:[#allocation2 + $0x60] sm:$0xff] %vm843, %v772
        %857 = vst.msk [vmem:[#allocation2 + $0x68] sm:$0xff] %vm843, %v774
        %858 = vst.msk [vmem:[#allocation2 + $0x70] sm:$0xff] %vm843, %v776
        %859 = vst.msk [vmem:[#allocation2 + $0x78] sm:$0xff] %vm843, %v778
        %860 = vst.msk [vmem:[#allocation2 + $0x80] sm:$0xff] %vm843, %v780
        %861 = vst.msk [vmem:[#allocation2 + $0x88] sm:$0xff] %vm843, %v782
        %862 = vst.msk [vmem:[#allocation2 + $0x90] sm:$0xff] %vm843, %v784
        %863 = vst.msk [vmem:[#allocation2 + $0x98] sm:$0xff] %vm843, %v786
        %864 = vst.msk [vmem:[#allocation2 + $0xa0] sm:$0xff] %vm843, %v788
        %865 = vst.msk [vmem:[#allocation2 + $0xa8] sm:$0xff] %vm843, %v790
        %866 = vst.msk [vmem:[#allocation2 + $0xb0] sm:$0xff] %vm843, %v792
        %867 = vst.msk [vmem:[#allocation2 + $0xb8] sm:$0xff] %vm843, %v794
        %868 = vst.msk [vmem:[#allocation2 + $0xc0] sm:$0xff] %vm843, %v796
        %869 = vst.msk [vmem:[#allocation2 + $0xc8] sm:$0xff] %vm843, %v798
        %870 = vst.msk [vmem:[#allocation2 + $0xd0] sm:$0xff] %vm843, %v800
        %871 = vst.msk [vmem:[#allocation2 + $0xd8] sm:$0xff] %vm843, %v802
        %872 = vst.msk [vmem:[#allocation2 + $0xe0] sm:$0xff] %vm843, %v804
        %873 = vst.msk [vmem:[#allocation2 + $0xe8] sm:$0xff] %vm843, %v806
        %874 = vst.msk [vmem:[#allocation2 + $0xf0] sm:$0xff] %vm843, %v808
        %875 = vst.msk [vmem:[#allocation2 + $0xf8] sm:$0xff] %vm843, %v810
        %908 = vrot.lane.b32.xlu0 %v359, 9
        %v909 = vpop.permute.xlu0 %908
        %910 = vrot.lane.b32.xlu0 %v360, 9
        %v911 = vpop.permute.xlu0 %910
        %912 = vrot.lane.b32.xlu0 %v361, 9
        %v913 = vpop.permute.xlu0 %912
        %914 = vrot.lane.b32.xlu0 %v362, 9
        %v915 = vpop.permute.xlu0 %914
        %916 = vrot.lane.b32.xlu0 %v363, 9
        %v917 = vpop.permute.xlu0 %916
        %918 = vrot.lane.b32.xlu0 %v364, 9
        %v919 = vpop.permute.xlu0 %918
        %920 = vrot.lane.b32.xlu0 %v365, 9
        %v921 = vpop.permute.xlu0 %920
        %922 = vrot.lane.b32.xlu0 %v366, 9
        %v923 = vpop.permute.xlu0 %922
        %924 = vrot.lane.b32.xlu0 %v367, 9
        %v925 = vpop.permute.xlu0 %924
        %926 = vrot.lane.b32.xlu0 %v368, 9
        %v927 = vpop.permute.xlu0 %926
        %928 = vrot.lane.b32.xlu0 %v369, 9
        %v929 = vpop.permute.xlu0 %928
        %930 = vrot.lane.b32.xlu0 %v370, 9
        %v931 = vpop.permute.xlu0 %930
        %932 = vrot.lane.b32.xlu0 %v371, 9
        %v933 = vpop.permute.xlu0 %932
        %934 = vrot.lane.b32.xlu0 %v372, 9
        %v935 = vpop.permute.xlu0 %934
        %936 = vrot.lane.b32.xlu0 %v373, 9
        %v937 = vpop.permute.xlu0 %936
        %938 = vrot.lane.b32.xlu0 %v374, 9
        %v939 = vpop.permute.xlu0 %938
        %940 = vrot.lane.b32.xlu0 %v375, 9
        %v941 = vpop.permute.xlu0 %940
        %942 = vrot.lane.b32.xlu0 %v376, 9
        %v943 = vpop.permute.xlu0 %942
        %944 = vrot.lane.b32.xlu0 %v377, 9
        %v945 = vpop.permute.xlu0 %944
        %946 = vrot.lane.b32.xlu0 %v378, 9
        %v947 = vpop.permute.xlu0 %946
        %948 = vrot.lane.b32.xlu0 %v379, 9
        %v949 = vpop.permute.xlu0 %948
        %950 = vrot.lane.b32.xlu0 %v380, 9
        %v951 = vpop.permute.xlu0 %950
        %952 = vrot.lane.b32.xlu0 %v381, 9
        %v953 = vpop.permute.xlu0 %952
        %954 = vrot.lane.b32.xlu0 %v382, 9
        %v955 = vpop.permute.xlu0 %954
        %956 = vrot.lane.b32.xlu0 %v383, 9
        %v957 = vpop.permute.xlu0 %956
        %958 = vrot.lane.b32.xlu0 %v384, 9
        %v959 = vpop.permute.xlu0 %958
        %960 = vrot.lane.b32.xlu0 %v385, 9
        %v961 = vpop.permute.xlu0 %960
        %962 = vrot.lane.b32.xlu0 %v386, 9
        %v963 = vpop.permute.xlu0 %962
        %964 = vrot.lane.b32.xlu0 %v387, 9
        %v965 = vpop.permute.xlu0 %964
        %966 = vrot.lane.b32.xlu0 %v388, 9
        %v967 = vpop.permute.xlu0 %966
        %968 = vrot.lane.b32.xlu0 %v357, 9
        %v969 = vpop.permute.xlu0 %968
        %970 = vrot.lane.b32.xlu0 %v358, 9
        %v971 = vpop.permute.xlu0 %970
        %vm1004 = vcmask 97352
        %1005 = vst.msk [vmem:[#allocation2] sm:$0xff] %vm1004, %v909
        %1006 = vst.msk [vmem:[#allocation2 + $0x8] sm:$0xff] %vm1004, %v911
        %1007 = vst.msk [vmem:[#allocation2 + $0x10] sm:$0xff] %vm1004, %v913
        %1008 = vst.msk [vmem:[#allocation2 + $0x18] sm:$0xff] %vm1004, %v915
        %1009 = vst.msk [vmem:[#allocation2 + $0x20] sm:$0xff] %vm1004, %v917
        %1010 = vst.msk [vmem:[#allocation2 + $0x28] sm:$0xff] %vm1004, %v919
        %1011 = vst.msk [vmem:[#allocation2 + $0x30] sm:$0xff] %vm1004, %v921
        %1012 = vst.msk [vmem:[#allocation2 + $0x38] sm:$0xff] %vm1004, %v923
        %1013 = vst.msk [vmem:[#allocation2 + $0x40] sm:$0xff] %vm1004, %v925
        %1014 = vst.msk [vmem:[#allocation2 + $0x48] sm:$0xff] %vm1004, %v927
        %1015 = vst.msk [vmem:[#allocation2 + $0x50] sm:$0xff] %vm1004, %v929
        %1016 = vst.msk [vmem:[#allocation2 + $0x58] sm:$0xff] %vm1004, %v931
        %1017 = vst.msk [vmem:[#allocation2 + $0x60] sm:$0xff] %vm1004, %v933
        %1018 = vst.msk [vmem:[#allocation2 + $0x68] sm:$0xff] %vm1004, %v935
        %1019 = vst.msk [vmem:[#allocation2 + $0x70] sm:$0xff] %vm1004, %v937
        %1020 = vst.msk [vmem:[#allocation2 + $0x78] sm:$0xff] %vm1004, %v939
        %1021 = vst.msk [vmem:[#allocation2 + $0x80] sm:$0xff] %vm1004, %v941
        %1022 = vst.msk [vmem:[#allocation2 + $0x88] sm:$0xff] %vm1004, %v943
        %1023 = vst.msk [vmem:[#allocation2 + $0x90] sm:$0xff] %vm1004, %v945
        %1024 = vst.msk [vmem:[#allocation2 + $0x98] sm:$0xff] %vm1004, %v947
        %1025 = vst.msk [vmem:[#allocation2 + $0xa0] sm:$0xff] %vm1004, %v949
        %1026 = vst.msk [vmem:[#allocation2 + $0xa8] sm:$0xff] %vm1004, %v951
        %1027 = vst.msk [vmem:[#allocation2 + $0xb0] sm:$0xff] %vm1004, %v953
        %1028 = vst.msk [vmem:[#allocation2 + $0xb8] sm:$0xff] %vm1004, %v955
        %1029 = vst.msk [vmem:[#allocation2 + $0xc0] sm:$0xff] %vm1004, %v957
        %1030 = vst.msk [vmem:[#allocation2 + $0xc8] sm:$0xff] %vm1004, %v959
        %1031 = vst.msk [vmem:[#allocation2 + $0xd0] sm:$0xff] %vm1004, %v961
        %1032 = vst.msk [vmem:[#allocation2 + $0xd8] sm:$0xff] %vm1004, %v963
        %1033 = vst.msk [vmem:[#allocation2 + $0xe0] sm:$0xff] %vm1004, %v965
        %1034 = vst.msk [vmem:[#allocation2 + $0xe8] sm:$0xff] %vm1004, %v967
        %1035 = vst.msk [vmem:[#allocation2 + $0xf0] sm:$0xff] %vm1004, %v969
        %1036 = vst.msk [vmem:[#allocation2 + $0xf8] sm:$0xff] %vm1004, %v971
        %1037 = vrot.lane.b32.xlu0 %v485, 12
        %v1038 = vpop.permute.xlu0 %1037
        %1039 = vrot.lane.b32.xlu0 %v484, 12
        %v1040 = vpop.permute.xlu0 %1039
        %1041 = vrot.lane.b32.xlu0 %v483, 12
        %v1042 = vpop.permute.xlu0 %1041
        %1043 = vrot.lane.b32.xlu0 %v482, 12
        %v1044 = vpop.permute.xlu0 %1043
        %1045 = vrot.lane.b32.xlu0 %v481, 12
        %v1046 = vpop.permute.xlu0 %1045
        %1047 = vrot.lane.b32.xlu0 %v480, 12
        %v1048 = vpop.permute.xlu0 %1047
        %1049 = vrot.lane.b32.xlu0 %v479, 12
        %v1050 = vpop.permute.xlu0 %1049
        %1051 = vrot.lane.b32.xlu0 %v478, 12
        %v1052 = vpop.permute.xlu0 %1051
        %1053 = vrot.lane.b32.xlu0 %v477, 12
        %v1054 = vpop.permute.xlu0 %1053
        %1055 = vrot.lane.b32.xlu0 %v476, 12
        %v1056 = vpop.permute.xlu0 %1055
        %1057 = vrot.lane.b32.xlu0 %v475, 12
        %v1058 = vpop.permute.xlu0 %1057
        %1059 = vrot.lane.b32.xlu0 %v474, 12
        %v1060 = vpop.permute.xlu0 %1059
        %1061 = vrot.lane.b32.xlu0 %v473, 12
        %v1062 = vpop.permute.xlu0 %1061
        %1063 = vrot.lane.b32.xlu0 %v472, 12
        %v1064 = vpop.permute.xlu0 %1063
        %1065 = vrot.lane.b32.xlu0 %v471, 12
        %v1066 = vpop.permute.xlu0 %1065
        %1067 = vrot.lane.b32.xlu0 %v470, 12
        %v1068 = vpop.permute.xlu0 %1067
        %1069 = vrot.lane.b32.xlu0 %v469, 12
        %v1070 = vpop.permute.xlu0 %1069
        %1071 = vrot.lane.b32.xlu0 %v468, 12
        %v1072 = vpop.permute.xlu0 %1071
        %1073 = vrot.lane.b32.xlu0 %v467, 12
        %v1074 = vpop.permute.xlu0 %1073
        %1075 = vrot.lane.b32.xlu0 %v466, 12
        %v1076 = vpop.permute.xlu0 %1075
        %1077 = vrot.lane.b32.xlu0 %v465, 12
        %v1078 = vpop.permute.xlu0 %1077
        %1079 = vrot.lane.b32.xlu0 %v464, 12
        %v1080 = vpop.permute.xlu0 %1079
        %1081 = vrot.lane.b32.xlu0 %v463, 12
        %v1082 = vpop.permute.xlu0 %1081
        %1083 = vrot.lane.b32.xlu0 %v462, 12
        %v1084 = vpop.permute.xlu0 %1083
        %1085 = vrot.lane.b32.xlu0 %v461, 12
        %v1086 = vpop.permute.xlu0 %1085
        %1087 = vrot.lane.b32.xlu0 %v460, 12
        %v1088 = vpop.permute.xlu0 %1087
        %1089 = vrot.lane.b32.xlu0 %v459, 12
        %v1090 = vpop.permute.xlu0 %1089
        %1091 = vrot.lane.b32.xlu0 %v458, 12
        %v1092 = vpop.permute.xlu0 %1091
        %1093 = vrot.lane.b32.xlu0 %v457, 12
        %v1094 = vpop.permute.xlu0 %1093
        %1095 = vrot.lane.b32.xlu0 %v488, 12
        %v1096 = vpop.permute.xlu0 %1095
        %1097 = vrot.lane.b32.xlu0 %v487, 12
        %v1098 = vpop.permute.xlu0 %1097
        %1099 = vrot.lane.b32.xlu0 %v486, 12
        %v1100 = vpop.permute.xlu0 %1099
        %vm1133 = vcmask 121952
        %1134 = vst.msk [vmem:[#allocation2] sm:$0xff] %vm1133, %v1038
        %1135 = vst.msk [vmem:[#allocation2 + $0x8] sm:$0xff] %vm1133, %v1040
        %1136 = vst.msk [vmem:[#allocation2 + $0x10] sm:$0xff] %vm1133, %v1042
        %1137 = vst.msk [vmem:[#allocation2 + $0x18] sm:$0xff] %vm1133, %v1044
        %1138 = vst.msk [vmem:[#allocation2 + $0x20] sm:$0xff] %vm1133, %v1046
        %1139 = vst.msk [vmem:[#allocation2 + $0x28] sm:$0xff] %vm1133, %v1048
        %1140 = vst.msk [vmem:[#allocation2 + $0x30] sm:$0xff] %vm1133, %v1050
        %1141 = vst.msk [vmem:[#allocation2 + $0x38] sm:$0xff] %vm1133, %v1052
        %1142 = vst.msk [vmem:[#allocation2 + $0x40] sm:$0xff] %vm1133, %v1054
        %1143 = vst.msk [vmem:[#allocation2 + $0x48] sm:$0xff] %vm1133, %v1056
        %1144 = vst.msk [vmem:[#allocation2 + $0x50] sm:$0xff] %vm1133, %v1058
        %1145 = vst.msk [vmem:[#allocation2 + $0x58] sm:$0xff] %vm1133, %v1060
        %1146 = vst.msk [vmem:[#allocation2 + $0x60] sm:$0xff] %vm1133, %v1062
        %1147 = vst.msk [vmem:[#allocation2 + $0x68] sm:$0xff] %vm1133, %v1064
        %1148 = vst.msk [vmem:[#allocation2 + $0x70] sm:$0xff] %vm1133, %v1066
        %1149 = vst.msk [vmem:[#allocation2 + $0x78] sm:$0xff] %vm1133, %v1068
        %1150 = vst.msk [vmem:[#allocation2 + $0x80] sm:$0xff] %vm1133, %v1070
        %1151 = vst.msk [vmem:[#allocation2 + $0x88] sm:$0xff] %vm1133, %v1072
        %1152 = vst.msk [vmem:[#allocation2 + $0x90] sm:$0xff] %vm1133, %v1074
        %1153 = vst.msk [vmem:[#allocation2 + $0x98] sm:$0xff] %vm1133, %v1076
        %1154 = vst.msk [vmem:[#allocation2 + $0xa0] sm:$0xff] %vm1133, %v1078
        %1155 = vst.msk [vmem:[#allocation2 + $0xa8] sm:$0xff] %vm1133, %v1080
        %1156 = vst.msk [vmem:[#allocation2 + $0xb0] sm:$0xff] %vm1133, %v1082
        %1157 = vst.msk [vmem:[#allocation2 + $0xb8] sm:$0xff] %vm1133, %v1084
        %1158 = vst.msk [vmem:[#allocation2 + $0xc0] sm:$0xff] %vm1133, %v1086
        %1159 = vst.msk [vmem:[#allocation2 + $0xc8] sm:$0xff] %vm1133, %v1088
        %1160 = vst.msk [vmem:[#allocation2 + $0xd0] sm:$0xff] %vm1133, %v1090
        %1161 = vst.msk [vmem:[#allocation2 + $0xd8] sm:$0xff] %vm1133, %v1092
        %1162 = vst.msk [vmem:[#allocation2 + $0xe0] sm:$0xff] %vm1133, %v1094
        %1163 = vst.msk [vmem:[#allocation2 + $0xe8] sm:$0xff] %vm1133, %v1096
        %1164 = vst.msk [vmem:[#allocation2 + $0xf0] sm:$0xff] %vm1133, %v1098
        %1165 = vst.msk [vmem:[#allocation2 + $0xf8] sm:$0xff] %vm1133, %v1100
        %1166 = vrot.lane.b32.xlu0 %v711, 15
        %v1167 = vpop.permute.xlu0 %1166
        %1168 = vrot.lane.b32.xlu0 %v710, 15
        %v1169 = vpop.permute.xlu0 %1168
        %1170 = vrot.lane.b32.xlu0 %v709, 15
        %v1171 = vpop.permute.xlu0 %1170
        %1172 = vrot.lane.b32.xlu0 %v708, 15
        %v1173 = vpop.permute.xlu0 %1172
        %1174 = vrot.lane.b32.xlu0 %v707, 15
        %v1175 = vpop.permute.xlu0 %1174
        %1176 = vrot.lane.b32.xlu0 %v706, 15
        %v1177 = vpop.permute.xlu0 %1176
        %1178 = vrot.lane.b32.xlu0 %v705, 15
        %v1179 = vpop.permute.xlu0 %1178
        %1180 = vrot.lane.b32.xlu0 %v704, 15
        %v1181 = vpop.permute.xlu0 %1180
        %1182 = vrot.lane.b32.xlu0 %v703, 15
        %v1183 = vpop.permute.xlu0 %1182
        %1184 = vrot.lane.b32.xlu0 %v702, 15
        %v1185 = vpop.permute.xlu0 %1184
        %1186 = vrot.lane.b32.xlu0 %v701, 15
        %v1187 = vpop.permute.xlu0 %1186
        %1188 = vrot.lane.b32.xlu0 %v700, 15
        %v1189 = vpop.permute.xlu0 %1188
        %1190 = vrot.lane.b32.xlu0 %v699, 15
        %v1191 = vpop.permute.xlu0 %1190
        %1192 = vrot.lane.b32.xlu0 %v698, 15
        %v1193 = vpop.permute.xlu0 %1192
        %1194 = vrot.lane.b32.xlu0 %v697, 15
        %v1195 = vpop.permute.xlu0 %1194
        %1196 = vrot.lane.b32.xlu0 %v696, 15
        %v1197 = vpop.permute.xlu0 %1196
        %1198 = vrot.lane.b32.xlu0 %v695, 15
        %v1199 = vpop.permute.xlu0 %1198
        %1200 = vrot.lane.b32.xlu0 %v694, 15
        %v1201 = vpop.permute.xlu0 %1200
        %1202 = vrot.lane.b32.xlu0 %v693, 15
        %v1203 = vpop.permute.xlu0 %1202
        %1204 = vrot.lane.b32.xlu0 %v692, 15
        %v1205 = vpop.permute.xlu0 %1204
        %1206 = vrot.lane.b32.xlu0 %v691, 15
        %v1207 = vpop.permute.xlu0 %1206
        %1208 = vrot.lane.b32.xlu0 %v690, 15
        %v1209 = vpop.permute.xlu0 %1208
        %1210 = vrot.lane.b32.xlu0 %v689, 15
        %v1211 = vpop.permute.xlu0 %1210
        %1212 = vrot.lane.b32.xlu0 %v688, 15
        %v1213 = vpop.permute.xlu0 %1212
        %1214 = vrot.lane.b32.xlu0 %v687, 15
        %v1215 = vpop.permute.xlu0 %1214
        %1216 = vrot.lane.b32.xlu0 %v686, 15
        %v1217 = vpop.permute.xlu0 %1216
        %1218 = vrot.lane.b32.xlu0 %v685, 15
        %v1219 = vpop.permute.xlu0 %1218
        %1220 = vrot.lane.b32.xlu0 %v684, 15
        %v1221 = vpop.permute.xlu0 %1220
        %1222 = vrot.lane.b32.xlu0 %v683, 15
        %v1223 = vpop.permute.xlu0 %1222
        %1224 = vrot.lane.b32.xlu0 %v714, 15
        %v1225 = vpop.permute.xlu0 %1224
        %1226 = vrot.lane.b32.xlu0 %v713, 15
        %v1227 = vpop.permute.xlu0 %1226
        %1228 = vrot.lane.b32.xlu0 %v712, 15
        %v1229 = vpop.permute.xlu0 %1228
        %vm1262 = vcmask 146552
        %1263 = vst.msk [vmem:[#allocation2] sm:$0xff] %vm1262, %v1167
        %1264 = vst.msk [vmem:[#allocation2 + $0x8] sm:$0xff] %vm1262, %v1169
        %1265 = vst.msk [vmem:[#allocation2 + $0x10] sm:$0xff] %vm1262, %v1171
        %1266 = vst.msk [vmem:[#allocation2 + $0x18] sm:$0xff] %vm1262, %v1173
        %1267 = vst.msk [vmem:[#allocation2 + $0x20] sm:$0xff] %vm1262, %v1175
        %1268 = vst.msk [vmem:[#allocation2 + $0x28] sm:$0xff] %vm1262, %v1177
        %1269 = vst.msk [vmem:[#allocation2 + $0x30] sm:$0xff] %vm1262, %v1179
        %1270 = vst.msk [vmem:[#allocation2 + $0x38] sm:$0xff] %vm1262, %v1181
        %1271 = vst.msk [vmem:[#allocation2 + $0x40] sm:$0xff] %vm1262, %v1183
        %1272 = vst.msk [vmem:[#allocation2 + $0x48] sm:$0xff] %vm1262, %v1185
        %1273 = vst.msk [vmem:[#allocation2 + $0x50] sm:$0xff] %vm1262, %v1187
        %1274 = vst.msk [vmem:[#allocation2 + $0x58] sm:$0xff] %vm1262, %v1189
        %1275 = vst.msk [vmem:[#allocation2 + $0x60] sm:$0xff] %vm1262, %v1191
        %1276 = vst.msk [vmem:[#allocation2 + $0x68] sm:$0xff] %vm1262, %v1193
        %1277 = vst.msk [vmem:[#allocation2 + $0x70] sm:$0xff] %vm1262, %v1195
        %1278 = vst.msk [vmem:[#allocation2 + $0x78] sm:$0xff] %vm1262, %v1197
        %1279 = vst.msk [vmem:[#allocation2 + $0x80] sm:$0xff] %vm1262, %v1199
        %1280 = vst.msk [vmem:[#allocation2 + $0x88] sm:$0xff] %vm1262, %v1201
        %1281 = vst.msk [vmem:[#allocation2 + $0x90] sm:$0xff] %vm1262, %v1203
        %1282 = vst.msk [vmem:[#allocation2 + $0x98] sm:$0xff] %vm1262, %v1205
        %1283 = vst.msk [vmem:[#allocation2 + $0xa0] sm:$0xff] %vm1262, %v1207
        %1284 = vst.msk [vmem:[#allocation2 + $0xa8] sm:$0xff] %vm1262, %v1209
        %1285 = vst.msk [vmem:[#allocation2 + $0xb0] sm:$0xff] %vm1262, %v1211
        %1286 = vst.msk [vmem:[#allocation2 + $0xb8] sm:$0xff] %vm1262, %v1213
        %1287 = vst.msk [vmem:[#allocation2 + $0xc0] sm:$0xff] %vm1262, %v1215
        %1288 = vst.msk [vmem:[#allocation2 + $0xc8] sm:$0xff] %vm1262, %v1217
        %1289 = vst.msk [vmem:[#allocation2 + $0xd0] sm:$0xff] %vm1262, %v1219
        %1290 = vst.msk [vmem:[#allocation2 + $0xd8] sm:$0xff] %vm1262, %v1221
        %1291 = vst.msk [vmem:[#allocation2 + $0xe0] sm:$0xff] %vm1262, %v1223
        %1292 = vst.msk [vmem:[#allocation2 + $0xe8] sm:$0xff] %vm1262, %v1225
        %1293 = vst.msk [vmem:[#allocation2 + $0xf0] sm:$0xff] %vm1262, %v1227
        %1294 = vst.msk [vmem:[#allocation2 + $0xf8] sm:$0xff] %vm1262, %v1229
        %1295 = vrot.lane.b32.xlu0 %v361, 18
        %v1296 = vpop.permute.xlu0 %1295
        %1297 = vrot.lane.b32.xlu0 %v362, 18
        %v1298 = vpop.permute.xlu0 %1297
        %1299 = vrot.lane.b32.xlu0 %v363, 18
        %v1300 = vpop.permute.xlu0 %1299
        %1301 = vrot.lane.b32.xlu0 %v364, 18
        %v1302 = vpop.permute.xlu0 %1301
        %1303 = vrot.lane.b32.xlu0 %v365, 18
        %v1304 = vpop.permute.xlu0 %1303
        %1305 = vrot.lane.b32.xlu0 %v366, 18
        %v1306 = vpop.permute.xlu0 %1305
        %1307 = vrot.lane.b32.xlu0 %v367, 18
        %v1308 = vpop.permute.xlu0 %1307
        %1309 = vrot.lane.b32.xlu0 %v368, 18
        %v1310 = vpop.permute.xlu0 %1309
        %1311 = vrot.lane.b32.xlu0 %v369, 18
        %v1312 = vpop.permute.xlu0 %1311
        %1313 = vrot.lane.b32.xlu0 %v370, 18
        %v1314 = vpop.permute.xlu0 %1313
        %1315 = vrot.lane.b32.xlu0 %v371, 18
        %v1316 = vpop.permute.xlu0 %1315
        %1317 = vrot.lane.b32.xlu0 %v372, 18
        %v1318 = vpop.permute.xlu0 %1317
        %1319 = vrot.lane.b32.xlu0 %v373, 18
        %v1320 = vpop.permute.xlu0 %1319
        %1321 = vrot.lane.b32.xlu0 %v374, 18
        %v1322 = vpop.permute.xlu0 %1321
        %1323 = vrot.lane.b32.xlu0 %v375, 18
        %v1324 = vpop.permute.xlu0 %1323
        %1325 = vrot.lane.b32.xlu0 %v376, 18
        %v1326 = vpop.permute.xlu0 %1325
        %1327 = vrot.lane.b32.xlu0 %v377, 18
        %v1328 = vpop.permute.xlu0 %1327
        %1329 = vrot.lane.b32.xlu0 %v378, 18
        %v1330 = vpop.permute.xlu0 %1329
        %1331 = vrot.lane.b32.xlu0 %v379, 18
        %v1332 = vpop.permute.xlu0 %1331
        %1333 = vrot.lane.b32.xlu0 %v380, 18
        %v1334 = vpop.permute.xlu0 %1333
        %1335 = vrot.lane.b32.xlu0 %v381, 18
        %v1336 = vpop.permute.xlu0 %1335
        %1337 = vrot.lane.b32.xlu0 %v382, 18
        %v1338 = vpop.permute.xlu0 %1337
        %1339 = vrot.lane.b32.xlu0 %v383, 18
        %v1340 = vpop.permute.xlu0 %1339
        %1341 = vrot.lane.b32.xlu0 %v384, 18
        %v1342 = vpop.permute.xlu0 %1341
        %1343 = vrot.lane.b32.xlu0 %v385, 18
        %v1344 = vpop.permute.xlu0 %1343
        %1345 = vrot.lane.b32.xlu0 %v386, 18
        %v1346 = vpop.permute.xlu0 %1345
        %1347 = vrot.lane.b32.xlu0 %v387, 18
        %v1348 = vpop.permute.xlu0 %1347
        %1349 = vrot.lane.b32.xlu0 %v388, 18
        %v1350 = vpop.permute.xlu0 %1349
        %1351 = vrot.lane.b32.xlu0 %v357, 18
        %v1352 = vpop.permute.xlu0 %1351
        %1353 = vrot.lane.b32.xlu0 %v358, 18
        %v1354 = vpop.permute.xlu0 %1353
        %1355 = vrot.lane.b32.xlu0 %v359, 18
        %v1356 = vpop.permute.xlu0 %1355
        %1357 = vrot.lane.b32.xlu0 %v360, 18
        %v1358 = vpop.permute.xlu0 %1357
        %vm1391 = vcmask 171152
        %1392 = vst.msk [vmem:[#allocation2] sm:$0xff] %vm1391, %v1296
        %1393 = vst.msk [vmem:[#allocation2 + $0x8] sm:$0xff] %vm1391, %v1298
        %1394 = vst.msk [vmem:[#allocation2 + $0x10] sm:$0xff] %vm1391, %v1300
        %1395 = vst.msk [vmem:[#allocation2 + $0x18] sm:$0xff] %vm1391, %v1302
        %1396 = vst.msk [vmem:[#allocation2 + $0x20] sm:$0xff] %vm1391, %v1304
        %1397 = vst.msk [vmem:[#allocation2 + $0x28] sm:$0xff] %vm1391, %v1306
        %1398 = vst.msk [vmem:[#allocation2 + $0x30] sm:$0xff] %vm1391, %v1308
        %1399 = vst.msk [vmem:[#allocation2 + $0x38] sm:$0xff] %vm1391, %v1310
        %1400 = vst.msk [vmem:[#allocation2 + $0x40] sm:$0xff] %vm1391, %v1312
        %1401 = vst.msk [vmem:[#allocation2 + $0x48] sm:$0xff] %vm1391, %v1314
        %1402 = vst.msk [vmem:[#allocation2 + $0x50] sm:$0xff] %vm1391, %v1316
        %1403 = vst.msk [vmem:[#allocation2 + $0x58] sm:$0xff] %vm1391, %v1318
        %1404 = vst.msk [vmem:[#allocation2 + $0x60] sm:$0xff] %vm1391, %v1320
        %1405 = vst.msk [vmem:[#allocation2 + $0x68] sm:$0xff] %vm1391, %v1322
        %1406 = vst.msk [vmem:[#allocation2 + $0x70] sm:$0xff] %vm1391, %v1324
        %1407 = vst.msk [vmem:[#allocation2 + $0x78] sm:$0xff] %vm1391, %v1326
        %1408 = vst.msk [vmem:[#allocation2 + $0x80] sm:$0xff] %vm1391, %v1328
        %1409 = vst.msk [vmem:[#allocation2 + $0x88] sm:$0xff] %vm1391, %v1330
        %1410 = vst.msk [vmem:[#allocation2 + $0x90] sm:$0xff] %vm1391, %v1332
        %1411 = vst.msk [vmem:[#allocation2 + $0x98] sm:$0xff] %vm1391, %v1334
        %1412 = vst.msk [vmem:[#allocation2 + $0xa0] sm:$0xff] %vm1391, %v1336
        %1413 = vst.msk [vmem:[#allocation2 + $0xa8] sm:$0xff] %vm1391, %v1338
        %1414 = vst.msk [vmem:[#allocation2 + $0xb0] sm:$0xff] %vm1391, %v1340
        %1415 = vst.msk [vmem:[#allocation2 + $0xb8] sm:$0xff] %vm1391, %v1342
        %1416 = vst.msk [vmem:[#allocation2 + $0xc0] sm:$0xff] %vm1391, %v1344
        %1417 = vst.msk [vmem:[#allocation2 + $0xc8] sm:$0xff] %vm1391, %v1346
        %1418 = vst.msk [vmem:[#allocation2 + $0xd0] sm:$0xff] %vm1391, %v1348
        %1419 = vst.msk [vmem:[#allocation2 + $0xd8] sm:$0xff] %vm1391, %v1350
        %1420 = vst.msk [vmem:[#allocation2 + $0xe0] sm:$0xff] %vm1391, %v1352
        %1421 = vst.msk [vmem:[#allocation2 + $0xe8] sm:$0xff] %vm1391, %v1354
        %1422 = vst.msk [vmem:[#allocation2 + $0xf0] sm:$0xff] %vm1391, %v1356
        %1423 = vst.msk [vmem:[#allocation2 + $0xf8] sm:$0xff] %vm1391, %v1358
        %1424 = vrot.lane.b32.xlu0 %v483, 21
        %v1425 = vpop.permute.xlu0 %1424
        %1426 = vrot.lane.b32.xlu0 %v482, 21
        %v1427 = vpop.permute.xlu0 %1426
        %1428 = vrot.lane.b32.xlu0 %v481, 21
        %v1429 = vpop.permute.xlu0 %1428
        %1430 = vrot.lane.b32.xlu0 %v480, 21
        %v1431 = vpop.permute.xlu0 %1430
        %1432 = vrot.lane.b32.xlu0 %v479, 21
        %v1433 = vpop.permute.xlu0 %1432
        %1434 = vrot.lane.b32.xlu0 %v478, 21
        %v1435 = vpop.permute.xlu0 %1434
        %1436 = vrot.lane.b32.xlu0 %v477, 21
        %v1437 = vpop.permute.xlu0 %1436
        %1438 = vrot.lane.b32.xlu0 %v476, 21
        %v1439 = vpop.permute.xlu0 %1438
        %1440 = vrot.lane.b32.xlu0 %v475, 21
        %v1441 = vpop.permute.xlu0 %1440
        %1442 = vrot.lane.b32.xlu0 %v474, 21
        %v1443 = vpop.permute.xlu0 %1442
        %1444 = vrot.lane.b32.xlu0 %v473, 21
        %v1445 = vpop.permute.xlu0 %1444
        %1446 = vrot.lane.b32.xlu0 %v472, 21
        %v1447 = vpop.permute.xlu0 %1446
        %1448 = vrot.lane.b32.xlu0 %v471, 21
        %v1449 = vpop.permute.xlu0 %1448
        %1450 = vrot.lane.b32.xlu0 %v470, 21
        %v1451 = vpop.permute.xlu0 %1450
        %1452 = vrot.lane.b32.xlu0 %v469, 21
        %v1453 = vpop.permute.xlu0 %1452
        %1454 = vrot.lane.b32.xlu0 %v468, 21
        %v1455 = vpop.permute.xlu0 %1454
        %1456 = vrot.lane.b32.xlu0 %v467, 21
        %v1457 = vpop.permute.xlu0 %1456
        %1458 = vrot.lane.b32.xlu0 %v466, 21
        %v1459 = vpop.permute.xlu0 %1458
        %1460 = vrot.lane.b32.xlu0 %v465, 21
        %v1461 = vpop.permute.xlu0 %1460
        %1462 = vrot.lane.b32.xlu0 %v464, 21
        %v1463 = vpop.permute.xlu0 %1462
        %1464 = vrot.lane.b32.xlu0 %v463, 21
        %v1465 = vpop.permute.xlu0 %1464
        %1466 = vrot.lane.b32.xlu0 %v462, 21
        %v1467 = vpop.permute.xlu0 %1466
        %1468 = vrot.lane.b32.xlu0 %v461, 21
        %v1469 = vpop.permute.xlu0 %1468
        %1470 = vrot.lane.b32.xlu0 %v460, 21
        %v1471 = vpop.permute.xlu0 %1470
        %1472 = vrot.lane.b32.xlu0 %v459, 21
        %v1473 = vpop.permute.xlu0 %1472
        %1474 = vrot.lane.b32.xlu0 %v458, 21
        %v1475 = vpop.permute.xlu0 %1474
        %1476 = vrot.lane.b32.xlu0 %v457, 21
        %v1477 = vpop.permute.xlu0 %1476
        %1478 = vrot.lane.b32.xlu0 %v488, 21
        %v1479 = vpop.permute.xlu0 %1478
        %1480 = vrot.lane.b32.xlu0 %v487, 21
        %v1481 = vpop.permute.xlu0 %1480
        %1482 = vrot.lane.b32.xlu0 %v486, 21
        %v1483 = vpop.permute.xlu0 %1482
        %1484 = vrot.lane.b32.xlu0 %v485, 21
        %v1485 = vpop.permute.xlu0 %1484
        %1486 = vrot.lane.b32.xlu0 %v484, 21
        %v1487 = vpop.permute.xlu0 %1486
        %vm1520 = vcmask 195752
        %1521 = vst.msk [vmem:[#allocation2] sm:$0xff] %vm1520, %v1425
        %1522 = vst.msk [vmem:[#allocation2 + $0x8] sm:$0xff] %vm1520, %v1427
        %1523 = vst.msk [vmem:[#allocation2 + $0x10] sm:$0xff] %vm1520, %v1429
        %1524 = vst.msk [vmem:[#allocation2 + $0x18] sm:$0xff] %vm1520, %v1431
        %1525 = vst.msk [vmem:[#allocation2 + $0x20] sm:$0xff] %vm1520, %v1433
        %1526 = vst.msk [vmem:[#allocation2 + $0x28] sm:$0xff] %vm1520, %v1435
        %1527 = vst.msk [vmem:[#allocation2 + $0x30] sm:$0xff] %vm1520, %v1437
        %1528 = vst.msk [vmem:[#allocation2 + $0x38] sm:$0xff] %vm1520, %v1439
        %1529 = vst.msk [vmem:[#allocation2 + $0x40] sm:$0xff] %vm1520, %v1441
        %1530 = vst.msk [vmem:[#allocation2 + $0x48] sm:$0xff] %vm1520, %v1443
        %1531 = vst.msk [vmem:[#allocation2 + $0x50] sm:$0xff] %vm1520, %v1445
        %1532 = vst.msk [vmem:[#allocation2 + $0x58] sm:$0xff] %vm1520, %v1447
        %1533 = vst.msk [vmem:[#allocation2 + $0x60] sm:$0xff] %vm1520, %v1449
        %1534 = vst.msk [vmem:[#allocation2 + $0x68] sm:$0xff] %vm1520, %v1451
        %1535 = vst.msk [vmem:[#allocation2 + $0x70] sm:$0xff] %vm1520, %v1453
        %1536 = vst.msk [vmem:[#allocation2 + $0x78] sm:$0xff] %vm1520, %v1455
        %1537 = vst.msk [vmem:[#allocation2 + $0x80] sm:$0xff] %vm1520, %v1457
        %1538 = vst.msk [vmem:[#allocation2 + $0x88] sm:$0xff] %vm1520, %v1459
        %1539 = vst.msk [vmem:[#allocation2 + $0x90] sm:$0xff] %vm1520, %v1461
        %1540 = vst.msk [vmem:[#allocation2 + $0x98] sm:$0xff] %vm1520, %v1463
        %1541 = vst.msk [vmem:[#allocation2 + $0xa0] sm:$0xff] %vm1520, %v1465
        %1542 = vst.msk [vmem:[#allocation2 + $0xa8] sm:$0xff] %vm1520, %v1467
        %1543 = vst.msk [vmem:[#allocation2 + $0xb0] sm:$0xff] %vm1520, %v1469
        %1544 = vst.msk [vmem:[#allocation2 + $0xb8] sm:$0xff] %vm1520, %v1471
        %1545 = vst.msk [vmem:[#allocation2 + $0xc0] sm:$0xff] %vm1520, %v1473
        %1546 = vst.msk [vmem:[#allocation2 + $0xc8] sm:$0xff] %vm1520, %v1475
        %1547 = vst.msk [vmem:[#allocation2 + $0xd0] sm:$0xff] %vm1520, %v1477
        %1548 = vst.msk [vmem:[#allocation2 + $0xd8] sm:$0xff] %vm1520, %v1479
        %1549 = vst.msk [vmem:[#allocation2 + $0xe0] sm:$0xff] %vm1520, %v1481
        %1550 = vst.msk [vmem:[#allocation2 + $0xe8] sm:$0xff] %vm1520, %v1483
        %1551 = vst.msk [vmem:[#allocation2 + $0xf0] sm:$0xff] %vm1520, %v1485
        %1552 = vst.msk [vmem:[#allocation2 + $0xf8] sm:$0xff] %vm1520, %v1487
        %1553 = vrot.lane.b32.xlu0 %v709, 24
        %v1554 = vpop.permute.xlu0 %1553
        %1555 = vrot.lane.b32.xlu0 %v708, 24
        %v1556 = vpop.permute.xlu0 %1555
        %1557 = vrot.lane.b32.xlu0 %v707, 24
        %v1558 = vpop.permute.xlu0 %1557
        %1559 = vrot.lane.b32.xlu0 %v706, 24
        %v1560 = vpop.permute.xlu0 %1559
        %1561 = vrot.lane.b32.xlu0 %v705, 24
        %v1562 = vpop.permute.xlu0 %1561
        %1563 = vrot.lane.b32.xlu0 %v704, 24
        %v1564 = vpop.permute.xlu0 %1563
        %1565 = vrot.lane.b32.xlu0 %v703, 24
        %v1566 = vpop.permute.xlu0 %1565
        %1567 = vrot.lane.b32.xlu0 %v702, 24
        %v1568 = vpop.permute.xlu0 %1567
        %1569 = vrot.lane.b32.xlu0 %v701, 24
        %v1570 = vpop.permute.xlu0 %1569
        %1571 = vrot.lane.b32.xlu0 %v700, 24
        %v1572 = vpop.permute.xlu0 %1571
        %1573 = vrot.lane.b32.xlu0 %v699, 24
        %v1574 = vpop.permute.xlu0 %1573
        %1575 = vrot.lane.b32.xlu0 %v698, 24
        %v1576 = vpop.permute.xlu0 %1575
        %1577 = vrot.lane.b32.xlu0 %v697, 24
        %v1578 = vpop.permute.xlu0 %1577
        %1579 = vrot.lane.b32.xlu0 %v696, 24
        %v1580 = vpop.permute.xlu0 %1579
        %1581 = vrot.lane.b32.xlu0 %v695, 24
        %v1582 = vpop.permute.xlu0 %1581
        %1583 = vrot.lane.b32.xlu0 %v694, 24
        %v1584 = vpop.permute.xlu0 %1583
        %1585 = vrot.lane.b32.xlu0 %v693, 24
        %v1586 = vpop.permute.xlu0 %1585
        %1587 = vrot.lane.b32.xlu0 %v692, 24
        %v1588 = vpop.permute.xlu0 %1587
        %1589 = vrot.lane.b32.xlu0 %v691, 24
        %v1590 = vpop.permute.xlu0 %1589
        %1591 = vrot.lane.b32.xlu0 %v690, 24
        %v1592 = vpop.permute.xlu0 %1591
        %1593 = vrot.lane.b32.xlu0 %v689, 24
        %v1594 = vpop.permute.xlu0 %1593
        %1595 = vrot.lane.b32.xlu0 %v688, 24
        %v1596 = vpop.permute.xlu0 %1595
        %1597 = vrot.lane.b32.xlu0 %v687, 24
        %v1598 = vpop.permute.xlu0 %1597
        %1599 = vrot.lane.b32.xlu0 %v686, 24
        %v1600 = vpop.permute.xlu0 %1599
        %1601 = vrot.lane.b32.xlu0 %v685, 24
        %v1602 = vpop.permute.xlu0 %1601
        %1603 = vrot.lane.b32.xlu0 %v684, 24
        %v1604 = vpop.permute.xlu0 %1603
        %1605 = vrot.lane.b32.xlu0 %v683, 24
        %v1606 = vpop.permute.xlu0 %1605
        %1607 = vrot.lane.b32.xlu0 %v714, 24
        %v1608 = vpop.permute.xlu0 %1607
        %1609 = vrot.lane.b32.xlu0 %v713, 24
        %v1610 = vpop.permute.xlu0 %1609
        %1611 = vrot.lane.b32.xlu0 %v712, 24
        %v1612 = vpop.permute.xlu0 %1611
        %1613 = vrot.lane.b32.xlu0 %v711, 24
        %v1614 = vpop.permute.xlu0 %1613
        %1615 = vrot.lane.b32.xlu0 %v710, 24
        %v1616 = vpop.permute.xlu0 %1615
        %vm1649 = vcmask 220352
        %1650 = vst.msk [vmem:[#allocation2] sm:$0xff] %vm1649, %v1554
        %1651 = vst.msk [vmem:[#allocation2 + $0x8] sm:$0xff] %vm1649, %v1556
        %1652 = vst.msk [vmem:[#allocation2 + $0x10] sm:$0xff] %vm1649, %v1558
        %1653 = vst.msk [vmem:[#allocation2 + $0x18] sm:$0xff] %vm1649, %v1560
        %1654 = vst.msk [vmem:[#allocation2 + $0x20] sm:$0xff] %vm1649, %v1562
        %1655 = vst.msk [vmem:[#allocation2 + $0x28] sm:$0xff] %vm1649, %v1564
        %1656 = vst.msk [vmem:[#allocation2 + $0x30] sm:$0xff] %vm1649, %v1566
        %1657 = vst.msk [vmem:[#allocation2 + $0x38] sm:$0xff] %vm1649, %v1568
        %1658 = vst.msk [vmem:[#allocation2 + $0x40] sm:$0xff] %vm1649, %v1570
        %1659 = vst.msk [vmem:[#allocation2 + $0x48] sm:$0xff] %vm1649, %v1572
        %1660 = vst.msk [vmem:[#allocation2 + $0x50] sm:$0xff] %vm1649, %v1574
        %1661 = vst.msk [vmem:[#allocation2 + $0x58] sm:$0xff] %vm1649, %v1576
        %1662 = vst.msk [vmem:[#allocation2 + $0x60] sm:$0xff] %vm1649, %v1578
        %1663 = vst.msk [vmem:[#allocation2 + $0x68] sm:$0xff] %vm1649, %v1580
        %1664 = vst.msk [vmem:[#allocation2 + $0x70] sm:$0xff] %vm1649, %v1582
        %1665 = vst.msk [vmem:[#allocation2 + $0x78] sm:$0xff] %vm1649, %v1584
        %1666 = vst.msk [vmem:[#allocation2 + $0x80] sm:$0xff] %vm1649, %v1586
        %1667 = vst.msk [vmem:[#allocation2 + $0x88] sm:$0xff] %vm1649, %v1588
        %1668 = vst.msk [vmem:[#allocation2 + $0x90] sm:$0xff] %vm1649, %v1590
        %1669 = vst.msk [vmem:[#allocation2 + $0x98] sm:$0xff] %vm1649, %v1592
        %1670 = vst.msk [vmem:[#allocation2 + $0xa0] sm:$0xff] %vm1649, %v1594
        %1671 = vst.msk [vmem:[#allocation2 + $0xa8] sm:$0xff] %vm1649, %v1596
        %1672 = vst.msk [vmem:[#allocation2 + $0xb0] sm:$0xff] %vm1649, %v1598
        %1673 = vst.msk [vmem:[#allocation2 + $0xb8] sm:$0xff] %vm1649, %v1600
        %1674 = vst.msk [vmem:[#allocation2 + $0xc0] sm:$0xff] %vm1649, %v1602
        %1675 = vst.msk [vmem:[#allocation2 + $0xc8] sm:$0xff] %vm1649, %v1604
        %1676 = vst.msk [vmem:[#allocation2 + $0xd0] sm:$0xff] %vm1649, %v1606
        %1677 = vst.msk [vmem:[#allocation2 + $0xd8] sm:$0xff] %vm1649, %v1608
        %1678 = vst.msk [vmem:[#allocation2 + $0xe0] sm:$0xff] %vm1649, %v1610
        %1679 = vst.msk [vmem:[#allocation2 + $0xe8] sm:$0xff] %vm1649, %v1612
        %1680 = vst.msk [vmem:[#allocation2 + $0xf0] sm:$0xff] %vm1649, %v1614
        %1681 = vst.msk [vmem:[#allocation2 + $0xf8] sm:$0xff] %vm1649, %v1616
        %v1682 = vld [vmem:[#allocation2] sm:$0xff]
        %v1683 = vld [vmem:[#allocation2 + $0x8] sm:$0xff]
        %v1684 = vld [vmem:[#allocation2 + $0x10] sm:$0xff]
        %v1685 = vld [vmem:[#allocation2 + $0x18] sm:$0xff]
        %v1686 = vld [vmem:[#allocation2 + $0x20] sm:$0xff]
        %v1687 = vld [vmem:[#allocation2 + $0x28] sm:$0xff]
        %v1688 = vld [vmem:[#allocation2 + $0x30] sm:$0xff]
        %v1689 = vld [vmem:[#allocation2 + $0x38] sm:$0xff]
        %v1690 = vld [vmem:[#allocation2 + $0x40] sm:$0xff]
        %v1691 = vld [vmem:[#allocation2 + $0x48] sm:$0xff]
        %v1692 = vld [vmem:[#allocation2 + $0x50] sm:$0xff]
        %v1693 = vld [vmem:[#allocation2 + $0x58] sm:$0xff]
        %v1694 = vld [vmem:[#allocation2 + $0x60] sm:$0xff]
        %v1695 = vld [vmem:[#allocation2 + $0x68] sm:$0xff]
        %v1696 = vld [vmem:[#allocation2 + $0x70] sm:$0xff]
        %v1697 = vld [vmem:[#allocation2 + $0x78] sm:$0xff]
        %v1698 = vld [vmem:[#allocation2 + $0x80] sm:$0xff]
        %v1699 = vld [vmem:[#allocation2 + $0x88] sm:$0xff]
        %v1700 = vld [vmem:[#allocation2 + $0x90] sm:$0xff]
        %v1701 = vld [vmem:[#allocation2 + $0x98] sm:$0xff]
        %v1702 = vld [vmem:[#allocation2 + $0xa0] sm:$0xff]
        %v1703 = vld [vmem:[#allocation2 + $0xa8] sm:$0xff]
        %v1704 = vld [vmem:[#allocation2 + $0xb0] sm:$0xff]
        %v1705 = vld [vmem:[#allocation2 + $0xb8] sm:$0xff]
        %v1706 = vld [vmem:[#allocation2 + $0xc0] sm:$0xff]
        %v1707 = vld [vmem:[#allocation2 + $0xc8] sm:$0xff]
        %v1708 = vld [vmem:[#allocation2 + $0xd0] sm:$0xff]
        %v1709 = vld [vmem:[#allocation2 + $0xd8] sm:$0xff]
        %v1710 = vld [vmem:[#allocation2 + $0xe0] sm:$0xff]
        %v1711 = vld [vmem:[#allocation2 + $0xe8] sm:$0xff]
        %v1712 = vld [vmem:[#allocation2 + $0xf0] sm:$0xff]
        %v1713 = vld [vmem:[#allocation2 + $0xf8] sm:$0xff]
        %v1714 = vld [vmem:[%s1] sm:$0xff]
        %v1715 = vld [vmem:[%s1 + $0x8] sm:$0xff]
        %v1716 = vld [vmem:[%s1 + $0x10] sm:$0xff]
        %v1717 = vld [vmem:[%s1 + $0x18] sm:$0x7]
        %v1718 = vld [vmem:[%s2] sm:$0x1]
        %v1720 = vlaneseq
        %v1721 = vshrl.u32 %v1720, 7
        %v1722 = vsub.s32 0, %v1721
        %v1723 = vrot.slane %v1718, %v1722
        %vm1725 = vcmask 220160
        %v1727 = vsel %vm1725, %v1682, 0
        %v1730 = vsel %vm1725, %v1683, 0
        %v1733 = vsel %vm1725, %v1684, 0
        %v1736 = vsel %vm1725, %v1685, 0
        %v1739 = vsel %vm1725, %v1686, 0
        %v1742 = vsel %vm1725, %v1687, 0
        %v1745 = vsel %vm1725, %v1688, 0
        %v1748 = vsel %vm1725, %v1689, 0
        %v1751 = vsel %vm1725, %v1690, 0
        %v1754 = vsel %vm1725, %v1691, 0
        %v1757 = vsel %vm1725, %v1692, 0
        %v1760 = vsel %vm1725, %v1693, 0
        %v1763 = vsel %vm1725, %v1694, 0
        %v1766 = vsel %vm1725, %v1695, 0
        %v1769 = vsel %vm1725, %v1696, 0
        %v1772 = vsel %vm1725, %v1697, 0
        %v1775 = vsel %vm1725, %v1698, 0
        %v1778 = vsel %vm1725, %v1699, 0
        %v1781 = vsel %vm1725, %v1700, 0
        %v1784 = vsel %vm1725, %v1701, 0
        %v1787 = vsel %vm1725, %v1702, 0
        %v1790 = vsel %vm1725, %v1703, 0
        %v1793 = vsel %vm1725, %v1704, 0
        %v1796 = vsel %vm1725, %v1705, 0
        %v1799 = vsel %vm1725, %v1706, 0
        %v1802 = vsel %vm1725, %v1707, 0
        %v1805 = vsel %vm1725, %v1708, 0
        %v1808 = vsel %vm1725, %v1709, 0
        %v1811 = vsel %vm1725, %v1710, 0
        %v1814 = vsel %vm1725, %v1711, 0
        %v1817 = vsel %vm1725, %v1712, 0
        %v1820 = vsel %vm1725, %v1713, 0
        %vm1822 = vcmask 1042432
        %v1824 = vsel %vm1822, %v1717, 0
        %1826 = vmatprep.subr.mxu0 0.0
        %1827 = vmatpush1.msra.mxu0 %v1714
        %1828 = vmatprep.subr.mxu0 0.0
        %1829 = vmatpush1.msra.mxu0 %v1715
        %1830 = vmatprep.subr.mxu0 0.0
        %1831 = vmatpush1.msra.mxu0 %v1716
        %1832 = vmatprep.subr.mxu0 0.0
        %1833 = vmatpush1.msra.mxu0 %v1824
        %1834 = vmatprep.subr.mxu0 0.0
        %1835 = vmatpush1.msra.mxu0 0.0
        %1836 = vmatprep.subr.mxu0 0.0
        %1837 = vmatpush1.msra.mxu0 0.0
        %1838 = vmatprep.subr.mxu0 0.0
        %1839 = vmatpush1.msra.mxu0 0.0
        %1840 = vmatprep.subr.mxu0 0.0
        %1841 = vmatpush1.msra.mxu0 0.0
        %1842 = vmatprep.subr.mxu0 0.0
        %1843 = vmatpush1.msra.mxu0 0.0
        %1844 = vmatprep.subr.mxu0 0.0
        %1845 = vmatpush1.msra.mxu0 0.0
        %1846 = vmatprep.subr.mxu0 0.0
        %1847 = vmatpush1.msra.mxu0 0.0
        %1848 = vmatprep.subr.mxu0 0.0
        %1849 = vmatpush1.msra.mxu0 0.0
        %1850 = vmatprep.subr.mxu0 0.0
        %1851 = vmatpush1.msra.mxu0 0.0
        %1852 = vmatprep.subr.mxu0 0.0
        %1853 = vmatpush1.msra.mxu0 0.0
        %1854 = vmatprep.subr.mxu0 0.0
        %1855 = vmatpush1.msra.mxu0 0.0
        %1856 = vmatprep.subr.mxu0 0.0
        %1857 = vmatpush1.msra.mxu0 0.0
        %1858 = vmatprep.subr.mxu0 0.0
        %1859 = vmatpush1.msra.mxu0 0.0
        %1860 = vmatprep.subr.mxu0 0.0
        %1861 = vmatpush1.msra.mxu0 0.0
        %1862 = vmatprep.subr.mxu0 0.0
        %1863 = vmatpush1.msra.mxu0 0.0
        %1864 = vmatprep.subr.mxu0 0.0
        %1865 = vmatpush1.msra.mxu0 0.0
        %1866 = vmatprep.subr.mxu0 0.0
        %1867 = vmatpush1.msra.mxu0 0.0
        %1868 = vmatprep.subr.mxu0 0.0
        %1869 = vmatpush1.msra.mxu0 0.0
        %1870 = vmatprep.subr.mxu0 0.0
        %1871 = vmatpush1.msra.mxu0 0.0
        %1872 = vmatprep.subr.mxu0 0.0
        %1873 = vmatpush1.msra.mxu0 0.0
        %1874 = vmatprep.subr.mxu0 0.0
        %1875 = vmatpush1.msra.mxu0 0.0
        %1876 = vmatprep.subr.mxu0 0.0
        %1877 = vmatpush1.msra.mxu0 0.0
        %1878 = vmatprep.subr.mxu0 0.0
        %1879 = vmatpush1.msra.mxu0 0.0
        %1880 = vmatprep.subr.mxu0 0.0
        %1881 = vmatpush1.msra.mxu0 0.0
        %1882 = vmatprep.subr.mxu0 0.0
        %1883 = vmatpush1.msra.mxu0 0.0
        %1884 = vmatprep.subr.mxu0 0.0
        %1885 = vmatpush1.msra.mxu0 0.0
        %1886 = vmatprep.subr.mxu0 0.0
        %1887 = vmatpush1.msra.mxu0 0.0
        %1888 = vmatprep.subr.mxu0 0.0
        %1889 = vmatpush1.msra.mxu0 0.0
        %1890 = vmatprep.mubr.f32.mxu0 0.0
        %1891 = vmatmul.mubr.f32.gmra.mrb[0].mxu0 %v1727
        %v1892 = vpop.f32.mrb[0].mxu0
        %v1893 = vadd.f32 %v1723, %v1892
        %v1894 = vpop.f32.mrb[0].mxu0
        %1895 = vmatprep.mubr.f32.mxu0 0.0
        %1896 = vmatmul.mubr.f32.gmra.mrb[0].mxu0 %v1730
        %v1897 = vpop.f32.mrb[0].mxu0
        %v1898 = vadd.f32 %v1723, %v1897
        %v1899 = vpop.f32.mrb[0].mxu0
        %1900 = vmatprep.mubr.f32.mxu0 0.0
        %1901 = vmatmul.mubr.f32.gmra.mrb[0].mxu0 %v1733
        %v1902 = vpop.f32.mrb[0].mxu0
        %v1903 = vadd.f32 %v1723, %v1902
        %v1904 = vpop.f32.mrb[0].mxu0
        %1905 = vmatprep.mubr.f32.mxu0 0.0
        %1906 = vmatmul.mubr.f32.gmra.mrb[0].mxu0 %v1736
        %v1907 = vpop.f32.mrb[0].mxu0
        %v1908 = vadd.f32 %v1723, %v1907
        %v1909 = vpop.f32.mrb[0].mxu0
        %1910 = vmatprep.mubr.f32.mxu0 0.0
        %1911 = vmatmul.mubr.f32.gmra.mrb[0].mxu0 %v1739
        %v1912 = vpop.f32.mrb[0].mxu0
        %v1913 = vadd.f32 %v1723, %v1912
        %v1914 = vpop.f32.mrb[0].mxu0
        %1915 = vmatprep.mubr.f32.mxu0 0.0
        %1916 = vmatmul.mubr.f32.gmra.mrb[0].mxu0 %v1742
        %v1917 = vpop.f32.mrb[0].mxu0
        %v1918 = vadd.f32 %v1723, %v1917
        %v1919 = vpop.f32.mrb[0].mxu0
        %1920 = vmatprep.mubr.f32.mxu0 0.0
        %1921 = vmatmul.mubr.f32.gmra.mrb[0].mxu0 %v1745
        %v1922 = vpop.f32.mrb[0].mxu0
        %v1923 = vadd.f32 %v1723, %v1922
        %v1924 = vpop.f32.mrb[0].mxu0
        %1925 = vmatprep.mubr.f32.mxu0 0.0
        %1926 = vmatmul.mubr.f32.gmra.mrb[0].mxu0 %v1748
        %v1927 = vpop.f32.mrb[0].mxu0
        %v1928 = vadd.f32 %v1723, %v1927
        %v1929 = vpop.f32.mrb[0].mxu0
        %1930 = vmatprep.mubr.f32.mxu0 0.0
        %1931 = vmatmul.mubr.f32.gmra.mrb[0].mxu0 %v1751
        %v1932 = vpop.f32.mrb[0].mxu0
        %v1933 = vadd.f32 %v1723, %v1932
        %v1934 = vpop.f32.mrb[0].mxu0
        %1935 = vmatprep.mubr.f32.mxu0 0.0
        %1936 = vmatmul.mubr.f32.gmra.mrb[0].mxu0 %v1754
        %v1937 = vpop.f32.mrb[0].mxu0
        %v1938 = vadd.f32 %v1723, %v1937
        %v1939 = vpop.f32.mrb[0].mxu0
        %1940 = vmatprep.mubr.f32.mxu0 0.0
        %1941 = vmatmul.mubr.f32.gmra.mrb[0].mxu0 %v1757
        %v1942 = vpop.f32.mrb[0].mxu0
        %v1943 = vadd.f32 %v1723, %v1942
        %v1944 = vpop.f32.mrb[0].mxu0
        %1945 = vmatprep.mubr.f32.mxu0 0.0
        %1946 = vmatmul.mubr.f32.gmra.mrb[0].mxu0 %v1760
        %v1947 = vpop.f32.mrb[0].mxu0
        %v1948 = vadd.f32 %v1723, %v1947
        %v1949 = vpop.f32.mrb[0].mxu0
        %1950 = vmatprep.mubr.f32.mxu0 0.0
        %1951 = vmatmul.mubr.f32.gmra.mrb[0].mxu0 %v1763
        %v1952 = vpop.f32.mrb[0].mxu0
        %v1953 = vadd.f32 %v1723, %v1952
        %v1954 = vpop.f32.mrb[0].mxu0
        %1955 = vmatprep.mubr.f32.mxu0 0.0
        %1956 = vmatmul.mubr.f32.gmra.mrb[0].mxu0 %v1766
        %v1957 = vpop.f32.mrb[0].mxu0
        %v1958 = vadd.f32 %v1723, %v1957
        %v1959 = vpop.f32.mrb[0].mxu0
        %1960 = vmatprep.mubr.f32.mxu0 0.0
        %1961 = vmatmul.mubr.f32.gmra.mrb[0].mxu0 %v1769
        %v1962 = vpop.f32.mrb[0].mxu0
        %v1963 = vadd.f32 %v1723, %v1962
        %v1964 = vpop.f32.mrb[0].mxu0
        %1965 = vmatprep.mubr.f32.mxu0 0.0
        %1966 = vmatmul.mubr.f32.gmra.mrb[0].mxu0 %v1772
        %v1967 = vpop.f32.mrb[0].mxu0
        %v1968 = vadd.f32 %v1723, %v1967
        %v1969 = vpop.f32.mrb[0].mxu0
        %1970 = vmatprep.mubr.f32.mxu0 0.0
        %1971 = vmatmul.mubr.f32.gmra.mrb[0].mxu0 %v1775
        %v1972 = vpop.f32.mrb[0].mxu0
        %v1973 = vadd.f32 %v1723, %v1972
        %v1974 = vpop.f32.mrb[0].mxu0
        %1975 = vmatprep.mubr.f32.mxu0 0.0
        %1976 = vmatmul.mubr.f32.gmra.mrb[0].mxu0 %v1778
        %v1977 = vpop.f32.mrb[0].mxu0
        %v1978 = vadd.f32 %v1723, %v1977
        %v1979 = vpop.f32.mrb[0].mxu0
        %1980 = vmatprep.mubr.f32.mxu0 0.0
        %1981 = vmatmul.mubr.f32.gmra.mrb[0].mxu0 %v1781
        %v1982 = vpop.f32.mrb[0].mxu0
        %v1983 = vadd.f32 %v1723, %v1982
        %v1984 = vpop.f32.mrb[0].mxu0
        %1985 = vmatprep.mubr.f32.mxu0 0.0
        %1986 = vmatmul.mubr.f32.gmra.mrb[0].mxu0 %v1784
        %v1987 = vpop.f32.mrb[0].mxu0
        %v1988 = vadd.f32 %v1723, %v1987
        %v1989 = vpop.f32.mrb[0].mxu0
        %1990 = vmatprep.mubr.f32.mxu0 0.0
        %1991 = vmatmul.mubr.f32.gmra.mrb[0].mxu0 %v1787
        %v1992 = vpop.f32.mrb[0].mxu0
        %v1993 = vadd.f32 %v1723, %v1992
        %v1994 = vpop.f32.mrb[0].mxu0
        %1995 = vmatprep.mubr.f32.mxu0 0.0
        %1996 = vmatmul.mubr.f32.gmra.mrb[0].mxu0 %v1790
        %v1997 = vpop.f32.mrb[0].mxu0
        %v1998 = vadd.f32 %v1723, %v1997
        %v1999 = vpop.f32.mrb[0].mxu0
        %2000 = vmatprep.mubr.f32.mxu0 0.0
        %2001 = vmatmul.mubr.f32.gmra.mrb[0].mxu0 %v1793
        %v2002 = vpop.f32.mrb[0].mxu0
        %v2003 = vadd.f32 %v1723, %v2002
        %v2004 = vpop.f32.mrb[0].mxu0
        %2005 = vmatprep.mubr.f32.mxu0 0.0
        %2006 = vmatmul.mubr.f32.gmra.mrb[0].mxu0 %v1796
        %v2007 = vpop.f32.mrb[0].mxu0
        %v2008 = vadd.f32 %v1723, %v2007
        %v2009 = vpop.f32.mrb[0].mxu0
        %2010 = vmatprep.mubr.f32.mxu0 0.0
        %2011 = vmatmul.mubr.f32.gmra.mrb[0].mxu0 %v1799
        %v2012 = vpop.f32.mrb[0].mxu0
        %v2013 = vadd.f32 %v1723, %v2012
        %v2014 = vpop.f32.mrb[0].mxu0
        %2015 = vmatprep.mubr.f32.mxu0 0.0
        %2016 = vmatmul.mubr.f32.gmra.mrb[0].mxu0 %v1802
        %v2017 = vpop.f32.mrb[0].mxu0
        %v2018 = vadd.f32 %v1723, %v2017
        %v2019 = vpop.f32.mrb[0].mxu0
        %2020 = vmatprep.mubr.f32.mxu0 0.0
        %2021 = vmatmul.mubr.f32.gmra.mrb[0].mxu0 %v1805
        %v2022 = vpop.f32.mrb[0].mxu0
        %v2023 = vadd.f32 %v1723, %v2022
        %v2024 = vpop.f32.mrb[0].mxu0
        %2025 = vmatprep.mubr.f32.mxu0 0.0
        %2026 = vmatmul.mubr.f32.gmra.mrb[0].mxu0 %v1808
        %v2027 = vpop.f32.mrb[0].mxu0
        %v2028 = vadd.f32 %v1723, %v2027
        %v2029 = vpop.f32.mrb[0].mxu0
        %2030 = vmatprep.mubr.f32.mxu0 0.0
        %2031 = vmatmul.mubr.f32.gmra.mrb[0].mxu0 %v1811
        %v2032 = vpop.f32.mrb[0].mxu0
        %v2033 = vadd.f32 %v1723, %v2032
        %v2034 = vpop.f32.mrb[0].mxu0
        %2035 = vmatprep.mubr.f32.mxu0 0.0
        %2036 = vmatmul.mubr.f32.gmra.mrb[0].mxu0 %v1814
        %v2037 = vpop.f32.mrb[0].mxu0
        %v2038 = vadd.f32 %v1723, %v2037
        %v2039 = vpop.f32.mrb[0].mxu0
        %2040 = vmatprep.mubr.f32.mxu0 0.0
        %2041 = vmatmul.mubr.f32.gmra.mrb[0].mxu0 %v1817
        %v2042 = vpop.f32.mrb[0].mxu0
        %v2043 = vadd.f32 %v1723, %v2042
        %v2044 = vpop.f32.mrb[0].mxu0
        %2045 = vmatprep.mubr.f32.mxu0 0.0
        %2046 = vmatmul.mubr.f32.gmra.mrb[0].mxu0 %v1820
        %v2047 = vpop.f32.mrb[0].mxu0
        %v2048 = vadd.f32 %v1723, %v2047
        %v2049 = vpop.f32.mrb[0].mxu0
        %2050 = vdwg.mxu0
        %v2051 = vmax.f32 %v1893, 0.0
        %v2052 = vmax.f32 %v1898, 0.0
        %v2053 = vmax.f32 %v1903, 0.0
        %v2054 = vmax.f32 %v1908, 0.0
        %v2055 = vmax.f32 %v1913, 0.0
        %v2056 = vmax.f32 %v1918, 0.0
        %v2057 = vmax.f32 %v1923, 0.0
        %v2058 = vmax.f32 %v1928, 0.0
        %v2059 = vmax.f32 %v1933, 0.0
        %v2060 = vmax.f32 %v1938, 0.0
        %v2061 = vmax.f32 %v1943, 0.0
        %v2062 = vmax.f32 %v1948, 0.0
        %v2063 = vmax.f32 %v1953, 0.0
        %v2064 = vmax.f32 %v1958, 0.0
        %v2065 = vmax.f32 %v1963, 0.0
        %v2066 = vmax.f32 %v1968, 0.0
        %v2067 = vmax.f32 %v1973, 0.0
        %v2068 = vmax.f32 %v1978, 0.0
        %v2069 = vmax.f32 %v1983, 0.0
        %v2070 = vmax.f32 %v1988, 0.0
        %v2071 = vmax.f32 %v1993, 0.0
        %v2072 = vmax.f32 %v1998, 0.0
        %v2073 = vmax.f32 %v2003, 0.0
        %v2074 = vmax.f32 %v2008, 0.0
        %v2075 = vmax.f32 %v2013, 0.0
        %v2076 = vmax.f32 %v2018, 0.0
        %v2077 = vmax.f32 %v2023, 0.0
        %v2078 = vmax.f32 %v2028, 0.0
        %v2079 = vmax.f32 %v2033, 0.0
        %v2080 = vmax.f32 %v2038, 0.0
        %v2081 = vmax.f32 %v2043, 0.0
        %v2082 = vmax.f32 %v2048, 0.0
        %vm2083 = vcmask 130048
        %2084 = vst.msk [vmem:[#allocation3] sm:$0xff] %vm2083, %v2051
        %2085 = vst.msk [vmem:[#allocation3 + $0x10] sm:$0xff] %vm2083, %v2052
        %2086 = vst.msk [vmem:[#allocation3 + $0x20] sm:$0xff] %vm2083, %v2053
        %2087 = vst.msk [vmem:[#allocation3 + $0x30] sm:$0xff] %vm2083, %v2054
        %2088 = vst.msk [vmem:[#allocation3 + $0x40] sm:$0xff] %vm2083, %v2055
        %2089 = vst.msk [vmem:[#allocation3 + $0x50] sm:$0xff] %vm2083, %v2056
        %2090 = vst.msk [vmem:[#allocation3 + $0x60] sm:$0xff] %vm2083, %v2057
        %2091 = vst.msk [vmem:[#allocation3 + $0x70] sm:$0xff] %vm2083, %v2058
        %2092 = vst.msk [vmem:[#allocation3 + $0x80] sm:$0xff] %vm2083, %v2059
        %2093 = vst.msk [vmem:[#allocation3 + $0x90] sm:$0xff] %vm2083, %v2060
        %2094 = vst.msk [vmem:[#allocation3 + $0xa0] sm:$0xff] %vm2083, %v2061
        %2095 = vst.msk [vmem:[#allocation3 + $0xb0] sm:$0xff] %vm2083, %v2062
        %2096 = vst.msk [vmem:[#allocation3 + $0xc0] sm:$0xff] %vm2083, %v2063
        %2097 = vst.msk [vmem:[#allocation3 + $0xd0] sm:$0xff] %vm2083, %v2064
        %2098 = vst.msk [vmem:[#allocation3 + $0xe0] sm:$0xff] %vm2083, %v2065
        %2099 = vst.msk [vmem:[#allocation3 + $0xf0] sm:$0xff] %vm2083, %v2066
        %2100 = vst.msk [vmem:[#allocation3 + $0x100] sm:$0xff] %vm2083, %v2067
        %2101 = vst.msk [vmem:[#allocation3 + $0x110] sm:$0xff] %vm2083, %v2068
        %2102 = vst.msk [vmem:[#allocation3 + $0x120] sm:$0xff] %vm2083, %v2069
        %2103 = vst.msk [vmem:[#allocation3 + $0x130] sm:$0xff] %vm2083, %v2070
        %2104 = vst.msk [vmem:[#allocation3 + $0x140] sm:$0xff] %vm2083, %v2071
        %2105 = vst.msk [vmem:[#allocation3 + $0x150] sm:$0xff] %vm2083, %v2072
        %2106 = vst.msk [vmem:[#allocation3 + $0x160] sm:$0xff] %vm2083, %v2073
        %2107 = vst.msk [vmem:[#allocation3 + $0x170] sm:$0xff] %vm2083, %v2074
        %2108 = vst.msk [vmem:[#allocation3 + $0x180] sm:$0xff] %vm2083, %v2075
        %2109 = vst.msk [vmem:[#allocation3 + $0x190] sm:$0xff] %vm2083, %v2076
        %2110 = vst.msk [vmem:[#allocation3 + $0x1a0] sm:$0xff] %vm2083, %v2077
        %2111 = vst.msk [vmem:[#allocation3 + $0x1b0] sm:$0xff] %vm2083, %v2078
        %2112 = vst.msk [vmem:[#allocation3 + $0x1c0] sm:$0xff] %vm2083, %v2079
        %2113 = vst.msk [vmem:[#allocation3 + $0x1d0] sm:$0xff] %vm2083, %v2080
        %2114 = vst.msk [vmem:[#allocation3 + $0x1e0] sm:$0xff] %vm2083, %v2081
        %2115 = vst.msk [vmem:[#allocation3 + $0x1f0] sm:$0xff] %vm2083, %v2082
        %v2116 = vrot.slane %v2051, 1
        %v2117 = vrot.slane %v2052, 1
        %v2118 = vrot.slane %v2053, 1
        %v2119 = vrot.slane %v2054, 1
        %v2120 = vrot.slane %v2055, 1
        %v2121 = vrot.slane %v2056, 1
        %v2122 = vrot.slane %v2057, 1
        %v2123 = vrot.slane %v2058, 1
        %v2124 = vrot.slane %v2059, 1
        %v2125 = vrot.slane %v2060, 1
        %v2126 = vrot.slane %v2061, 1
        %v2127 = vrot.slane %v2062, 1
        %v2128 = vrot.slane %v2063, 1
        %v2129 = vrot.slane %v2064, 1
        %v2130 = vrot.slane %v2065, 1
        %v2131 = vrot.slane %v2066, 1
        %v2132 = vrot.slane %v2067, 1
        %v2133 = vrot.slane %v2068, 1
        %v2134 = vrot.slane %v2069, 1
        %v2135 = vrot.slane %v2070, 1
        %v2136 = vrot.slane %v2071, 1
        %v2137 = vrot.slane %v2072, 1
        %v2138 = vrot.slane %v2073, 1
        %v2139 = vrot.slane %v2074, 1
        %v2140 = vrot.slane %v2075, 1
        %v2141 = vrot.slane %v2076, 1
        %v2142 = vrot.slane %v2077, 1
        %v2143 = vrot.slane %v2078, 1
        %v2144 = vrot.slane %v2079, 1
        %v2145 = vrot.slane %v2080, 1
        %v2146 = vrot.slane %v2081, 1
        %v2147 = vrot.slane %v2082, 1
        %v2148 = vsel %vm456, %v2146, %v2147
        %v2149 = vsel %vm456, %v2145, %v2146
        %v2150 = vsel %vm456, %v2144, %v2145
        %v2151 = vsel %vm456, %v2143, %v2144
        %v2152 = vsel %vm456, %v2142, %v2143
        %v2153 = vsel %vm456, %v2141, %v2142
        %v2154 = vsel %vm456, %v2140, %v2141
        %v2155 = vsel %vm456, %v2139, %v2140
        %v2156 = vsel %vm456, %v2138, %v2139
        %v2157 = vsel %vm456, %v2137, %v2138
        %v2158 = vsel %vm456, %v2136, %v2137
        %v2159 = vsel %vm456, %v2135, %v2136
        %v2160 = vsel %vm456, %v2134, %v2135
        %v2161 = vsel %vm456, %v2133, %v2134
        %v2162 = vsel %vm456, %v2132, %v2133
        %v2163 = vsel %vm456, %v2131, %v2132
        %v2164 = vsel %vm456, %v2130, %v2131
        %v2165 = vsel %vm456, %v2129, %v2130
        %v2166 = vsel %vm456, %v2128, %v2129
        %v2167 = vsel %vm456, %v2127, %v2128
        %v2168 = vsel %vm456, %v2126, %v2127
        %v2169 = vsel %vm456, %v2125, %v2126
        %v2170 = vsel %vm456, %v2124, %v2125
        %v2171 = vsel %vm456, %v2123, %v2124
        %v2172 = vsel %vm456, %v2122, %v2123
        %v2173 = vsel %vm456, %v2121, %v2122
        %v2174 = vsel %vm456, %v2120, %v2121
        %v2175 = vsel %vm456, %v2119, %v2120
        %v2176 = vsel %vm456, %v2118, %v2119
        %v2177 = vsel %vm456, %v2117, %v2118
        %v2178 = vsel %vm456, %v2116, %v2117
        %v2179 = vsel %vm456, %v2147, %v2116
        %2212 = vrot.lane.b32.xlu0 %v2178, 16
        %v2213 = vpop.permute.xlu0 %2212
        %2214 = vrot.lane.b32.xlu0 %v2177, 16
        %v2215 = vpop.permute.xlu0 %2214
        %2216 = vrot.lane.b32.xlu0 %v2176, 16
        %v2217 = vpop.permute.xlu0 %2216
        %2218 = vrot.lane.b32.xlu0 %v2175, 16
        %v2219 = vpop.permute.xlu0 %2218
        %2220 = vrot.lane.b32.xlu0 %v2174, 16
        %v2221 = vpop.permute.xlu0 %2220
        %2222 = vrot.lane.b32.xlu0 %v2173, 16
        %v2223 = vpop.permute.xlu0 %2222
        %2224 = vrot.lane.b32.xlu0 %v2172, 16
        %v2225 = vpop.permute.xlu0 %2224
        %2226 = vrot.lane.b32.xlu0 %v2171, 16
        %v2227 = vpop.permute.xlu0 %2226
        %2228 = vrot.lane.b32.xlu0 %v2170, 16
        %v2229 = vpop.permute.xlu0 %2228
        %2230 = vrot.lane.b32.xlu0 %v2169, 16
        %v2231 = vpop.permute.xlu0 %2230
        %2232 = vrot.lane.b32.xlu0 %v2168, 16
        %v2233 = vpop.permute.xlu0 %2232
        %2234 = vrot.lane.b32.xlu0 %v2167, 16
        %v2235 = vpop.permute.xlu0 %2234
        %2236 = vrot.lane.b32.xlu0 %v2166, 16
        %v2237 = vpop.permute.xlu0 %2236
        %2238 = vrot.lane.b32.xlu0 %v2165, 16
        %v2239 = vpop.permute.xlu0 %2238
        %2240 = vrot.lane.b32.xlu0 %v2164, 16
        %v2241 = vpop.permute.xlu0 %2240
        %2242 = vrot.lane.b32.xlu0 %v2163, 16
        %v2243 = vpop.permute.xlu0 %2242
        %2244 = vrot.lane.b32.xlu0 %v2162, 16
        %v2245 = vpop.permute.xlu0 %2244
        %2246 = vrot.lane.b32.xlu0 %v2161, 16
        %v2247 = vpop.permute.xlu0 %2246
        %2248 = vrot.lane.b32.xlu0 %v2160, 16
        %v2249 = vpop.permute.xlu0 %2248
        %2250 = vrot.lane.b32.xlu0 %v2159, 16
        %v2251 = vpop.permute.xlu0 %2250
        %2252 = vrot.lane.b32.xlu0 %v2158, 16
        %v2253 = vpop.permute.xlu0 %2252
        %2254 = vrot.lane.b32.xlu0 %v2157, 16
        %v2255 = vpop.permute.xlu0 %2254
        %2256 = vrot.lane.b32.xlu0 %v2156, 16
        %v2257 = vpop.permute.xlu0 %2256
        %2258 = vrot.lane.b32.xlu0 %v2155, 16
        %v2259 = vpop.permute.xlu0 %2258
        %2260 = vrot.lane.b32.xlu0 %v2154, 16
        %v2261 = vpop.permute.xlu0 %2260
        %2262 = vrot.lane.b32.xlu0 %v2153, 16
        %v2263 = vpop.permute.xlu0 %2262
        %2264 = vrot.lane.b32.xlu0 %v2152, 16
        %v2265 = vpop.permute.xlu0 %2264
        %2266 = vrot.lane.b32.xlu0 %v2151, 16
        %v2267 = vpop.permute.xlu0 %2266
        %2268 = vrot.lane.b32.xlu0 %v2150, 16
        %v2269 = vpop.permute.xlu0 %2268
        %2270 = vrot.lane.b32.xlu0 %v2149, 16
        %v2271 = vpop.permute.xlu0 %2270
        %2272 = vrot.lane.b32.xlu0 %v2148, 16
        %v2273 = vpop.permute.xlu0 %2272
        %2274 = vrot.lane.b32.xlu0 %v2179, 16
        %v2275 = vpop.permute.xlu0 %2274
        %vm2308 = vcmask 261248
        %2309 = vst.msk [vmem:[#allocation3] sm:$0xff] %vm2308, %v2213
        %2310 = vst.msk [vmem:[#allocation3 + $0x10] sm:$0xff] %vm2308, %v2215
        %2311 = vst.msk [vmem:[#allocation3 + $0x20] sm:$0xff] %vm2308, %v2217
        %2312 = vst.msk [vmem:[#allocation3 + $0x30] sm:$0xff] %vm2308, %v2219
        %2313 = vst.msk [vmem:[#allocation3 + $0x40] sm:$0xff] %vm2308, %v2221
        %2314 = vst.msk [vmem:[#allocation3 + $0x50] sm:$0xff] %vm2308, %v2223
        %2315 = vst.msk [vmem:[#allocation3 + $0x60] sm:$0xff] %vm2308, %v2225
        %2316 = vst.msk [vmem:[#allocation3 + $0x70] sm:$0xff] %vm2308, %v2227
        %2317 = vst.msk [vmem:[#allocation3 + $0x80] sm:$0xff] %vm2308, %v2229
        %2318 = vst.msk [vmem:[#allocation3 + $0x90] sm:$0xff] %vm2308, %v2231
        %2319 = vst.msk [vmem:[#allocation3 + $0xa0] sm:$0xff] %vm2308, %v2233
        %2320 = vst.msk [vmem:[#allocation3 + $0xb0] sm:$0xff] %vm2308, %v2235
        %2321 = vst.msk [vmem:[#allocation3 + $0xc0] sm:$0xff] %vm2308, %v2237
        %2322 = vst.msk [vmem:[#allocation3 + $0xd0] sm:$0xff] %vm2308, %v2239
        %2323 = vst.msk [vmem:[#allocation3 + $0xe0] sm:$0xff] %vm2308, %v2241
        %2324 = vst.msk [vmem:[#allocation3 + $0xf0] sm:$0xff] %vm2308, %v2243
        %2325 = vst.msk [vmem:[#allocation3 + $0x100] sm:$0xff] %vm2308, %v2245
        %2326 = vst.msk [vmem:[#allocation3 + $0x110] sm:$0xff] %vm2308, %v2247
        %2327 = vst.msk [vmem:[#allocation3 + $0x120] sm:$0xff] %vm2308, %v2249
        %2328 = vst.msk [vmem:[#allocation3 + $0x130] sm:$0xff] %vm2308, %v2251
        %2329 = vst.msk [vmem:[#allocation3 + $0x140] sm:$0xff] %vm2308, %v2253
        %2330 = vst.msk [vmem:[#allocation3 + $0x150] sm:$0xff] %vm2308, %v2255
        %2331 = vst.msk [vmem:[#allocation3 + $0x160] sm:$0xff] %vm2308, %v2257
        %2332 = vst.msk [vmem:[#allocation3 + $0x170] sm:$0xff] %vm2308, %v2259
        %2333 = vst.msk [vmem:[#allocation3 + $0x180] sm:$0xff] %vm2308, %v2261
        %2334 = vst.msk [vmem:[#allocation3 + $0x190] sm:$0xff] %vm2308, %v2263
        %2335 = vst.msk [vmem:[#allocation3 + $0x1a0] sm:$0xff] %vm2308, %v2265
        %2336 = vst.msk [vmem:[#allocation3 + $0x1b0] sm:$0xff] %vm2308, %v2267
        %2337 = vst.msk [vmem:[#allocation3 + $0x1c0] sm:$0xff] %vm2308, %v2269
        %2338 = vst.msk [vmem:[#allocation3 + $0x1d0] sm:$0xff] %vm2308, %v2271
        %2339 = vst.msk [vmem:[#allocation3 + $0x1e0] sm:$0xff] %vm2308, %v2273
        %2340 = vst.msk [vmem:[#allocation3 + $0x1f0] sm:$0xff] %vm2308, %v2275
        %v2341 = vrot.slane %v2051, 2
        %v2342 = vrot.slane %v2052, 2
        %v2343 = vrot.slane %v2053, 2
        %v2344 = vrot.slane %v2054, 2
        %v2345 = vrot.slane %v2055, 2
        %v2346 = vrot.slane %v2056, 2
        %v2347 = vrot.slane %v2057, 2
        %v2348 = vrot.slane %v2058, 2
        %v2349 = vrot.slane %v2059, 2
        %v2350 = vrot.slane %v2060, 2
        %v2351 = vrot.slane %v2061, 2
        %v2352 = vrot.slane %v2062, 2
        %v2353 = vrot.slane %v2063, 2
        %v2354 = vrot.slane %v2064, 2
        %v2355 = vrot.slane %v2065, 2
        %v2356 = vrot.slane %v2066, 2
        %v2357 = vrot.slane %v2067, 2
        %v2358 = vrot.slane %v2068, 2
        %v2359 = vrot.slane %v2069, 2
        %v2360 = vrot.slane %v2070, 2
        %v2361 = vrot.slane %v2071, 2
        %v2362 = vrot.slane %v2072, 2
        %v2363 = vrot.slane %v2073, 2
        %v2364 = vrot.slane %v2074, 2
        %v2365 = vrot.slane %v2075, 2
        %v2366 = vrot.slane %v2076, 2
        %v2367 = vrot.slane %v2077, 2
        %v2368 = vrot.slane %v2078, 2
        %v2369 = vrot.slane %v2079, 2
        %v2370 = vrot.slane %v2080, 2
        %v2371 = vrot.slane %v2081, 2
        %v2372 = vrot.slane %v2082, 2
        %v2373 = vsel %vm682, %v2371, %v2372
        %v2374 = vsel %vm682, %v2370, %v2371
        %v2375 = vsel %vm682, %v2369, %v2370
        %v2376 = vsel %vm682, %v2368, %v2369
        %v2377 = vsel %vm682, %v2367, %v2368
        %v2378 = vsel %vm682, %v2366, %v2367
        %v2379 = vsel %vm682, %v2365, %v2366
        %v2380 = vsel %vm682, %v2364, %v2365
        %v2381 = vsel %vm682, %v2363, %v2364
        %v2382 = vsel %vm682, %v2362, %v2363
        %v2383 = vsel %vm682, %v2361, %v2362
        %v2384 = vsel %vm682, %v2360, %v2361
        %v2385 = vsel %vm682, %v2359, %v2360
        %v2386 = vsel %vm682, %v2358, %v2359
        %v2387 = vsel %vm682, %v2357, %v2358
        %v2388 = vsel %vm682, %v2356, %v2357
        %v2389 = vsel %vm682, %v2355, %v2356
        %v2390 = vsel %vm682, %v2354, %v2355
        %v2391 = vsel %vm682, %v2353, %v2354
        %v2392 = vsel %vm682, %v2352, %v2353
        %v2393 = vsel %vm682, %v2351, %v2352
        %v2394 = vsel %vm682, %v2350, %v2351
        %v2395 = vsel %vm682, %v2349, %v2350
        %v2396 = vsel %vm682, %v2348, %v2349
        %v2397 = vsel %vm682, %v2347, %v2348
        %v2398 = vsel %vm682, %v2346, %v2347
        %v2399 = vsel %vm682, %v2345, %v2346
        %v2400 = vsel %vm682, %v2344, %v2345
        %v2401 = vsel %vm682, %v2343, %v2344
        %v2402 = vsel %vm682, %v2342, %v2343
        %v2403 = vsel %vm682, %v2341, %v2342
        %v2404 = vsel %vm682, %v2372, %v2341
        %2437 = vrot.lane.b32.xlu0 %v2403, 32
        %v2438 = vpop.permute.xlu0 %2437
        %2439 = vrot.lane.b32.xlu0 %v2402, 32
        %v2440 = vpop.permute.xlu0 %2439
        %2441 = vrot.lane.b32.xlu0 %v2401, 32
        %v2442 = vpop.permute.xlu0 %2441
        %2443 = vrot.lane.b32.xlu0 %v2400, 32
        %v2444 = vpop.permute.xlu0 %2443
        %2445 = vrot.lane.b32.xlu0 %v2399, 32
        %v2446 = vpop.permute.xlu0 %2445
        %2447 = vrot.lane.b32.xlu0 %v2398, 32
        %v2448 = vpop.permute.xlu0 %2447
        %2449 = vrot.lane.b32.xlu0 %v2397, 32
        %v2450 = vpop.permute.xlu0 %2449
        %2451 = vrot.lane.b32.xlu0 %v2396, 32
        %v2452 = vpop.permute.xlu0 %2451
        %2453 = vrot.lane.b32.xlu0 %v2395, 32
        %v2454 = vpop.permute.xlu0 %2453
        %2455 = vrot.lane.b32.xlu0 %v2394, 32
        %v2456 = vpop.permute.xlu0 %2455
        %2457 = vrot.lane.b32.xlu0 %v2393, 32
        %v2458 = vpop.permute.xlu0 %2457
        %2459 = vrot.lane.b32.xlu0 %v2392, 32
        %v2460 = vpop.permute.xlu0 %2459
        %2461 = vrot.lane.b32.xlu0 %v2391, 32
        %v2462 = vpop.permute.xlu0 %2461
        %2463 = vrot.lane.b32.xlu0 %v2390, 32
        %v2464 = vpop.permute.xlu0 %2463
        %2465 = vrot.lane.b32.xlu0 %v2389, 32
        %v2466 = vpop.permute.xlu0 %2465
        %2467 = vrot.lane.b32.xlu0 %v2388, 32
        %v2468 = vpop.permute.xlu0 %2467
        %2469 = vrot.lane.b32.xlu0 %v2387, 32
        %v2470 = vpop.permute.xlu0 %2469
        %2471 = vrot.lane.b32.xlu0 %v2386, 32
        %v2472 = vpop.permute.xlu0 %2471
        %2473 = vrot.lane.b32.xlu0 %v2385, 32
        %v2474 = vpop.permute.xlu0 %2473
        %2475 = vrot.lane.b32.xlu0 %v2384, 32
        %v2476 = vpop.permute.xlu0 %2475
        %2477 = vrot.lane.b32.xlu0 %v2383, 32
        %v2478 = vpop.permute.xlu0 %2477
        %2479 = vrot.lane.b32.xlu0 %v2382, 32
        %v2480 = vpop.permute.xlu0 %2479
        %2481 = vrot.lane.b32.xlu0 %v2381, 32
        %v2482 = vpop.permute.xlu0 %2481
        %2483 = vrot.lane.b32.xlu0 %v2380, 32
        %v2484 = vpop.permute.xlu0 %2483
        %2485 = vrot.lane.b32.xlu0 %v2379, 32
        %v2486 = vpop.permute.xlu0 %2485
        %2487 = vrot.lane.b32.xlu0 %v2378, 32
        %v2488 = vpop.permute.xlu0 %2487
        %2489 = vrot.lane.b32.xlu0 %v2377, 32
        %v2490 = vpop.permute.xlu0 %2489
        %2491 = vrot.lane.b32.xlu0 %v2376, 32
        %v2492 = vpop.permute.xlu0 %2491
        %2493 = vrot.lane.b32.xlu0 %v2375, 32
        %v2494 = vpop.permute.xlu0 %2493
        %2495 = vrot.lane.b32.xlu0 %v2374, 32
        %v2496 = vpop.permute.xlu0 %2495
        %2497 = vrot.lane.b32.xlu0 %v2373, 32
        %v2498 = vpop.permute.xlu0 %2497
        %2499 = vrot.lane.b32.xlu0 %v2404, 32
        %v2500 = vpop.permute.xlu0 %2499
        %vm2533 = vcmask 392448
        %2534 = vst.msk [vmem:[#allocation3] sm:$0xff] %vm2533, %v2438
        %2535 = vst.msk [vmem:[#allocation3 + $0x10] sm:$0xff] %vm2533, %v2440
        %2536 = vst.msk [vmem:[#allocation3 + $0x20] sm:$0xff] %vm2533, %v2442
        %2537 = vst.msk [vmem:[#allocation3 + $0x30] sm:$0xff] %vm2533, %v2444
        %2538 = vst.msk [vmem:[#allocation3 + $0x40] sm:$0xff] %vm2533, %v2446
        %2539 = vst.msk [vmem:[#allocation3 + $0x50] sm:$0xff] %vm2533, %v2448
        %2540 = vst.msk [vmem:[#allocation3 + $0x60] sm:$0xff] %vm2533, %v2450
        %2541 = vst.msk [vmem:[#allocation3 + $0x70] sm:$0xff] %vm2533, %v2452
        %2542 = vst.msk [vmem:[#allocation3 + $0x80] sm:$0xff] %vm2533, %v2454
        %2543 = vst.msk [vmem:[#allocation3 + $0x90] sm:$0xff] %vm2533, %v2456
        %2544 = vst.msk [vmem:[#allocation3 + $0xa0] sm:$0xff] %vm2533, %v2458
        %2545 = vst.msk [vmem:[#allocation3 + $0xb0] sm:$0xff] %vm2533, %v2460
        %2546 = vst.msk [vmem:[#allocation3 + $0xc0] sm:$0xff] %vm2533, %v2462
        %2547 = vst.msk [vmem:[#allocation3 + $0xd0] sm:$0xff] %vm2533, %v2464
        %2548 = vst.msk [vmem:[#allocation3 + $0xe0] sm:$0xff] %vm2533, %v2466
        %2549 = vst.msk [vmem:[#allocation3 + $0xf0] sm:$0xff] %vm2533, %v2468
        %2550 = vst.msk [vmem:[#allocation3 + $0x100] sm:$0xff] %vm2533, %v2470
        %2551 = vst.msk [vmem:[#allocation3 + $0x110] sm:$0xff] %vm2533, %v2472
        %2552 = vst.msk [vmem:[#allocation3 + $0x120] sm:$0xff] %vm2533, %v2474
        %2553 = vst.msk [vmem:[#allocation3 + $0x130] sm:$0xff] %vm2533, %v2476
        %2554 = vst.msk [vmem:[#allocation3 + $0x140] sm:$0xff] %vm2533, %v2478
        %2555 = vst.msk [vmem:[#allocation3 + $0x150] sm:$0xff] %vm2533, %v2480
        %2556 = vst.msk [vmem:[#allocation3 + $0x160] sm:$0xff] %vm2533, %v2482
        %2557 = vst.msk [vmem:[#allocation3 + $0x170] sm:$0xff] %vm2533, %v2484
        %2558 = vst.msk [vmem:[#allocation3 + $0x180] sm:$0xff] %vm2533, %v2486
        %2559 = vst.msk [vmem:[#allocation3 + $0x190] sm:$0xff] %vm2533, %v2488
        %2560 = vst.msk [vmem:[#allocation3 + $0x1a0] sm:$0xff] %vm2533, %v2490
        %2561 = vst.msk [vmem:[#allocation3 + $0x1b0] sm:$0xff] %vm2533, %v2492
        %2562 = vst.msk [vmem:[#allocation3 + $0x1c0] sm:$0xff] %vm2533, %v2494
        %2563 = vst.msk [vmem:[#allocation3 + $0x1d0] sm:$0xff] %vm2533, %v2496
        %2564 = vst.msk [vmem:[#allocation3 + $0x1e0] sm:$0xff] %vm2533, %v2498
        %2565 = vst.msk [vmem:[#allocation3 + $0x1f0] sm:$0xff] %vm2533, %v2500
        %2598 = vrot.lane.b32.xlu0 %v2053, 48
        %v2599 = vpop.permute.xlu0 %2598
        %2600 = vrot.lane.b32.xlu0 %v2054, 48
        %v2601 = vpop.permute.xlu0 %2600
        %2602 = vrot.lane.b32.xlu0 %v2055, 48
        %v2603 = vpop.permute.xlu0 %2602
        %2604 = vrot.lane.b32.xlu0 %v2056, 48
        %v2605 = vpop.permute.xlu0 %2604
        %2606 = vrot.lane.b32.xlu0 %v2057, 48
        %v2607 = vpop.permute.xlu0 %2606
        %2608 = vrot.lane.b32.xlu0 %v2058, 48
        %v2609 = vpop.permute.xlu0 %2608
        %2610 = vrot.lane.b32.xlu0 %v2059, 48
        %v2611 = vpop.permute.xlu0 %2610
        %2612 = vrot.lane.b32.xlu0 %v2060, 48
        %v2613 = vpop.permute.xlu0 %2612
        %2614 = vrot.lane.b32.xlu0 %v2061, 48
        %v2615 = vpop.permute.xlu0 %2614
        %2616 = vrot.lane.b32.xlu0 %v2062, 48
        %v2617 = vpop.permute.xlu0 %2616
        %2618 = vrot.lane.b32.xlu0 %v2063, 48
        %v2619 = vpop.permute.xlu0 %2618
        %2620 = vrot.lane.b32.xlu0 %v2064, 48
        %v2621 = vpop.permute.xlu0 %2620
        %2622 = vrot.lane.b32.xlu0 %v2065, 48
        %v2623 = vpop.permute.xlu0 %2622
        %2624 = vrot.lane.b32.xlu0 %v2066, 48
        %v2625 = vpop.permute.xlu0 %2624
        %2626 = vrot.lane.b32.xlu0 %v2067, 48
        %v2627 = vpop.permute.xlu0 %2626
        %2628 = vrot.lane.b32.xlu0 %v2068, 48
        %v2629 = vpop.permute.xlu0 %2628
        %2630 = vrot.lane.b32.xlu0 %v2069, 48
        %v2631 = vpop.permute.xlu0 %2630
        %2632 = vrot.lane.b32.xlu0 %v2070, 48
        %v2633 = vpop.permute.xlu0 %2632
        %2634 = vrot.lane.b32.xlu0 %v2071, 48
        %v2635 = vpop.permute.xlu0 %2634
        %2636 = vrot.lane.b32.xlu0 %v2072, 48
        %v2637 = vpop.permute.xlu0 %2636
        %2638 = vrot.lane.b32.xlu0 %v2073, 48
        %v2639 = vpop.permute.xlu0 %2638
        %2640 = vrot.lane.b32.xlu0 %v2074, 48
        %v2641 = vpop.permute.xlu0 %2640
        %2642 = vrot.lane.b32.xlu0 %v2075, 48
        %v2643 = vpop.permute.xlu0 %2642
        %2644 = vrot.lane.b32.xlu0 %v2076, 48
        %v2645 = vpop.permute.xlu0 %2644
        %2646 = vrot.lane.b32.xlu0 %v2077, 48
        %v2647 = vpop.permute.xlu0 %2646
        %2648 = vrot.lane.b32.xlu0 %v2078, 48
        %v2649 = vpop.permute.xlu0 %2648
        %2650 = vrot.lane.b32.xlu0 %v2079, 48
        %v2651 = vpop.permute.xlu0 %2650
        %2652 = vrot.lane.b32.xlu0 %v2080, 48
        %v2653 = vpop.permute.xlu0 %2652
        %2654 = vrot.lane.b32.xlu0 %v2081, 48
        %v2655 = vpop.permute.xlu0 %2654
        %2656 = vrot.lane.b32.xlu0 %v2082, 48
        %v2657 = vpop.permute.xlu0 %2656
        %2658 = vrot.lane.b32.xlu0 %v2051, 48
        %v2659 = vpop.permute.xlu0 %2658
        %2660 = vrot.lane.b32.xlu0 %v2052, 48
        %v2661 = vpop.permute.xlu0 %2660
        %vm2694 = vcmask 523648
        %2695 = vst.msk [vmem:[#allocation3] sm:$0xff] %vm2694, %v2599
        %2696 = vst.msk [vmem:[#allocation3 + $0x10] sm:$0xff] %vm2694, %v2601
        %2697 = vst.msk [vmem:[#allocation3 + $0x20] sm:$0xff] %vm2694, %v2603
        %2698 = vst.msk [vmem:[#allocation3 + $0x30] sm:$0xff] %vm2694, %v2605
        %2699 = vst.msk [vmem:[#allocation3 + $0x40] sm:$0xff] %vm2694, %v2607
        %2700 = vst.msk [vmem:[#allocation3 + $0x50] sm:$0xff] %vm2694, %v2609
        %2701 = vst.msk [vmem:[#allocation3 + $0x60] sm:$0xff] %vm2694, %v2611
        %2702 = vst.msk [vmem:[#allocation3 + $0x70] sm:$0xff] %vm2694, %v2613
        %2703 = vst.msk [vmem:[#allocation3 + $0x80] sm:$0xff] %vm2694, %v2615
        %2704 = vst.msk [vmem:[#allocation3 + $0x90] sm:$0xff] %vm2694, %v2617
        %2705 = vst.msk [vmem:[#allocation3 + $0xa0] sm:$0xff] %vm2694, %v2619
        %2706 = vst.msk [vmem:[#allocation3 + $0xb0] sm:$0xff] %vm2694, %v2621
        %2707 = vst.msk [vmem:[#allocation3 + $0xc0] sm:$0xff] %vm2694, %v2623
        %2708 = vst.msk [vmem:[#allocation3 + $0xd0] sm:$0xff] %vm2694, %v2625
        %2709 = vst.msk [vmem:[#allocation3 + $0xe0] sm:$0xff] %vm2694, %v2627
        %2710 = vst.msk [vmem:[#allocation3 + $0xf0] sm:$0xff] %vm2694, %v2629
        %2711 = vst.msk [vmem:[#allocation3 + $0x100] sm:$0xff] %vm2694, %v2631
        %2712 = vst.msk [vmem:[#allocation3 + $0x110] sm:$0xff] %vm2694, %v2633
        %2713 = vst.msk [vmem:[#allocation3 + $0x120] sm:$0xff] %vm2694, %v2635
        %2714 = vst.msk [vmem:[#allocation3 + $0x130] sm:$0xff] %vm2694, %v2637
        %2715 = vst.msk [vmem:[#allocation3 + $0x140] sm:$0xff] %vm2694, %v2639
        %2716 = vst.msk [vmem:[#allocation3 + $0x150] sm:$0xff] %vm2694, %v2641
        %2717 = vst.msk [vmem:[#allocation3 + $0x160] sm:$0xff] %vm2694, %v2643
        %2718 = vst.msk [vmem:[#allocation3 + $0x170] sm:$0xff] %vm2694, %v2645
        %2719 = vst.msk [vmem:[#allocation3 + $0x180] sm:$0xff] %vm2694, %v2647
        %2720 = vst.msk [vmem:[#allocation3 + $0x190] sm:$0xff] %vm2694, %v2649
        %2721 = vst.msk [vmem:[#allocation3 + $0x1a0] sm:$0xff] %vm2694, %v2651
        %2722 = vst.msk [vmem:[#allocation3 + $0x1b0] sm:$0xff] %vm2694, %v2653
        %2723 = vst.msk [vmem:[#allocation3 + $0x1c0] sm:$0xff] %vm2694, %v2655
        %2724 = vst.msk [vmem:[#allocation3 + $0x1d0] sm:$0xff] %vm2694, %v2657
        %2725 = vst.msk [vmem:[#allocation3 + $0x1e0] sm:$0xff] %vm2694, %v2659
        %2726 = vst.msk [vmem:[#allocation3 + $0x1f0] sm:$0xff] %vm2694, %v2661
        %2727 = vrot.lane.b32.xlu0 %v2176, 64
        %v2728 = vpop.permute.xlu0 %2727
        %2729 = vrot.lane.b32.xlu0 %v2175, 64
        %v2730 = vpop.permute.xlu0 %2729
        %2731 = vrot.lane.b32.xlu0 %v2174, 64
        %v2732 = vpop.permute.xlu0 %2731
        %2733 = vrot.lane.b32.xlu0 %v2173, 64
        %v2734 = vpop.permute.xlu0 %2733
        %2735 = vrot.lane.b32.xlu0 %v2172, 64
        %v2736 = vpop.permute.xlu0 %2735
        %2737 = vrot.lane.b32.xlu0 %v2171, 64
        %v2738 = vpop.permute.xlu0 %2737
        %2739 = vrot.lane.b32.xlu0 %v2170, 64
        %v2740 = vpop.permute.xlu0 %2739
        %2741 = vrot.lane.b32.xlu0 %v2169, 64
        %v2742 = vpop.permute.xlu0 %2741
        %2743 = vrot.lane.b32.xlu0 %v2168, 64
        %v2744 = vpop.permute.xlu0 %2743
        %2745 = vrot.lane.b32.xlu0 %v2167, 64
        %v2746 = vpop.permute.xlu0 %2745
        %2747 = vrot.lane.b32.xlu0 %v2166, 64
        %v2748 = vpop.permute.xlu0 %2747
        %2749 = vrot.lane.b32.xlu0 %v2165, 64
        %v2750 = vpop.permute.xlu0 %2749
        %2751 = vrot.lane.b32.xlu0 %v2164, 64
        %v2752 = vpop.permute.xlu0 %2751
        %2753 = vrot.lane.b32.xlu0 %v2163, 64
        %v2754 = vpop.permute.xlu0 %2753
        %2755 = vrot.lane.b32.xlu0 %v2162, 64
        %v2756 = vpop.permute.xlu0 %2755
        %2757 = vrot.lane.b32.xlu0 %v2161, 64
        %v2758 = vpop.permute.xlu0 %2757
        %2759 = vrot.lane.b32.xlu0 %v2160, 64
        %v2760 = vpop.permute.xlu0 %2759
        %2761 = vrot.lane.b32.xlu0 %v2159, 64
        %v2762 = vpop.permute.xlu0 %2761
        %2763 = vrot.lane.b32.xlu0 %v2158, 64
        %v2764 = vpop.permute.xlu0 %2763
        %2765 = vrot.lane.b32.xlu0 %v2157, 64
        %v2766 = vpop.permute.xlu0 %2765
        %2767 = vrot.lane.b32.xlu0 %v2156, 64
        %v2768 = vpop.permute.xlu0 %2767
        %2769 = vrot.lane.b32.xlu0 %v2155, 64
        %v2770 = vpop.permute.xlu0 %2769
        %2771 = vrot.lane.b32.xlu0 %v2154, 64
        %v2772 = vpop.permute.xlu0 %2771
        %2773 = vrot.lane.b32.xlu0 %v2153, 64
        %v2774 = vpop.permute.xlu0 %2773
        %2775 = vrot.lane.b32.xlu0 %v2152, 64
        %v2776 = vpop.permute.xlu0 %2775
        %2777 = vrot.lane.b32.xlu0 %v2151, 64
        %v2778 = vpop.permute.xlu0 %2777
        %2779 = vrot.lane.b32.xlu0 %v2150, 64
        %v2780 = vpop.permute.xlu0 %2779
        %2781 = vrot.lane.b32.xlu0 %v2149, 64
        %v2782 = vpop.permute.xlu0 %2781
        %2783 = vrot.lane.b32.xlu0 %v2148, 64
        %v2784 = vpop.permute.xlu0 %2783
        %2785 = vrot.lane.b32.xlu0 %v2179, 64
        %v2786 = vpop.permute.xlu0 %2785
        %2787 = vrot.lane.b32.xlu0 %v2178, 64
        %v2788 = vpop.permute.xlu0 %2787
        %2789 = vrot.lane.b32.xlu0 %v2177, 64
        %v2790 = vpop.permute.xlu0 %2789
        %vm2823 = vcmask 654848
        %2824 = vst.msk [vmem:[#allocation3] sm:$0xff] %vm2823, %v2728
        %2825 = vst.msk [vmem:[#allocation3 + $0x10] sm:$0xff] %vm2823, %v2730
        %2826 = vst.msk [vmem:[#allocation3 + $0x20] sm:$0xff] %vm2823, %v2732
        %2827 = vst.msk [vmem:[#allocation3 + $0x30] sm:$0xff] %vm2823, %v2734
        %2828 = vst.msk [vmem:[#allocation3 + $0x40] sm:$0xff] %vm2823, %v2736
        %2829 = vst.msk [vmem:[#allocation3 + $0x50] sm:$0xff] %vm2823, %v2738
        %2830 = vst.msk [vmem:[#allocation3 + $0x60] sm:$0xff] %vm2823, %v2740
        %2831 = vst.msk [vmem:[#allocation3 + $0x70] sm:$0xff] %vm2823, %v2742
        %2832 = vst.msk [vmem:[#allocation3 + $0x80] sm:$0xff] %vm2823, %v2744
        %2833 = vst.msk [vmem:[#allocation3 + $0x90] sm:$0xff] %vm2823, %v2746
        %2834 = vst.msk [vmem:[#allocation3 + $0xa0] sm:$0xff] %vm2823, %v2748
        %2835 = vst.msk [vmem:[#allocation3 + $0xb0] sm:$0xff] %vm2823, %v2750
        %2836 = vst.msk [vmem:[#allocation3 + $0xc0] sm:$0xff] %vm2823, %v2752
        %2837 = vst.msk [vmem:[#allocation3 + $0xd0] sm:$0xff] %vm2823, %v2754
        %2838 = vst.msk [vmem:[#allocation3 + $0xe0] sm:$0xff] %vm2823, %v2756
        %2839 = vst.msk [vmem:[#allocation3 + $0xf0] sm:$0xff] %vm2823, %v2758
        %2840 = vst.msk [vmem:[#allocation3 + $0x100] sm:$0xff] %vm2823, %v2760
        %2841 = vst.msk [vmem:[#allocation3 + $0x110] sm:$0xff] %vm2823, %v2762
        %2842 = vst.msk [vmem:[#allocation3 + $0x120] sm:$0xff] %vm2823, %v2764
        %2843 = vst.msk [vmem:[#allocation3 + $0x130] sm:$0xff] %vm2823, %v2766
        %2844 = vst.msk [vmem:[#allocation3 + $0x140] sm:$0xff] %vm2823, %v2768
        %2845 = vst.msk [vmem:[#allocation3 + $0x150] sm:$0xff] %vm2823, %v2770
        %2846 = vst.msk [vmem:[#allocation3 + $0x160] sm:$0xff] %vm2823, %v2772
        %2847 = vst.msk [vmem:[#allocation3 + $0x170] sm:$0xff] %vm2823, %v2774
        %2848 = vst.msk [vmem:[#allocation3 + $0x180] sm:$0xff] %vm2823, %v2776
        %2849 = vst.msk [vmem:[#allocation3 + $0x190] sm:$0xff] %vm2823, %v2778
        %2850 = vst.msk [vmem:[#allocation3 + $0x1a0] sm:$0xff] %vm2823, %v2780
        %2851 = vst.msk [vmem:[#allocation3 + $0x1b0] sm:$0xff] %vm2823, %v2782
        %2852 = vst.msk [vmem:[#allocation3 + $0x1c0] sm:$0xff] %vm2823, %v2784
        %2853 = vst.msk [vmem:[#allocation3 + $0x1d0] sm:$0xff] %vm2823, %v2786
        %2854 = vst.msk [vmem:[#allocation3 + $0x1e0] sm:$0xff] %vm2823, %v2788
        %2855 = vst.msk [vmem:[#allocation3 + $0x1f0] sm:$0xff] %vm2823, %v2790
        %2856 = vrot.lane.b32.xlu0 %v2401, 80
        %v2857 = vpop.permute.xlu0 %2856
        %2858 = vrot.lane.b32.xlu0 %v2400, 80
        %v2859 = vpop.permute.xlu0 %2858
        %2860 = vrot.lane.b32.xlu0 %v2399, 80
        %v2861 = vpop.permute.xlu0 %2860
        %2862 = vrot.lane.b32.xlu0 %v2398, 80
        %v2863 = vpop.permute.xlu0 %2862
        %2864 = vrot.lane.b32.xlu0 %v2397, 80
        %v2865 = vpop.permute.xlu0 %2864
        %2866 = vrot.lane.b32.xlu0 %v2396, 80
        %v2867 = vpop.permute.xlu0 %2866
        %2868 = vrot.lane.b32.xlu0 %v2395, 80
        %v2869 = vpop.permute.xlu0 %2868
        %2870 = vrot.lane.b32.xlu0 %v2394, 80
        %v2871 = vpop.permute.xlu0 %2870
        %2872 = vrot.lane.b32.xlu0 %v2393, 80
        %v2873 = vpop.permute.xlu0 %2872
        %2874 = vrot.lane.b32.xlu0 %v2392, 80
        %v2875 = vpop.permute.xlu0 %2874
        %2876 = vrot.lane.b32.xlu0 %v2391, 80
        %v2877 = vpop.permute.xlu0 %2876
        %2878 = vrot.lane.b32.xlu0 %v2390, 80
        %v2879 = vpop.permute.xlu0 %2878
        %2880 = vrot.lane.b32.xlu0 %v2389, 80
        %v2881 = vpop.permute.xlu0 %2880
        %2882 = vrot.lane.b32.xlu0 %v2388, 80
        %v2883 = vpop.permute.xlu0 %2882
        %2884 = vrot.lane.b32.xlu0 %v2387, 80
        %v2885 = vpop.permute.xlu0 %2884
        %2886 = vrot.lane.b32.xlu0 %v2386, 80
        %v2887 = vpop.permute.xlu0 %2886
        %2888 = vrot.lane.b32.xlu0 %v2385, 80
        %v2889 = vpop.permute.xlu0 %2888
        %2890 = vrot.lane.b32.xlu0 %v2384, 80
        %v2891 = vpop.permute.xlu0 %2890
        %2892 = vrot.lane.b32.xlu0 %v2383, 80
        %v2893 = vpop.permute.xlu0 %2892
        %2894 = vrot.lane.b32.xlu0 %v2382, 80
        %v2895 = vpop.permute.xlu0 %2894
        %2896 = vrot.lane.b32.xlu0 %v2381, 80
        %v2897 = vpop.permute.xlu0 %2896
        %2898 = vrot.lane.b32.xlu0 %v2380, 80
        %v2899 = vpop.permute.xlu0 %2898
        %2900 = vrot.lane.b32.xlu0 %v2379, 80
        %v2901 = vpop.permute.xlu0 %2900
        %2902 = vrot.lane.b32.xlu0 %v2378, 80
        %v2903 = vpop.permute.xlu0 %2902
        %2904 = vrot.lane.b32.xlu0 %v2377, 80
        %v2905 = vpop.permute.xlu0 %2904
        %2906 = vrot.lane.b32.xlu0 %v2376, 80
        %v2907 = vpop.permute.xlu0 %2906
        %2908 = vrot.lane.b32.xlu0 %v2375, 80
        %v2909 = vpop.permute.xlu0 %2908
        %2910 = vrot.lane.b32.xlu0 %v2374, 80
        %v2911 = vpop.permute.xlu0 %2910
        %2912 = vrot.lane.b32.xlu0 %v2373, 80
        %v2913 = vpop.permute.xlu0 %2912
        %2914 = vrot.lane.b32.xlu0 %v2404, 80
        %v2915 = vpop.permute.xlu0 %2914
        %2916 = vrot.lane.b32.xlu0 %v2403, 80
        %v2917 = vpop.permute.xlu0 %2916
        %2918 = vrot.lane.b32.xlu0 %v2402, 80
        %v2919 = vpop.permute.xlu0 %2918
        %vm2952 = vcmask 786048
        %2953 = vst.msk [vmem:[#allocation3] sm:$0xff] %vm2952, %v2857
        %2954 = vst.msk [vmem:[#allocation3 + $0x10] sm:$0xff] %vm2952, %v2859
        %2955 = vst.msk [vmem:[#allocation3 + $0x20] sm:$0xff] %vm2952, %v2861
        %2956 = vst.msk [vmem:[#allocation3 + $0x30] sm:$0xff] %vm2952, %v2863
        %2957 = vst.msk [vmem:[#allocation3 + $0x40] sm:$0xff] %vm2952, %v2865
        %2958 = vst.msk [vmem:[#allocation3 + $0x50] sm:$0xff] %vm2952, %v2867
        %2959 = vst.msk [vmem:[#allocation3 + $0x60] sm:$0xff] %vm2952, %v2869
        %2960 = vst.msk [vmem:[#allocation3 + $0x70] sm:$0xff] %vm2952, %v2871
        %2961 = vst.msk [vmem:[#allocation3 + $0x80] sm:$0xff] %vm2952, %v2873
        %2962 = vst.msk [vmem:[#allocation3 + $0x90] sm:$0xff] %vm2952, %v2875
        %2963 = vst.msk [vmem:[#allocation3 + $0xa0] sm:$0xff] %vm2952, %v2877
        %2964 = vst.msk [vmem:[#allocation3 + $0xb0] sm:$0xff] %vm2952, %v2879
        %2965 = vst.msk [vmem:[#allocation3 + $0xc0] sm:$0xff] %vm2952, %v2881
        %2966 = vst.msk [vmem:[#allocation3 + $0xd0] sm:$0xff] %vm2952, %v2883
        %2967 = vst.msk [vmem:[#allocation3 + $0xe0] sm:$0xff] %vm2952, %v2885
        %2968 = vst.msk [vmem:[#allocation3 + $0xf0] sm:$0xff] %vm2952, %v2887
        %2969 = vst.msk [vmem:[#allocation3 + $0x100] sm:$0xff] %vm2952, %v2889
        %2970 = vst.msk [vmem:[#allocation3 + $0x110] sm:$0xff] %vm2952, %v2891
        %2971 = vst.msk [vmem:[#allocation3 + $0x120] sm:$0xff] %vm2952, %v2893
        %2972 = vst.msk [vmem:[#allocation3 + $0x130] sm:$0xff] %vm2952, %v2895
        %2973 = vst.msk [vmem:[#allocation3 + $0x140] sm:$0xff] %vm2952, %v2897
        %2974 = vst.msk [vmem:[#allocation3 + $0x150] sm:$0xff] %vm2952, %v2899
        %2975 = vst.msk [vmem:[#allocation3 + $0x160] sm:$0xff] %vm2952, %v2901
        %2976 = vst.msk [vmem:[#allocation3 + $0x170] sm:$0xff] %vm2952, %v2903
        %2977 = vst.msk [vmem:[#allocation3 + $0x180] sm:$0xff] %vm2952, %v2905
        %2978 = vst.msk [vmem:[#allocation3 + $0x190] sm:$0xff] %vm2952, %v2907
        %2979 = vst.msk [vmem:[#allocation3 + $0x1a0] sm:$0xff] %vm2952, %v2909
        %2980 = vst.msk [vmem:[#allocation3 + $0x1b0] sm:$0xff] %vm2952, %v2911
        %2981 = vst.msk [vmem:[#allocation3 + $0x1c0] sm:$0xff] %vm2952, %v2913
        %2982 = vst.msk [vmem:[#allocation3 + $0x1d0] sm:$0xff] %vm2952, %v2915
        %2983 = vst.msk [vmem:[#allocation3 + $0x1e0] sm:$0xff] %vm2952, %v2917
        %2984 = vst.msk [vmem:[#allocation3 + $0x1f0] sm:$0xff] %vm2952, %v2919
        %2985 = vrot.lane.b32.xlu0 %v2055, 96
        %v2986 = vpop.permute.xlu0 %2985
        %2987 = vrot.lane.b32.xlu0 %v2056, 96
        %v2988 = vpop.permute.xlu0 %2987
        %2989 = vrot.lane.b32.xlu0 %v2057, 96
        %v2990 = vpop.permute.xlu0 %2989
        %2991 = vrot.lane.b32.xlu0 %v2058, 96
        %v2992 = vpop.permute.xlu0 %2991
        %2993 = vrot.lane.b32.xlu0 %v2059, 96
        %v2994 = vpop.permute.xlu0 %2993
        %2995 = vrot.lane.b32.xlu0 %v2060, 96
        %v2996 = vpop.permute.xlu0 %2995
        %2997 = vrot.lane.b32.xlu0 %v2061, 96
        %v2998 = vpop.permute.xlu0 %2997
        %2999 = vrot.lane.b32.xlu0 %v2062, 96
        %v3000 = vpop.permute.xlu0 %2999
        %3001 = vrot.lane.b32.xlu0 %v2063, 96
        %v3002 = vpop.permute.xlu0 %3001
        %3003 = vrot.lane.b32.xlu0 %v2064, 96
        %v3004 = vpop.permute.xlu0 %3003
        %3005 = vrot.lane.b32.xlu0 %v2065, 96
        %v3006 = vpop.permute.xlu0 %3005
        %3007 = vrot.lane.b32.xlu0 %v2066, 96
        %v3008 = vpop.permute.xlu0 %3007
        %3009 = vrot.lane.b32.xlu0 %v2067, 96
        %v3010 = vpop.permute.xlu0 %3009
        %3011 = vrot.lane.b32.xlu0 %v2068, 96
        %v3012 = vpop.permute.xlu0 %3011
        %3013 = vrot.lane.b32.xlu0 %v2069, 96
        %v3014 = vpop.permute.xlu0 %3013
        %3015 = vrot.lane.b32.xlu0 %v2070, 96
        %v3016 = vpop.permute.xlu0 %3015
        %3017 = vrot.lane.b32.xlu0 %v2071, 96
        %v3018 = vpop.permute.xlu0 %3017
        %3019 = vrot.lane.b32.xlu0 %v2072, 96
        %v3020 = vpop.permute.xlu0 %3019
        %3021 = vrot.lane.b32.xlu0 %v2073, 96
        %v3022 = vpop.permute.xlu0 %3021
        %3023 = vrot.lane.b32.xlu0 %v2074, 96
        %v3024 = vpop.permute.xlu0 %3023
        %3025 = vrot.lane.b32.xlu0 %v2075, 96
        %v3026 = vpop.permute.xlu0 %3025
        %3027 = vrot.lane.b32.xlu0 %v2076, 96
        %v3028 = vpop.permute.xlu0 %3027
        %3029 = vrot.lane.b32.xlu0 %v2077, 96
        %v3030 = vpop.permute.xlu0 %3029
        %3031 = vrot.lane.b32.xlu0 %v2078, 96
        %v3032 = vpop.permute.xlu0 %3031
        %3033 = vrot.lane.b32.xlu0 %v2079, 96
        %v3034 = vpop.permute.xlu0 %3033
        %3035 = vrot.lane.b32.xlu0 %v2080, 96
        %v3036 = vpop.permute.xlu0 %3035
        %3037 = vrot.lane.b32.xlu0 %v2081, 96
        %v3038 = vpop.permute.xlu0 %3037
        %3039 = vrot.lane.b32.xlu0 %v2082, 96
        %v3040 = vpop.permute.xlu0 %3039
        %3041 = vrot.lane.b32.xlu0 %v2051, 96
        %v3042 = vpop.permute.xlu0 %3041
        %3043 = vrot.lane.b32.xlu0 %v2052, 96
        %v3044 = vpop.permute.xlu0 %3043
        %3045 = vrot.lane.b32.xlu0 %v2053, 96
        %v3046 = vpop.permute.xlu0 %3045
        %3047 = vrot.lane.b32.xlu0 %v2054, 96
        %v3048 = vpop.permute.xlu0 %3047
        %vm3081 = vcmask 917248
        %3082 = vst.msk [vmem:[#allocation3] sm:$0xff] %vm3081, %v2986
        %3083 = vst.msk [vmem:[#allocation3 + $0x10] sm:$0xff] %vm3081, %v2988
        %3084 = vst.msk [vmem:[#allocation3 + $0x20] sm:$0xff] %vm3081, %v2990
        %3085 = vst.msk [vmem:[#allocation3 + $0x30] sm:$0xff] %vm3081, %v2992
        %3086 = vst.msk [vmem:[#allocation3 + $0x40] sm:$0xff] %vm3081, %v2994
        %3087 = vst.msk [vmem:[#allocation3 + $0x50] sm:$0xff] %vm3081, %v2996
        %3088 = vst.msk [vmem:[#allocation3 + $0x60] sm:$0xff] %vm3081, %v2998
        %3089 = vst.msk [vmem:[#allocation3 + $0x70] sm:$0xff] %vm3081, %v3000
        %3090 = vst.msk [vmem:[#allocation3 + $0x80] sm:$0xff] %vm3081, %v3002
        %3091 = vst.msk [vmem:[#allocation3 + $0x90] sm:$0xff] %vm3081, %v3004
        %3092 = vst.msk [vmem:[#allocation3 + $0xa0] sm:$0xff] %vm3081, %v3006
        %3093 = vst.msk [vmem:[#allocation3 + $0xb0] sm:$0xff] %vm3081, %v3008
        %3094 = vst.msk [vmem:[#allocation3 + $0xc0] sm:$0xff] %vm3081, %v3010
        %3095 = vst.msk [vmem:[#allocation3 + $0xd0] sm:$0xff] %vm3081, %v3012
        %3096 = vst.msk [vmem:[#allocation3 + $0xe0] sm:$0xff] %vm3081, %v3014
        %3097 = vst.msk [vmem:[#allocation3 + $0xf0] sm:$0xff] %vm3081, %v3016
        %3098 = vst.msk [vmem:[#allocation3 + $0x100] sm:$0xff] %vm3081, %v3018
        %3099 = vst.msk [vmem:[#allocation3 + $0x110] sm:$0xff] %vm3081, %v3020
        %3100 = vst.msk [vmem:[#allocation3 + $0x120] sm:$0xff] %vm3081, %v3022
        %3101 = vst.msk [vmem:[#allocation3 + $0x130] sm:$0xff] %vm3081, %v3024
        %3102 = vst.msk [vmem:[#allocation3 + $0x140] sm:$0xff] %vm3081, %v3026
        %3103 = vst.msk [vmem:[#allocation3 + $0x150] sm:$0xff] %vm3081, %v3028
        %3104 = vst.msk [vmem:[#allocation3 + $0x160] sm:$0xff] %vm3081, %v3030
        %3105 = vst.msk [vmem:[#allocation3 + $0x170] sm:$0xff] %vm3081, %v3032
        %3106 = vst.msk [vmem:[#allocation3 + $0x180] sm:$0xff] %vm3081, %v3034
        %3107 = vst.msk [vmem:[#allocation3 + $0x190] sm:$0xff] %vm3081, %v3036
        %3108 = vst.msk [vmem:[#allocation3 + $0x1a0] sm:$0xff] %vm3081, %v3038
        %3109 = vst.msk [vmem:[#allocation3 + $0x1b0] sm:$0xff] %vm3081, %v3040
        %3110 = vst.msk [vmem:[#allocation3 + $0x1c0] sm:$0xff] %vm3081, %v3042
        %3111 = vst.msk [vmem:[#allocation3 + $0x1d0] sm:$0xff] %vm3081, %v3044
        %3112 = vst.msk [vmem:[#allocation3 + $0x1e0] sm:$0xff] %vm3081, %v3046
        %3113 = vst.msk [vmem:[#allocation3 + $0x1f0] sm:$0xff] %vm3081, %v3048
        %3114 = vrot.lane.b32.xlu0 %v2174, 112
        %v3115 = vpop.permute.xlu0 %3114
        %3116 = vrot.lane.b32.xlu0 %v2173, 112
        %v3117 = vpop.permute.xlu0 %3116
        %3118 = vrot.lane.b32.xlu0 %v2172, 112
        %v3119 = vpop.permute.xlu0 %3118
        %3120 = vrot.lane.b32.xlu0 %v2171, 112
        %v3121 = vpop.permute.xlu0 %3120
        %3122 = vrot.lane.b32.xlu0 %v2170, 112
        %v3123 = vpop.permute.xlu0 %3122
        %3124 = vrot.lane.b32.xlu0 %v2169, 112
        %v3125 = vpop.permute.xlu0 %3124
        %3126 = vrot.lane.b32.xlu0 %v2168, 112
        %v3127 = vpop.permute.xlu0 %3126
        %3128 = vrot.lane.b32.xlu0 %v2167, 112
        %v3129 = vpop.permute.xlu0 %3128
        %3130 = vrot.lane.b32.xlu0 %v2166, 112
        %v3131 = vpop.permute.xlu0 %3130
        %3132 = vrot.lane.b32.xlu0 %v2165, 112
        %v3133 = vpop.permute.xlu0 %3132
        %3134 = vrot.lane.b32.xlu0 %v2164, 112
        %v3135 = vpop.permute.xlu0 %3134
        %3136 = vrot.lane.b32.xlu0 %v2163, 112
        %v3137 = vpop.permute.xlu0 %3136
        %3138 = vrot.lane.b32.xlu0 %v2162, 112
        %v3139 = vpop.permute.xlu0 %3138
        %3140 = vrot.lane.b32.xlu0 %v2161, 112
        %v3141 = vpop.permute.xlu0 %3140
        %3142 = vrot.lane.b32.xlu0 %v2160, 112
        %v3143 = vpop.permute.xlu0 %3142
        %3144 = vrot.lane.b32.xlu0 %v2159, 112
        %v3145 = vpop.permute.xlu0 %3144
        %3146 = vrot.lane.b32.xlu0 %v2158, 112
        %v3147 = vpop.permute.xlu0 %3146
        %3148 = vrot.lane.b32.xlu0 %v2157, 112
        %v3149 = vpop.permute.xlu0 %3148
        %3150 = vrot.lane.b32.xlu0 %v2156, 112
        %v3151 = vpop.permute.xlu0 %3150
        %3152 = vrot.lane.b32.xlu0 %v2155, 112
        %v3153 = vpop.permute.xlu0 %3152
        %3154 = vrot.lane.b32.xlu0 %v2154, 112
        %v3155 = vpop.permute.xlu0 %3154
        %3156 = vrot.lane.b32.xlu0 %v2153, 112
        %v3157 = vpop.permute.xlu0 %3156
        %3158 = vrot.lane.b32.xlu0 %v2152, 112
        %v3159 = vpop.permute.xlu0 %3158
        %3160 = vrot.lane.b32.xlu0 %v2151, 112
        %v3161 = vpop.permute.xlu0 %3160
        %3162 = vrot.lane.b32.xlu0 %v2150, 112
        %v3163 = vpop.permute.xlu0 %3162
        %3164 = vrot.lane.b32.xlu0 %v2149, 112
        %v3165 = vpop.permute.xlu0 %3164
        %3166 = vrot.lane.b32.xlu0 %v2148, 112
        %v3167 = vpop.permute.xlu0 %3166
        %3168 = vrot.lane.b32.xlu0 %v2179, 112
        %v3169 = vpop.permute.xlu0 %3168
        %3170 = vrot.lane.b32.xlu0 %v2178, 112
        %v3171 = vpop.permute.xlu0 %3170
        %3172 = vrot.lane.b32.xlu0 %v2177, 112
        %v3173 = vpop.permute.xlu0 %3172
        %3174 = vrot.lane.b32.xlu0 %v2176, 112
        %v3175 = vpop.permute.xlu0 %3174
        %3176 = vrot.lane.b32.xlu0 %v2175, 112
        %v3177 = vpop.permute.xlu0 %3176
        %vm3210 = vcmask 1048448
        %3211 = vst.msk [vmem:[#allocation3] sm:$0xff] %vm3210, %v3115
        %3212 = vst.msk [vmem:[#allocation3 + $0x10] sm:$0xff] %vm3210, %v3117
        %3213 = vst.msk [vmem:[#allocation3 + $0x20] sm:$0xff] %vm3210, %v3119
        %3214 = vst.msk [vmem:[#allocation3 + $0x30] sm:$0xff] %vm3210, %v3121
        %3215 = vst.msk [vmem:[#allocation3 + $0x40] sm:$0xff] %vm3210, %v3123
        %3216 = vst.msk [vmem:[#allocation3 + $0x50] sm:$0xff] %vm3210, %v3125
        %3217 = vst.msk [vmem:[#allocation3 + $0x60] sm:$0xff] %vm3210, %v3127
        %3218 = vst.msk [vmem:[#allocation3 + $0x70] sm:$0xff] %vm3210, %v3129
        %3219 = vst.msk [vmem:[#allocation3 + $0x80] sm:$0xff] %vm3210, %v3131
        %3220 = vst.msk [vmem:[#allocation3 + $0x90] sm:$0xff] %vm3210, %v3133
        %3221 = vst.msk [vmem:[#allocation3 + $0xa0] sm:$0xff] %vm3210, %v3135
        %3222 = vst.msk [vmem:[#allocation3 + $0xb0] sm:$0xff] %vm3210, %v3137
        %3223 = vst.msk [vmem:[#allocation3 + $0xc0] sm:$0xff] %vm3210, %v3139
        %3224 = vst.msk [vmem:[#allocation3 + $0xd0] sm:$0xff] %vm3210, %v3141
        %3225 = vst.msk [vmem:[#allocation3 + $0xe0] sm:$0xff] %vm3210, %v3143
        %3226 = vst.msk [vmem:[#allocation3 + $0xf0] sm:$0xff] %vm3210, %v3145
        %3227 = vst.msk [vmem:[#allocation3 + $0x100] sm:$0xff] %vm3210, %v3147
        %3228 = vst.msk [vmem:[#allocation3 + $0x110] sm:$0xff] %vm3210, %v3149
        %3229 = vst.msk [vmem:[#allocation3 + $0x120] sm:$0xff] %vm3210, %v3151
        %3230 = vst.msk [vmem:[#allocation3 + $0x130] sm:$0xff] %vm3210, %v3153
        %3231 = vst.msk [vmem:[#allocation3 + $0x140] sm:$0xff] %vm3210, %v3155
        %3232 = vst.msk [vmem:[#allocation3 + $0x150] sm:$0xff] %vm3210, %v3157
        %3233 = vst.msk [vmem:[#allocation3 + $0x160] sm:$0xff] %vm3210, %v3159
        %3234 = vst.msk [vmem:[#allocation3 + $0x170] sm:$0xff] %vm3210, %v3161
        %3235 = vst.msk [vmem:[#allocation3 + $0x180] sm:$0xff] %vm3210, %v3163
        %3236 = vst.msk [vmem:[#allocation3 + $0x190] sm:$0xff] %vm3210, %v3165
        %3237 = vst.msk [vmem:[#allocation3 + $0x1a0] sm:$0xff] %vm3210, %v3167
        %3238 = vst.msk [vmem:[#allocation3 + $0x1b0] sm:$0xff] %vm3210, %v3169
        %3239 = vst.msk [vmem:[#allocation3 + $0x1c0] sm:$0xff] %vm3210, %v3171
        %3240 = vst.msk [vmem:[#allocation3 + $0x1d0] sm:$0xff] %vm3210, %v3173
        %3241 = vst.msk [vmem:[#allocation3 + $0x1e0] sm:$0xff] %vm3210, %v3175
        %3242 = vst.msk [vmem:[#allocation3 + $0x1f0] sm:$0xff] %vm3210, %v3177
        %3243 = vst.msk [vmem:[#allocation3 + $0x8] sm:$0xff] %vm2083, %v2399
        %3244 = vst.msk [vmem:[#allocation3 + $0x18] sm:$0xff] %vm2083, %v2398
        %3245 = vst.msk [vmem:[#allocation3 + $0x28] sm:$0xff] %vm2083, %v2397
        %3246 = vst.msk [vmem:[#allocation3 + $0x38] sm:$0xff] %vm2083, %v2396
        %3247 = vst.msk [vmem:[#allocation3 + $0x48] sm:$0xff] %vm2083, %v2395
        %3248 = vst.msk [vmem:[#allocation3 + $0x58] sm:$0xff] %vm2083, %v2394
        %3249 = vst.msk [vmem:[#allocation3 + $0x68] sm:$0xff] %vm2083, %v2393
        %3250 = vst.msk [vmem:[#allocation3 + $0x78] sm:$0xff] %vm2083, %v2392
        %3251 = vst.msk [vmem:[#allocation3 + $0x88] sm:$0xff] %vm2083, %v2391
        %3252 = vst.msk [vmem:[#allocation3 + $0x98] sm:$0xff] %vm2083, %v2390
        %3253 = vst.msk [vmem:[#allocation3 + $0xa8] sm:$0xff] %vm2083, %v2389
        %3254 = vst.msk [vmem:[#allocation3 + $0xb8] sm:$0xff] %vm2083, %v2388
        %3255 = vst.msk [vmem:[#allocation3 + $0xc8] sm:$0xff] %vm2083, %v2387
        %3256 = vst.msk [vmem:[#allocation3 + $0xd8] sm:$0xff] %vm2083, %v2386
        %3257 = vst.msk [vmem:[#allocation3 + $0xe8] sm:$0xff] %vm2083, %v2385
        %3258 = vst.msk [vmem:[#allocation3 + $0xf8] sm:$0xff] %vm2083, %v2384
        %3259 = vst.msk [vmem:[#allocation3 + $0x108] sm:$0xff] %vm2083, %v2383
        %3260 = vst.msk [vmem:[#allocation3 + $0x118] sm:$0xff] %vm2083, %v2382
        %3261 = vst.msk [vmem:[#allocation3 + $0x128] sm:$0xff] %vm2083, %v2381
        %3262 = vst.msk [vmem:[#allocation3 + $0x138] sm:$0xff] %vm2083, %v2380
        %3263 = vst.msk [vmem:[#allocation3 + $0x148] sm:$0xff] %vm2083, %v2379
        %3264 = vst.msk [vmem:[#allocation3 + $0x158] sm:$0xff] %vm2083, %v2378
        %3265 = vst.msk [vmem:[#allocation3 + $0x168] sm:$0xff] %vm2083, %v2377
        %3266 = vst.msk [vmem:[#allocation3 + $0x178] sm:$0xff] %vm2083, %v2376
        %3267 = vst.msk [vmem:[#allocation3 + $0x188] sm:$0xff] %vm2083, %v2375
        %3268 = vst.msk [vmem:[#allocation3 + $0x198] sm:$0xff] %vm2083, %v2374
        %3269 = vst.msk [vmem:[#allocation3 + $0x1a8] sm:$0xff] %vm2083, %v2373
        %3270 = vst.msk [vmem:[#allocation3 + $0x1b8] sm:$0xff] %vm2083, %v2404
        %3271 = vst.msk [vmem:[#allocation3 + $0x1c8] sm:$0xff] %vm2083, %v2403
        %3272 = vst.msk [vmem:[#allocation3 + $0x1d8] sm:$0xff] %vm2083, %v2402
        %3273 = vst.msk [vmem:[#allocation3 + $0x1e8] sm:$0xff] %vm2083, %v2401
        %3274 = vst.msk [vmem:[#allocation3 + $0x1f8] sm:$0xff] %vm2083, %v2400
        %v3275 = vld [vmem:[#allocation3] sm:$0xff]
        %v3276 = vld [vmem:[#allocation3 + $0x8] sm:$0xff]
        %v3277 = vld [vmem:[#allocation3 + $0x10] sm:$0xff]
        %v3278 = vld [vmem:[#allocation3 + $0x18] sm:$0xff]
        %v3279 = vld [vmem:[#allocation3 + $0x20] sm:$0xff]
        %v3280 = vld [vmem:[#allocation3 + $0x28] sm:$0xff]
        %v3281 = vld [vmem:[#allocation3 + $0x30] sm:$0xff]
        %v3282 = vld [vmem:[#allocation3 + $0x38] sm:$0xff]
        %v3283 = vld [vmem:[#allocation3 + $0x40] sm:$0xff]
        %v3284 = vld [vmem:[#allocation3 + $0x48] sm:$0xff]
        %v3285 = vld [vmem:[#allocation3 + $0x50] sm:$0xff]
        %v3286 = vld [vmem:[#allocation3 + $0x58] sm:$0xff]
        %v3287 = vld [vmem:[#allocation3 + $0x60] sm:$0xff]
        %v3288 = vld [vmem:[#allocation3 + $0x68] sm:$0xff]
        %v3289 = vld [vmem:[#allocation3 + $0x70] sm:$0xff]
        %v3290 = vld [vmem:[#allocation3 + $0x78] sm:$0xff]
        %v3291 = vld [vmem:[#allocation3 + $0x80] sm:$0xff]
        %v3292 = vld [vmem:[#allocation3 + $0x88] sm:$0xff]
        %v3293 = vld [vmem:[#allocation3 + $0x90] sm:$0xff]
        %v3294 = vld [vmem:[#allocation3 + $0x98] sm:$0xff]
        %v3295 = vld [vmem:[#allocation3 + $0xa0] sm:$0xff]
        %v3296 = vld [vmem:[#allocation3 + $0xa8] sm:$0xff]
        %v3297 = vld [vmem:[#allocation3 + $0xb0] sm:$0xff]
        %v3298 = vld [vmem:[#allocation3 + $0xb8] sm:$0xff]
        %v3299 = vld [vmem:[#allocation3 + $0xc0] sm:$0xff]
        %v3300 = vld [vmem:[#allocation3 + $0xc8] sm:$0xff]
        %v3301 = vld [vmem:[#allocation3 + $0xd0] sm:$0xff]
        %v3302 = vld [vmem:[#allocation3 + $0xd8] sm:$0xff]
        %v3303 = vld [vmem:[#allocation3 + $0xe0] sm:$0xff]
        %v3304 = vld [vmem:[#allocation3 + $0xe8] sm:$0xff]
        %v3305 = vld [vmem:[#allocation3 + $0xf0] sm:$0xff]
        %v3306 = vld [vmem:[#allocation3 + $0xf8] sm:$0xff]
        %v3307 = vld [vmem:[#allocation3 + $0x100] sm:$0xff]
        %v3308 = vld [vmem:[#allocation3 + $0x108] sm:$0xff]
        %v3309 = vld [vmem:[#allocation3 + $0x110] sm:$0xff]
        %v3310 = vld [vmem:[#allocation3 + $0x118] sm:$0xff]
        %v3311 = vld [vmem:[#allocation3 + $0x120] sm:$0xff]
        %v3312 = vld [vmem:[#allocation3 + $0x128] sm:$0xff]
        %v3313 = vld [vmem:[#allocation3 + $0x130] sm:$0xff]
        %v3314 = vld [vmem:[#allocation3 + $0x138] sm:$0xff]
        %v3315 = vld [vmem:[#allocation3 + $0x140] sm:$0xff]
        %v3316 = vld [vmem:[#allocation3 + $0x148] sm:$0xff]
        %v3317 = vld [vmem:[#allocation3 + $0x150] sm:$0xff]
        %v3318 = vld [vmem:[#allocation3 + $0x158] sm:$0xff]
        %v3319 = vld [vmem:[#allocation3 + $0x160] sm:$0xff]
        %v3320 = vld [vmem:[#allocation3 + $0x168] sm:$0xff]
        %v3321 = vld [vmem:[#allocation3 + $0x170] sm:$0xff]
        %v3322 = vld [vmem:[#allocation3 + $0x178] sm:$0xff]
        %v3323 = vld [vmem:[#allocation3 + $0x180] sm:$0xff]
        %v3324 = vld [vmem:[#allocation3 + $0x188] sm:$0xff]
        %v3325 = vld [vmem:[#allocation3 + $0x190] sm:$0xff]
        %v3326 = vld [vmem:[#allocation3 + $0x198] sm:$0xff]
        %v3327 = vld [vmem:[#allocation3 + $0x1a0] sm:$0xff]
        %v3328 = vld [vmem:[#allocation3 + $0x1a8] sm:$0xff]
        %v3329 = vld [vmem:[#allocation3 + $0x1b0] sm:$0xff]
        %v3330 = vld [vmem:[#allocation3 + $0x1b8] sm:$0xff]
        %v3331 = vld [vmem:[#allocation3 + $0x1c0] sm:$0xff]
        %v3332 = vld [vmem:[#allocation3 + $0x1c8] sm:$0xff]
        %v3333 = vld [vmem:[#allocation3 + $0x1d0] sm:$0xff]
        %v3334 = vld [vmem:[#allocation3 + $0x1d8] sm:$0xff]
        %v3335 = vld [vmem:[#allocation3 + $0x1e0] sm:$0xff]
        %v3336 = vld [vmem:[#allocation3 + $0x1e8] sm:$0xff]
        %v3337 = vld [vmem:[#allocation3 + $0x1f0] sm:$0xff]
        %v3338 = vld [vmem:[#allocation3 + $0x1f8] sm:$0xff]
        %v3339 = vld [vmem:[%s3] sm:$0xff]
        %v3340 = vld [vmem:[%s3 + $0x8] sm:$0xff]
        %v3341 = vld [vmem:[%s3 + $0x10] sm:$0xff]
        %v3342 = vld [vmem:[%s3 + $0x18] sm:$0xff]
        %v3343 = vld [vmem:[%s3 + $0x20] sm:$0xff]
        %v3344 = vld [vmem:[%s3 + $0x28] sm:$0xff]
        %v3345 = vld [vmem:[%s3 + $0x30] sm:$0xff]
        %v3346 = vld [vmem:[%s3 + $0x38] sm:$0xff]
        %v3347 = vld [vmem:[%s3 + $0x40] sm:$0xff]
        %v3348 = vld [vmem:[%s3 + $0x48] sm:$0xff]
        %v3349 = vld [vmem:[%s3 + $0x50] sm:$0xff]
        %v3350 = vld [vmem:[%s3 + $0x58] sm:$0xff]
        %v3351 = vld [vmem:[%s3 + $0x60] sm:$0xff]
        %v3352 = vld [vmem:[%s3 + $0x68] sm:$0xff]
        %v3353 = vld [vmem:[%s3 + $0x70] sm:$0xff]
        %v3354 = vld [vmem:[%s3 + $0x78] sm:$0xff]
        %v3355 = vld [vmem:[%s3 + $0x80] sm:$0xff]
        %v3356 = vld [vmem:[%s3 + $0x88] sm:$0xff]
        %v3357 = vld [vmem:[%s4] sm:$0x1]
        %v3359 = vlaneseq
        %v3360 = vshrl.u32 %v3359, 7
        %v3361 = vsub.s32 0, %v3360
        %v3362 = vrot.slane %v3357, %v3361
        %v3365 = vsel %vm2083, %v3276, 0
        %v3368 = vsel %vm2083, %v3278, 0
        %v3371 = vsel %vm2083, %v3280, 0
        %v3374 = vsel %vm2083, %v3282, 0
        %v3377 = vsel %vm2083, %v3284, 0
        %v3380 = vsel %vm2083, %v3286, 0
        %v3383 = vsel %vm2083, %v3288, 0
        %v3386 = vsel %vm2083, %v3290, 0
        %v3389 = vsel %vm2083, %v3292, 0
        %v3392 = vsel %vm2083, %v3294, 0
        %v3395 = vsel %vm2083, %v3296, 0
        %v3398 = vsel %vm2083, %v3298, 0
        %v3401 = vsel %vm2083, %v3300, 0
        %v3404 = vsel %vm2083, %v3302, 0
        %v3407 = vsel %vm2083, %v3304, 0
        %v3410 = vsel %vm2083, %v3306, 0
        %v3413 = vsel %vm2083, %v3308, 0
        %v3416 = vsel %vm2083, %v3310, 0
        %v3419 = vsel %vm2083, %v3312, 0
        %v3422 = vsel %vm2083, %v3314, 0
        %v3425 = vsel %vm2083, %v3316, 0
        %v3428 = vsel %vm2083, %v3318, 0
        %v3431 = vsel %vm2083, %v3320, 0
        %v3434 = vsel %vm2083, %v3322, 0
        %v3437 = vsel %vm2083, %v3324, 0
        %v3440 = vsel %vm2083, %v3326, 0
        %v3443 = vsel %vm2083, %v3328, 0
        %v3446 = vsel %vm2083, %v3330, 0
        %v3449 = vsel %vm2083, %v3332, 0
        %v3452 = vsel %vm2083, %v3334, 0
        %v3455 = vsel %vm2083, %v3336, 0
        %v3458 = vsel %vm2083, %v3338, 0
        %3460 = vmatprep.subr.mxu0 0.0
        %3461 = vmatpush1.msra.mxu0 %v3339
        %3462 = vmatprep.subr.mxu0 0.0
        %3463 = vmatpush1.msra.mxu0 %v3340
        %3464 = vmatprep.subr.mxu0 0.0
        %3465 = vmatpush1.msra.mxu0 %v3341
        %3466 = vmatprep.subr.mxu0 0.0
        %3467 = vmatpush1.msra.mxu0 %v3342
        %3468 = vmatprep.subr.mxu0 0.0
        %3469 = vmatpush1.msra.mxu0 %v3343
        %3470 = vmatprep.subr.mxu0 0.0
        %3471 = vmatpush1.msra.mxu0 %v3344
        %3472 = vmatprep.subr.mxu0 0.0
        %3473 = vmatpush1.msra.mxu0 %v3345
        %3474 = vmatprep.subr.mxu0 0.0
        %3475 = vmatpush1.msra.mxu0 %v3346
        %3476 = vmatprep.subr.mxu0 0.0
        %3477 = vmatpush1.msra.mxu0 %v3347
        %3478 = vmatprep.subr.mxu0 0.0
        %3479 = vmatpush1.msra.mxu0 %v3348
        %3480 = vmatprep.subr.mxu0 0.0
        %3481 = vmatpush1.msra.mxu0 %v3349
        %3482 = vmatprep.subr.mxu0 0.0
        %3483 = vmatpush1.msra.mxu0 %v3350
        %3484 = vmatprep.subr.mxu0 0.0
        %3485 = vmatpush1.msra.mxu0 %v3351
        %3486 = vmatprep.subr.mxu0 0.0
        %3487 = vmatpush1.msra.mxu0 %v3352
        %3488 = vmatprep.subr.mxu0 0.0
        %3489 = vmatpush1.msra.mxu0 %v3353
        %3490 = vmatprep.subr.mxu0 0.0
        %3491 = vmatpush1.msra.mxu0 %v3354
        %3492 = vmatprep.subr.mxu0 0.0
        %3493 = vmatpush1.msra.mxu0 %v3355
        %3494 = vmatprep.subr.mxu0 0.0
        %3495 = vmatpush1.msra.mxu0 %v3356
        %3496 = vmatprep.subr.mxu0 0.0
        %3497 = vmatpush1.msra.mxu0 0.0
        %3498 = vmatprep.subr.mxu0 0.0
        %3499 = vmatpush1.msra.mxu0 0.0
        %3500 = vmatprep.subr.mxu0 0.0
        %3501 = vmatpush1.msra.mxu0 0.0
        %3502 = vmatprep.subr.mxu0 0.0
        %3503 = vmatpush1.msra.mxu0 0.0
        %3504 = vmatprep.subr.mxu0 0.0
        %3505 = vmatpush1.msra.mxu0 0.0
        %3506 = vmatprep.subr.mxu0 0.0
        %3507 = vmatpush1.msra.mxu0 0.0
        %3508 = vmatprep.subr.mxu0 0.0
        %3509 = vmatpush1.msra.mxu0 0.0
        %3510 = vmatprep.subr.mxu0 0.0
        %3511 = vmatpush1.msra.mxu0 0.0
        %3512 = vmatprep.subr.mxu0 0.0
        %3513 = vmatpush1.msra.mxu0 0.0
        %3514 = vmatprep.subr.mxu0 0.0
        %3515 = vmatpush1.msra.mxu0 0.0
        %3516 = vmatprep.subr.mxu0 0.0
        %3517 = vmatpush1.msra.mxu0 0.0
        %3518 = vmatprep.subr.mxu0 0.0
        %3519 = vmatpush1.msra.mxu0 0.0
        %3520 = vmatprep.subr.mxu0 0.0
        %3521 = vmatpush1.msra.mxu0 0.0
        %3522 = vmatprep.subr.mxu0 0.0
        %3523 = vmatpush1.msra.mxu0 0.0
        %3524 = vmatprep.mubr.f32.mxu0 %v3365
        %3525 = vmatmul.mubr.f32.gmra.mrb[0].mxu0 %v3275
        %v3526 = vpop.f32.mrb[0].mxu0
        %v3527 = vadd.f32 %v3362, %v3526
        %v3528 = vpop.f32.mrb[0].mxu0
        %3529 = vmatprep.mubr.f32.mxu0 %v3368
        %3530 = vmatmul.mubr.f32.gmra.mrb[0].mxu0 %v3277
        %v3531 = vpop.f32.mrb[0].mxu0
        %v3532 = vadd.f32 %v3362, %v3531
        %v3533 = vpop.f32.mrb[0].mxu0
        %3534 = vmatprep.mubr.f32.mxu0 %v3371
        %3535 = vmatmul.mubr.f32.gmra.mrb[0].mxu0 %v3279
        %v3536 = vpop.f32.mrb[0].mxu0
        %v3537 = vadd.f32 %v3362, %v3536
        %v3538 = vpop.f32.mrb[0].mxu0
        %3539 = vmatprep.mubr.f32.mxu0 %v3374
        %3540 = vmatmul.mubr.f32.gmra.mrb[0].mxu0 %v3281
        %v3541 = vpop.f32.mrb[0].mxu0
        %v3542 = vadd.f32 %v3362, %v3541
        %v3543 = vpop.f32.mrb[0].mxu0
        %3544 = vmatprep.mubr.f32.mxu0 %v3377
        %3545 = vmatmul.mubr.f32.gmra.mrb[0].mxu0 %v3283
        %v3546 = vpop.f32.mrb[0].mxu0
        %v3547 = vadd.f32 %v3362, %v3546
        %v3548 = vpop.f32.mrb[0].mxu0
        %3549 = vmatprep.mubr.f32.mxu0 %v3380
        %3550 = vmatmul.mubr.f32.gmra.mrb[0].mxu0 %v3285
        %v3551 = vpop.f32.mrb[0].mxu0
        %v3552 = vadd.f32 %v3362, %v3551
        %v3553 = vpop.f32.mrb[0].mxu0
        %3554 = vmatprep.mubr.f32.mxu0 %v3383
        %3555 = vmatmul.mubr.f32.gmra.mrb[0].mxu0 %v3287
        %v3556 = vpop.f32.mrb[0].mxu0
        %v3557 = vadd.f32 %v3362, %v3556
        %v3558 = vpop.f32.mrb[0].mxu0
        %3559 = vmatprep.mubr.f32.mxu0 %v3386
        %3560 = vmatmul.mubr.f32.gmra.mrb[0].mxu0 %v3289
        %v3561 = vpop.f32.mrb[0].mxu0
        %v3562 = vadd.f32 %v3362, %v3561
        %v3563 = vpop.f32.mrb[0].mxu0
        %3564 = vmatprep.mubr.f32.mxu0 %v3389
        %3565 = vmatmul.mubr.f32.gmra.mrb[0].mxu0 %v3291
        %v3566 = vpop.f32.mrb[0].mxu0
        %v3567 = vadd.f32 %v3362, %v3566
        %v3568 = vpop.f32.mrb[0].mxu0
        %3569 = vmatprep.mubr.f32.mxu0 %v3392
        %3570 = vmatmul.mubr.f32.gmra.mrb[0].mxu0 %v3293
        %v3571 = vpop.f32.mrb[0].mxu0
        %v3572 = vadd.f32 %v3362, %v3571
        %v3573 = vpop.f32.mrb[0].mxu0
        %3574 = vmatprep.mubr.f32.mxu0 %v3395
        %3575 = vmatmul.mubr.f32.gmra.mrb[0].mxu0 %v3295
        %v3576 = vpop.f32.mrb[0].mxu0
        %v3577 = vadd.f32 %v3362, %v3576
        %v3578 = vpop.f32.mrb[0].mxu0
        %3579 = vmatprep.mubr.f32.mxu0 %v3398
        %3580 = vmatmul.mubr.f32.gmra.mrb[0].mxu0 %v3297
        %v3581 = vpop.f32.mrb[0].mxu0
        %v3582 = vadd.f32 %v3362, %v3581
        %v3583 = vpop.f32.mrb[0].mxu0
        %3584 = vmatprep.mubr.f32.mxu0 %v3401
        %3585 = vmatmul.mubr.f32.gmra.mrb[0].mxu0 %v3299
        %v3586 = vpop.f32.mrb[0].mxu0
        %v3587 = vadd.f32 %v3362, %v3586
        %v3588 = vpop.f32.mrb[0].mxu0
        %3589 = vmatprep.mubr.f32.mxu0 %v3404
        %3590 = vmatmul.mubr.f32.gmra.mrb[0].mxu0 %v3301
        %v3591 = vpop.f32.mrb[0].mxu0
        %v3592 = vadd.f32 %v3362, %v3591
        %v3593 = vpop.f32.mrb[0].mxu0
        %3594 = vmatprep.mubr.f32.mxu0 %v3407
        %3595 = vmatmul.mubr.f32.gmra.mrb[0].mxu0 %v3303
        %v3596 = vpop.f32.mrb[0].mxu0
        %v3597 = vadd.f32 %v3362, %v3596
        %v3598 = vpop.f32.mrb[0].mxu0
        %3599 = vmatprep.mubr.f32.mxu0 %v3410
        %3600 = vmatmul.mubr.f32.gmra.mrb[0].mxu0 %v3305
        %v3601 = vpop.f32.mrb[0].mxu0
        %v3602 = vadd.f32 %v3362, %v3601
        %v3603 = vpop.f32.mrb[0].mxu0
        %3604 = vmatprep.mubr.f32.mxu0 %v3413
        %3605 = vmatmul.mubr.f32.gmra.mrb[0].mxu0 %v3307
        %v3606 = vpop.f32.mrb[0].mxu0
        %v3607 = vadd.f32 %v3362, %v3606
        %v3608 = vpop.f32.mrb[0].mxu0
        %3609 = vmatprep.mubr.f32.mxu0 %v3416
        %3610 = vmatmul.mubr.f32.gmra.mrb[0].mxu0 %v3309
        %v3611 = vpop.f32.mrb[0].mxu0
        %v3612 = vadd.f32 %v3362, %v3611
        %v3613 = vpop.f32.mrb[0].mxu0
        %3614 = vmatprep.mubr.f32.mxu0 %v3419
        %3615 = vmatmul.mubr.f32.gmra.mrb[0].mxu0 %v3311
        %v3616 = vpop.f32.mrb[0].mxu0
        %v3617 = vadd.f32 %v3362, %v3616
        %v3618 = vpop.f32.mrb[0].mxu0
        %3619 = vmatprep.mubr.f32.mxu0 %v3422
        %3620 = vmatmul.mubr.f32.gmra.mrb[0].mxu0 %v3313
        %v3621 = vpop.f32.mrb[0].mxu0
        %v3622 = vadd.f32 %v3362, %v3621
        %v3623 = vpop.f32.mrb[0].mxu0
        %3624 = vmatprep.mubr.f32.mxu0 %v3425
        %3625 = vmatmul.mubr.f32.gmra.mrb[0].mxu0 %v3315
        %v3626 = vpop.f32.mrb[0].mxu0
        %v3627 = vadd.f32 %v3362, %v3626
        %v3628 = vpop.f32.mrb[0].mxu0
        %3629 = vmatprep.mubr.f32.mxu0 %v3428
        %3630 = vmatmul.mubr.f32.gmra.mrb[0].mxu0 %v3317
        %v3631 = vpop.f32.mrb[0].mxu0
        %v3632 = vadd.f32 %v3362, %v3631
        %v3633 = vpop.f32.mrb[0].mxu0
        %3634 = vmatprep.mubr.f32.mxu0 %v3431
        %3635 = vmatmul.mubr.f32.gmra.mrb[0].mxu0 %v3319
        %v3636 = vpop.f32.mrb[0].mxu0
        %v3637 = vadd.f32 %v3362, %v3636
        %v3638 = vpop.f32.mrb[0].mxu0
        %3639 = vmatprep.mubr.f32.mxu0 %v3434
        %3640 = vmatmul.mubr.f32.gmra.mrb[0].mxu0 %v3321
        %v3641 = vpop.f32.mrb[0].mxu0
        %v3642 = vadd.f32 %v3362, %v3641
        %v3643 = vpop.f32.mrb[0].mxu0
        %3644 = vmatprep.mubr.f32.mxu0 %v3437
        %3645 = vmatmul.mubr.f32.gmra.mrb[0].mxu0 %v3323
        %v3646 = vpop.f32.mrb[0].mxu0
        %v3647 = vadd.f32 %v3362, %v3646
        %v3648 = vpop.f32.mrb[0].mxu0
        %3649 = vmatprep.mubr.f32.mxu0 %v3440
        %3650 = vmatmul.mubr.f32.gmra.mrb[0].mxu0 %v3325
        %v3651 = vpop.f32.mrb[0].mxu0
        %v3652 = vadd.f32 %v3362, %v3651
        %v3653 = vpop.f32.mrb[0].mxu0
        %3654 = vmatprep.mubr.f32.mxu0 %v3443
        %3655 = vmatmul.mubr.f32.gmra.mrb[0].mxu0 %v3327
        %v3656 = vpop.f32.mrb[0].mxu0
        %v3657 = vadd.f32 %v3362, %v3656
        %v3658 = vpop.f32.mrb[0].mxu0
        %3659 = vmatprep.mubr.f32.mxu0 %v3446
        %3660 = vmatmul.mubr.f32.gmra.mrb[0].mxu0 %v3329
        %v3661 = vpop.f32.mrb[0].mxu0
        %v3662 = vadd.f32 %v3362, %v3661
        %v3663 = vpop.f32.mrb[0].mxu0
        %3664 = vmatprep.mubr.f32.mxu0 %v3449
        %3665 = vmatmul.mubr.f32.gmra.mrb[0].mxu0 %v3331
        %v3666 = vpop.f32.mrb[0].mxu0
        %v3667 = vadd.f32 %v3362, %v3666
        %v3668 = vpop.f32.mrb[0].mxu0
        %3669 = vmatprep.mubr.f32.mxu0 %v3452
        %3670 = vmatmul.mubr.f32.gmra.mrb[0].mxu0 %v3333
        %v3671 = vpop.f32.mrb[0].mxu0
        %v3672 = vadd.f32 %v3362, %v3671
        %v3673 = vpop.f32.mrb[0].mxu0
        %3674 = vmatprep.mubr.f32.mxu0 %v3455
        %3675 = vmatmul.mubr.f32.gmra.mrb[0].mxu0 %v3335
        %v3676 = vpop.f32.mrb[0].mxu0
        %v3677 = vadd.f32 %v3362, %v3676
        %v3678 = vpop.f32.mrb[0].mxu0
        %3679 = vmatprep.mubr.f32.mxu0 %v3458
        %3680 = vmatmul.mubr.f32.gmra.mrb[0].mxu0 %v3337
        %v3681 = vpop.f32.mrb[0].mxu0
        %v3682 = vadd.f32 %v3362, %v3681
        %v3683 = vpop.f32.mrb[0].mxu0
        %3684 = vdwg.mxu0
        %v3685 = vmax.f32 %v3527, 0.0
        %v3686 = vmax.f32 %v3532, 0.0
        %v3687 = vmax.f32 %v3537, 0.0
        %v3688 = vmax.f32 %v3542, 0.0
        %v3689 = vmax.f32 %v3547, 0.0
        %v3690 = vmax.f32 %v3552, 0.0
        %v3691 = vmax.f32 %v3557, 0.0
        %v3692 = vmax.f32 %v3562, 0.0
        %v3693 = vmax.f32 %v3567, 0.0
        %v3694 = vmax.f32 %v3572, 0.0
        %v3695 = vmax.f32 %v3577, 0.0
        %v3696 = vmax.f32 %v3582, 0.0
        %v3697 = vmax.f32 %v3587, 0.0
        %v3698 = vmax.f32 %v3592, 0.0
        %v3699 = vmax.f32 %v3597, 0.0
        %v3700 = vmax.f32 %v3602, 0.0
        %v3701 = vmax.f32 %v3607, 0.0
        %v3702 = vmax.f32 %v3612, 0.0
        %v3703 = vmax.f32 %v3617, 0.0
        %v3704 = vmax.f32 %v3622, 0.0
        %v3705 = vmax.f32 %v3627, 0.0
        %v3706 = vmax.f32 %v3632, 0.0
        %v3707 = vmax.f32 %v3637, 0.0
        %v3708 = vmax.f32 %v3642, 0.0
        %v3709 = vmax.f32 %v3647, 0.0
        %v3710 = vmax.f32 %v3652, 0.0
        %v3711 = vmax.f32 %v3657, 0.0
        %v3712 = vmax.f32 %v3662, 0.0
        %v3713 = vmax.f32 %v3667, 0.0
        %v3714 = vmax.f32 %v3672, 0.0
        %v3715 = vmax.f32 %v3677, 0.0
        %v3716 = vmax.f32 %v3682, 0.0
        %v3717 = vld [vmem:[%s5] sm:$0xff]
        %v3718 = vld [vmem:[%s5 + $0x8] sm:$0xff]
        %v3719 = vld [vmem:[%s5 + $0x10] sm:$0xff]
        %v3720 = vld [vmem:[%s5 + $0x18] sm:$0xff]
        %v3721 = vld [vmem:[%s5 + $0x20] sm:$0xff]
        %v3722 = vld [vmem:[%s5 + $0x28] sm:$0xff]
        %v3723 = vld [vmem:[%s5 + $0x30] sm:$0xff]
        %v3724 = vld [vmem:[%s5 + $0x38] sm:$0xff]
        %v3725 = vld [vmem:[%s5 + $0x40] sm:$0xff]
        %v3726 = vld [vmem:[%s5 + $0x48] sm:$0xff]
        %v3727 = vld [vmem:[%s5 + $0x50] sm:$0xff]
        %v3728 = vld [vmem:[%s5 + $0x58] sm:$0xff]
        %v3729 = vld [vmem:[%s5 + $0x60] sm:$0xff]
        %v3730 = vld [vmem:[%s5 + $0x68] sm:$0xff]
        %v3731 = vld [vmem:[%s5 + $0x70] sm:$0xff]
        %v3732 = vld [vmem:[%s5 + $0x78] sm:$0xff]
        %v3733 = vld [vmem:[%s5 + $0x80] sm:$0xff]
        %v3734 = vld [vmem:[%s5 + $0x88] sm:$0xff]
        %v3735 = vld [vmem:[%s5 + $0x90] sm:$0xff]
        %v3736 = vld [vmem:[%s5 + $0x98] sm:$0xff]
        %v3737 = vld [vmem:[%s5 + $0xa0] sm:$0xff]
        %v3738 = vld [vmem:[%s5 + $0xa8] sm:$0xff]
        %v3739 = vld [vmem:[%s5 + $0xb0] sm:$0xff]
        %v3740 = vld [vmem:[%s5 + $0xb8] sm:$0xff]
        %v3741 = vld [vmem:[%s5 + $0xc0] sm:$0xff]
        %v3742 = vld [vmem:[%s5 + $0xc8] sm:$0xff]
        %v3743 = vld [vmem:[%s5 + $0xd0] sm:$0xff]
        %v3744 = vld [vmem:[%s5 + $0xd8] sm:$0xff]
        %v3745 = vld [vmem:[%s5 + $0xe0] sm:$0xff]
        %v3746 = vld [vmem:[%s5 + $0xe8] sm:$0xff]
        %v3747 = vld [vmem:[%s5 + $0xf0] sm:$0xff]
        %v3748 = vld [vmem:[%s5 + $0xf8] sm:$0xff]
        %v3749 = vmul.f32 %v3685, %v3717
        %v3750 = vmul.f32 %v3686, %v3718
        %v3751 = vmul.f32 %v3687, %v3719
        %v3752 = vmul.f32 %v3688, %v3720
        %v3753 = vmul.f32 %v3689, %v3721
        %v3754 = vmul.f32 %v3690, %v3722
        %v3755 = vmul.f32 %v3691, %v3723
        %v3756 = vmul.f32 %v3692, %v3724
        %v3757 = vmul.f32 %v3693, %v3725
        %v3758 = vmul.f32 %v3694, %v3726
        %v3759 = vmul.f32 %v3695, %v3727
        %v3760 = vmul.f32 %v3696, %v3728
        %v3761 = vmul.f32 %v3697, %v3729
        %v3762 = vmul.f32 %v3698, %v3730
        %v3763 = vmul.f32 %v3699, %v3731
        %v3764 = vmul.f32 %v3700, %v3732
        %v3765 = vmul.f32 %v3701, %v3733
        %v3766 = vmul.f32 %v3702, %v3734
        %v3767 = vmul.f32 %v3703, %v3735
        %v3768 = vmul.f32 %v3704, %v3736
        %v3769 = vmul.f32 %v3705, %v3737
        %v3770 = vmul.f32 %v3706, %v3738
        %v3771 = vmul.f32 %v3707, %v3739
        %v3772 = vmul.f32 %v3708, %v3740
        %v3773 = vmul.f32 %v3709, %v3741
        %v3774 = vmul.f32 %v3710, %v3742
        %v3775 = vmul.f32 %v3711, %v3743
        %v3776 = vmul.f32 %v3712, %v3744
        %v3777 = vmul.f32 %v3713, %v3745
        %v3778 = vmul.f32 %v3714, %v3746
        %v3779 = vmul.f32 %v3715, %v3747
        %v3780 = vmul.f32 %v3716, %v3748
        %vm3781 = vcmask 261120
        %v3782 = vsel %vm3781, %v3749, 0.0
        %v3783 = vsel %vm3781, %v3750, 0.0
        %v3784 = vadd.f32 %v3782, %v3783
        %v3785 = vsel %vm3781, %v3751, 0.0
        %v3786 = vadd.f32 %v3784, %v3785
        %v3787 = vsel %vm3781, %v3752, 0.0
        %v3788 = vadd.f32 %v3786, %v3787
        %v3789 = vsel %vm3781, %v3753, 0.0
        %v3790 = vadd.f32 %v3788, %v3789
        %v3791 = vsel %vm3781, %v3754, 0.0
        %v3792 = vadd.f32 %v3790, %v3791
        %v3793 = vsel %vm3781, %v3755, 0.0
        %v3794 = vadd.f32 %v3792, %v3793
        %v3795 = vsel %vm3781, %v3756, 0.0
        %v3796 = vadd.f32 %v3794, %v3795
        %v3797 = vsel %vm3781, %v3757, 0.0
        %v3798 = vadd.f32 %v3796, %v3797
        %v3799 = vsel %vm3781, %v3758, 0.0
        %v3800 = vadd.f32 %v3798, %v3799
        %v3801 = vsel %vm3781, %v3759, 0.0
        %v3802 = vadd.f32 %v3800, %v3801
        %v3803 = vsel %vm3781, %v3760, 0.0
        %v3804 = vadd.f32 %v3802, %v3803
        %v3805 = vsel %vm3781, %v3761, 0.0
        %v3806 = vadd.f32 %v3804, %v3805
        %v3807 = vsel %vm3781, %v3762, 0.0
        %v3808 = vadd.f32 %v3806, %v3807
        %v3809 = vsel %vm3781, %v3763, 0.0
        %v3810 = vadd.f32 %v3808, %v3809
        %v3811 = vsel %vm3781, %v3764, 0.0
        %v3812 = vadd.f32 %v3810, %v3811
        %v3813 = vsel %vm3781, %v3765, 0.0
        %v3814 = vadd.f32 %v3812, %v3813
        %v3815 = vsel %vm3781, %v3766, 0.0
        %v3816 = vadd.f32 %v3814, %v3815
        %v3817 = vsel %vm3781, %v3767, 0.0
        %v3818 = vadd.f32 %v3816, %v3817
        %v3819 = vsel %vm3781, %v3768, 0.0
        %v3820 = vadd.f32 %v3818, %v3819
        %v3821 = vsel %vm3781, %v3769, 0.0
        %v3822 = vadd.f32 %v3820, %v3821
        %v3823 = vsel %vm3781, %v3770, 0.0
        %v3824 = vadd.f32 %v3822, %v3823
        %v3825 = vsel %vm3781, %v3771, 0.0
        %v3826 = vadd.f32 %v3824, %v3825
        %v3827 = vsel %vm3781, %v3772, 0.0
        %v3828 = vadd.f32 %v3826, %v3827
        %v3829 = vsel %vm3781, %v3773, 0.0
        %v3830 = vadd.f32 %v3828, %v3829
        %v3831 = vsel %vm3781, %v3774, 0.0
        %v3832 = vadd.f32 %v3830, %v3831
        %v3833 = vsel %vm3781, %v3775, 0.0
        %v3834 = vadd.f32 %v3832, %v3833
        %v3835 = vsel %vm3781, %v3776, 0.0
        %v3836 = vadd.f32 %v3834, %v3835
        %v3837 = vsel %vm3781, %v3777, 0.0
        %v3838 = vadd.f32 %v3836, %v3837
        %v3839 = vsel %vm3781, %v3778, 0.0
        %v3840 = vadd.f32 %v3838, %v3839
        %v3841 = vsel %vm3781, %v3779, 0.0
        %v3842 = vadd.f32 %v3840, %v3841
        %v3843 = vsel %vm3781, %v3780, 0.0
        %v3844 = vadd.f32 %v3842, %v3843
        %v3845 = vrot.slane %v3844, 4
        %v3846 = vadd.f32 %v3844, %v3845
        %v3847 = vrot.slane %v3846, 2
        %v3848 = vadd.f32 %v3846, %v3847
        %v3849 = vrot.slane %v3848, 1
        %v3850 = vadd.f32 %v3848, %v3849
        %v3851 = vld [vmem:[%s6] sm:$0xff]
        %v3852 = vld [vmem:[%s6 + $0x8] sm:$0xff]
        %v3853 = vld [vmem:[%s6 + $0x10] sm:$0xff]
        %v3854 = vld [vmem:[%s6 + $0x18] sm:$0xff]
        %v3855 = vld [vmem:[%s7] sm:$0x1]
        %v3857 = vsel %vm3781, %v3850, 0
        %3859 = vmatprep.subr.mxu0 0.0
        %3860 = vmatpush1.msra.mxu0 %v3851
        %3861 = vmatprep.subr.mxu0 0.0
        %3862 = vmatpush1.msra.mxu0 %v3852
        %3863 = vmatprep.subr.mxu0 0.0
        %3864 = vmatpush1.msra.mxu0 %v3853
        %3865 = vmatprep.subr.mxu0 0.0
        %3866 = vmatpush1.msra.mxu0 %v3854
        %3867 = vmatprep.subr.mxu0 0.0
        %3868 = vmatpush1.msra.mxu0 0.0
        %3869 = vmatprep.subr.mxu0 0.0
        %3870 = vmatpush1.msra.mxu0 0.0
        %3871 = vmatprep.subr.mxu0 0.0
        %3872 = vmatpush1.msra.mxu0 0.0
        %3873 = vmatprep.subr.mxu0 0.0
        %3874 = vmatpush1.msra.mxu0 0.0
        %3875 = vmatprep.subr.mxu0 0.0
        %3876 = vmatpush1.msra.mxu0 0.0
        %3877 = vmatprep.subr.mxu0 0.0
        %3878 = vmatpush1.msra.mxu0 0.0
        %3879 = vmatprep.subr.mxu0 0.0
        %3880 = vmatpush1.msra.mxu0 0.0
        %3881 = vmatprep.subr.mxu0 0.0
        %3882 = vmatpush1.msra.mxu0 0.0
        %3883 = vmatprep.subr.mxu0 0.0
        %3884 = vmatpush1.msra.mxu0 0.0
        %3885 = vmatprep.subr.mxu0 0.0
        %3886 = vmatpush1.msra.mxu0 0.0
        %3887 = vmatprep.subr.mxu0 0.0
        %3888 = vmatpush1.msra.mxu0 0.0
        %3889 = vmatprep.subr.mxu0 0.0
        %3890 = vmatpush1.msra.mxu0 0.0
        %3891 = vmatprep.subr.mxu0 0.0
        %3892 = vmatpush1.msra.mxu0 0.0
        %3893 = vmatprep.subr.mxu0 0.0
        %3894 = vmatpush1.msra.mxu0 0.0
        %3895 = vmatprep.subr.mxu0 0.0
        %3896 = vmatpush1.msra.mxu0 0.0
        %3897 = vmatprep.subr.mxu0 0.0
        %3898 = vmatpush1.msra.mxu0 0.0
        %3899 = vmatprep.subr.mxu0 0.0
        %3900 = vmatpush1.msra.mxu0 0.0
        %3901 = vmatprep.subr.mxu0 0.0
        %3902 = vmatpush1.msra.mxu0 0.0
        %3903 = vmatprep.subr.mxu0 0.0
        %3904 = vmatpush1.msra.mxu0 0.0
        %3905 = vmatprep.subr.mxu0 0.0
        %3906 = vmatpush1.msra.mxu0 0.0
        %3907 = vmatprep.subr.mxu0 0.0
        %3908 = vmatpush1.msra.mxu0 0.0
        %3909 = vmatprep.subr.mxu0 0.0
        %3910 = vmatpush1.msra.mxu0 0.0
        %3911 = vmatprep.subr.mxu0 0.0
        %3912 = vmatpush1.msra.mxu0 0.0
        %3913 = vmatprep.subr.mxu0 0.0
        %3914 = vmatpush1.msra.mxu0 0.0
        %3915 = vmatprep.subr.mxu0 0.0
        %3916 = vmatpush1.msra.mxu0 0.0
        %3917 = vmatprep.subr.mxu0 0.0
        %3918 = vmatpush1.msra.mxu0 0.0
        %3919 = vmatprep.subr.mxu0 0.0
        %3920 = vmatpush1.msra.mxu0 0.0
        %3921 = vmatprep.subr.mxu0 0.0
        %3922 = vmatpush1.msra.mxu0 0.0
        %3923 = vmatprep.mubr.f32.mxu0 0.0
        %3924 = vmatmul.mubr.f32.gmra.mrb[0].mxu0 %v3857
        %v3925 = vpop.f32.mrb[0].mxu0
        %v3926 = vadd.f32 %v3855, %v3925
        %v3927 = vpop.f32.mrb[0].mxu0
        %3928 = vdwg.mxu0
        %v3929 = vmax.f32 %v3926, 0.0
        %v3930 = vld [vmem:[%s8] sm:$0xff]
        %v3931 = vld [vmem:[%s8 + $0x8] sm:$0xff]
        %v3932 = vld [vmem:[%s8 + $0x10] sm:$0xff]
        %v3933 = vld [vmem:[%s8 + $0x18] sm:$0xff]
        %v3934 = vld [vmem:[%s8 + $0x20] sm:$0xff]
        %v3935 = vld [vmem:[%s8 + $0x28] sm:$0xff]
        %v3936 = vld [vmem:[%s8 + $0x30] sm:$0xff]
        %v3937 = vld [vmem:[%s8 + $0x38] sm:$0xff]
        %v3938 = vld [vmem:[%s8 + $0x40] sm:$0xff]
        %v3939 = vld [vmem:[%s8 + $0x48] sm:$0xff]
        %v3940 = vld [vmem:[%s8 + $0x50] sm:$0xff]
        %v3941 = vld [vmem:[%s8 + $0x58] sm:$0xff]
        %v3942 = vld [vmem:[%s8 + $0x60] sm:$0xff]
        %v3943 = vld [vmem:[%s8 + $0x68] sm:$0xff]
        %v3944 = vld [vmem:[%s8 + $0x70] sm:$0xff]
        %v3945 = vld [vmem:[%s8 + $0x78] sm:$0xff]
        %v3946 = vld [vmem:[%s9] sm:$0x1]
        %3947 = vmatprep.subr.mxu0 0.0
        %3948 = vmatpush1.msra.mxu0 %v3930
        %3949 = vmatprep.subr.mxu0 0.0
        %3950 = vmatpush1.msra.mxu0 %v3931
        %3951 = vmatprep.subr.mxu0 0.0
        %3952 = vmatpush1.msra.mxu0 %v3932
        %3953 = vmatprep.subr.mxu0 0.0
        %3954 = vmatpush1.msra.mxu0 %v3933
        %3955 = vmatprep.subr.mxu0 0.0
        %3956 = vmatpush1.msra.mxu0 %v3934
        %3957 = vmatprep.subr.mxu0 0.0
        %3958 = vmatpush1.msra.mxu0 %v3935
        %3959 = vmatprep.subr.mxu0 0.0
        %3960 = vmatpush1.msra.mxu0 %v3936
        %3961 = vmatprep.subr.mxu0 0.0
        %3962 = vmatpush1.msra.mxu0 %v3937
        %3963 = vmatprep.subr.mxu0 0.0
        %3964 = vmatpush1.msra.mxu0 %v3938
        %3965 = vmatprep.subr.mxu0 0.0
        %3966 = vmatpush1.msra.mxu0 %v3939
        %3967 = vmatprep.subr.mxu0 0.0
        %3968 = vmatpush1.msra.mxu0 %v3940
        %3969 = vmatprep.subr.mxu0 0.0
        %3970 = vmatpush1.msra.mxu0 %v3941
        %3971 = vmatprep.subr.mxu0 0.0
        %3972 = vmatpush1.msra.mxu0 %v3942
        %3973 = vmatprep.subr.mxu0 0.0
        %3974 = vmatpush1.msra.mxu0 %v3943
        %3975 = vmatprep.subr.mxu0 0.0
        %3976 = vmatpush1.msra.mxu0 %v3944
        %3977 = vmatprep.subr.mxu0 0.0
        %3978 = vmatpush1.msra.mxu0 %v3945
        %3979 = vmatprep.subr.mxu0 0.0
        %3980 = vmatpush1.msra.mxu0 0.0
        %3981 = vmatprep.subr.mxu0 0.0
        %3982 = vmatpush1.msra.mxu0 0.0
        %3983 = vmatprep.subr.mxu0 0.0
        %3984 = vmatpush1.msra.mxu0 0.0
        %3985 = vmatprep.subr.mxu0 0.0
        %3986 = vmatpush1.msra.mxu0 0.0
        %3987 = vmatprep.subr.mxu0 0.0
        %3988 = vmatpush1.msra.mxu0 0.0
        %3989 = vmatprep.subr.mxu0 0.0
        %3990 = vmatpush1.msra.mxu0 0.0
        %3991 = vmatprep.subr.mxu0 0.0
        %3992 = vmatpush1.msra.mxu0 0.0
        %3993 = vmatprep.subr.mxu0 0.0
        %3994 = vmatpush1.msra.mxu0 0.0
        %3995 = vmatprep.subr.mxu0 0.0
        %3996 = vmatpush1.msra.mxu0 0.0
        %3997 = vmatprep.subr.mxu0 0.0
        %3998 = vmatpush1.msra.mxu0 0.0
        %3999 = vmatprep.subr.mxu0 0.0
        %4000 = vmatpush1.msra.mxu0 0.0
        %4001 = vmatprep.subr.mxu0 0.0
        %4002 = vmatpush1.msra.mxu0 0.0
        %4003 = vmatprep.subr.mxu0 0.0
        %4004 = vmatpush1.msra.mxu0 0.0
        %4005 = vmatprep.subr.mxu0 0.0
        %4006 = vmatpush1.msra.mxu0 0.0
        %4007 = vmatprep.subr.mxu0 0.0
        %4008 = vmatpush1.msra.mxu0 0.0
        %4009 = vmatprep.subr.mxu0 0.0
        %4010 = vmatpush1.msra.mxu0 0.0
        %4011 = vmatprep.mubr.f32.mxu0 0.0
        %4012 = vmatmul.mubr.f32.gmra.mrb[0].mxu0 %v3929
        %v4013 = vpop.f32.mrb[0].mxu0
        %v4014 = vadd.f32 %v3946, %v4013
        %v4015 = vpop.f32.mrb[0].mxu0
        %4016 = vdwg.mxu0
        %4017 = vst [vmem:[%s351] sm:$0x1] %v4014
        %s4018 = sand.u32 %s247, 1
        %s4019 = scalar_lea.sflag [#allocation5], %s4018
        %s4020 = sand.u32 %s247, 1
        %s4021 = scalar_lea.vmem [#allocation4], %s4020
        // Predicated region
        $region61: #{simple_cnn_forward.1} parent=59 // pred_check
          %p4022 = pneg %p257
        $region62: #{simple_cnn_forward.1} parent=59 // pred_check_branch
          %4024 = sbr.rel (%p4022) target = $region64
        $region63: #{simple_cnn_forward.1} parent=59 // pred_region
          %s4026 = ssub.s32 16, 16
          %4027 = vsyncadd %s4019, %s4026
          %s4028 = smul.addr %s24, 16
          %s4029 = scalar_lea.hbm %s10, %s4028
          %s4031 = sshll.u32 %s4021, 4
          %s4032 = int_to_ptr.vmem [resolvable:$true] %s4031
          %4034 = dma.vmem_to_hbm [thread:$0]  %s4032, 16, %s4029, %s4019
        $region64: #{simple_cnn_forward.1} parent=59 // pred_fallthru
          _
      $region60: #{simple_cnn_forward.1} parent=5 // pred_fallthru
        _
      %p4035 = scmp.le.s32.totalorder 2, %s19
      // Predicated region
      $region65: #{simple_cnn_forward.1} parent=5 // pred_check
        %p4036 = pneg %p4035
      $region66: #{simple_cnn_forward.1} parent=5 // pred_check_branch
        %4038 = sbr.rel (%p4036) target = $region68
      $region67: #{simple_cnn_forward.1} parent=5 // pred_region
        %s4039 = ssub.s32 %s19, 2
        // Predicated region
        $region69: #{simple_cnn_forward.1} parent=67 // pred_check
          %p4040 = pneg %p263
        $region70: #{simple_cnn_forward.1} parent=67 // pred_check_branch
          %4042 = sbr.rel (%p4040) target = $region72
        $region71: #{simple_cnn_forward.1} parent=67 // pred_region
          %s4043 = sand.u32 %s248, 1
          %s4044 = scalar_lea.sflag [#allocation5], %s4043
          %s4045 = sand.u32 %s248, 1
          %s4046 = scalar_lea.vmem [#allocation4], %s4045
          %4047 = dma.done %s4044, 16
        $region72: #{simple_cnn_forward.1} parent=67 // pred_fallthru
          _
      $region68: #{simple_cnn_forward.1} parent=5 // pred_fallthru
        _
    $region6: #{simple_cnn_forward.1} parent=1 // loop_footer
      %s23 = sadd.s32 1, %s19
    $region7: #{simple_cnn_forward.1} parent=1 // loop_footer_branch
      %18 = sbr.rel target = $region3
    $region8: #{simple_cnn_forward.1} parent=1 // loop_exit
      _
    %4048 = vsyncpa [#allocation5], 1
    %s4049 = scalar_lea.sflag [#allocation5], 1
    %4050 = vsyncpa %s4049, 1

</llo_original>
